<compile_context>
chip_gen: v6e
topology: v6e:2x2x1
jax: 0.10.0
libtpu: 0.0.40
codegen_flags: <defaults>
</compile_context>

<pallas_src>
import jax
import jax.numpy as jnp
from jax.experimental import pallas as pl
from jax.experimental.pallas import tpu as pltpu


def conv_out(n, k, s):
    return (n - k) // s + 1


# Geometry fixed by the PyTorch module (96x128 input, three VALID convs).
H_IN, W_IN = 96, 128
C1 = C2 = C3 = 8
K1, S1 = 8, 4
K2, S2 = 4, 2
K3, S3 = 3, 1
OH1, OW1 = conv_out(H_IN, K1, S1), conv_out(W_IN, K1, S1)   # 23, 31
PH1, PW1 = (OH1 + 1) // 2, (OW1 + 1) // 2                   # 12, 16 (stride-2 blocked grid)
OH2, OW2 = conv_out(OH1, K2, S2), conv_out(OW1, K2, S2)     # 10, 14
OH3, OW3 = conv_out(OH2, K3, S3), conv_out(OW2, K3, S3)     # 8, 12
N_TAPS1 = K1 * K1                                           # 64
P1_ROWS = 4 * PH1                                           # 48 conv1 GEMM rows / sample
P1_COLS = PW1 * N_TAPS1                                     # 1024 conv1 GEMM K
L1 = PW1 * C1                                               # 128 lanes after conv1
L2 = OW2 * C2                                               # 112 lanes after conv2
L3 = OW3 * C3                                               # 96 lanes after conv3
FLAT = C3 * OH3 * OW3                                       # 768 (PyTorch flatten size)
Q_LANES = 128                                               # lane-dense Q output slab

# conv2 merged-tap row offsets in the stride-2-blocked h1 layout.  Tap (i, j)
# reads h1 rows starting at r0 = (2*(i%2) + (j%2))*PH1 + i//2, independent of
# j//2, so taps (i, j) and (i, j+2) share the window and their block-diagonal
# weight matrices are pre-summed (16 -> 8 matmuls).
R0_CONV2 = tuple((2 * (i % 2) + jm) * PH1 + i // 2
                 for i in range(K2) for jm in range(2))

# The zero-padded blocked-grid positions (oh1 >= OH1 or ow1 >= OW1) hold
# relu(bias) garbage after conv1; conv2 only reads oh1 = 2*oh2 + i and
# ow1 = 2*ow2 + j, so the garbage is never consumed.  Guard against edits:
assert 2 * (OH2 - 1) + (K2 - 1) < OH1 and 2 * (OW2 - 1) + (K2 - 1) < OW1
assert P1_ROWS % 8 == 0


# ---------------------------------------------------------------------------
# Fused Pallas kernel: one grid step == B_TILE samples, everything in VMEM.
# ---------------------------------------------------------------------------
def _make_qnet_kernel(b_tile):
    B = b_tile
    f32 = jnp.float32
    bf16 = jnp.bfloat16

    def kernel(p1_ref, sa_ref,
               w1_ref, b1_ref,
               m2_ref, b2_ref,
               m3_ref, b3_ref,
               wc_ref, wsa_ref, bf1_ref,
               wf2_ref, bf2_ref,
               o_ref,
               h1_s, h2_s, h3_s):
        # conv1 + ReLU as one batched GEMM.  Row layout: M = (rb*PH1 + p)*B + b
        # with (oh1, ow1) = (2p + rh, 2q + rw), rb = 2*rh + rw; lane = q*8 + c.
        h1 = jnp.dot(p1_ref[...], w1_ref[...], preferred_element_type=f32)
        h1_s[...] = jnp.maximum(h1 + b1_ref[...], 0.0).astype(bf16)

        # conv2 + ReLU: 8 merged taps; each window is a contiguous row range.
        acc2 = jnp.zeros((OH2 * B, L2), f32)
        for t, r0 in enumerate(R0_CONV2):
            acc2 = acc2 + jnp.dot(h1_s[r0 * B:(r0 + OH2) * B, :], m2_ref[t],
                                  preferred_element_type=f32)
        h2_s[...] = jnp.maximum(acc2 + b2_ref[...], 0.0).astype(bf16)

        # conv3 + ReLU: 3 merged taps (stride 1), contiguous row windows of h2.
        acc3 = jnp.zeros((OH3 * B, L3), f32)
        for i in range(K3):
            acc3 = acc3 + jnp.dot(h2_s[i * B:(i + OH3) * B, :], m3_ref[i],
                                  preferred_element_type=f32)
        h3_s[...] = jnp.maximum(acc3 + b3_ref[...], 0.0).astype(bf16)

        # fc1 + ReLU: NCHW flatten order is folded into wc (done at init);
        # each dot has M = B_TILE.
        f = jnp.dot(sa_ref[...], wsa_ref[...], preferred_element_type=f32)
        for r in range(OH3):
            f = f + jnp.dot(h3_s[r * B:(r + 1) * B, :], wc_ref[r],
                            preferred_element_type=f32)
        f = jnp.maximum(f + bf1_ref[...], 0.0).astype(bf16)

        # fc2: lane-dense (B, 128) output, Q value in lane 0.
        o_ref[...] = (jnp.dot(f, wf2_ref[...], preferred_element_type=f32)
                      + bf2_ref[...])

    return kernel


# ---------------------------------------------------------------------------
# Input-side glue: conv1 im2col in the stride-2-blocked, lane-packed,
# batched row-outer layout, emitted directly in bf16.
# ---------------------------------------------------------------------------
def _conv1_patches_blocked(x, b_tile):
    """x: (NBpad, 96, 128) bf16 -> (G, 48*b_tile, 1024) bf16.

    Within a grid block: GEMM row = ((2*rh + rw)*PH1 + p)*b_tile + b and
    GEMM col = q*64 + (i*8 + j), where (oh1, ow1) = (2p + rh, 2q + rw) and
    (i, j) is the 8x8 conv1 tap."""
    nbp = x.shape[0]
    g = nbp // b_tile
    taps = []
    for i in range(K1):
        for j in range(K1):
            v = x[:, i:i + S1 * (OH1 - 1) + 1:S1,
                     j:j + S1 * (OW1 - 1) + 1:S1]                 # (NBp, 23, 31)
            v = jnp.pad(v, ((0, 0), (0, 2 * PH1 - OH1), (0, 2 * PW1 - OW1)))
            v = v.reshape(g, b_tile, PH1, 2, PW1, 2)
            v = v.transpose(0, 3, 5, 2, 1, 4)                     # (G, rh, rw, p, b, q)
            taps.append(v)
    p = jnp.stack(taps, axis=-1)                                  # (G,2,2,12,b,16,64)
    return p.reshape(g, P1_ROWS * b_tile, P1_COLS)


def _pick_b_tile(nb):
    """Samples per grid step.  Multiples of 8 keep every in-kernel window
    slice sublane-aligned; >=2 grid steps at realistic batches keeps both v7x
    TensorCores busy; bf16 patch blocks stay well inside the VMEM budget."""
    if nb >= 128:
        return 64
    if nb >= 64:
        return 32
    return 8


# ---------------------------------------------------------------------------
# One-time weight repacking (PyTorch layouts -> kernel layouts, bf16 operands).
# ---------------------------------------------------------------------------
def prepare_kernel_params(params):
    f32 = jnp.float32
    bf16 = jnp.bfloat16

    # conv1 as one GEMM (block-diagonal over the PW1 lane blocks).
    w1 = params["w_conv1"].reshape(C1, K1 * K1).T                 # (64, 8)
    w1big = jnp.kron(jnp.eye(PW1, dtype=f32), w1).astype(bf16)    # (1024, 128)
    b1row = jnp.tile(params["b_conv1"], PW1).reshape(1, L1).astype(f32)

    # conv2: 16 taps -> 8 merged block-diagonal matrices (taps (i,j), (i,j+2)
    # read the same h1 row window, so they are pre-summed).
    w2 = params["w_conv2"]                                        # (8, 8, 4, 4)
    m2 = []
    for i in range(K2):
        for jm in range(2):
            acc = jnp.zeros((L1, L2), f32)
            for j in (jm, jm + 2):
                sel = jnp.zeros((PW1, OW2), f32).at[j // 2:j // 2 + OW2].set(
                    jnp.eye(OW2, dtype=f32))                      # sel[ow+j//2, ow]=1
                acc = acc + jnp.kron(sel, w2[:, :, i, j].T)
            m2.append(acc)
    m2 = jnp.stack(m2).astype(bf16)                               # (8, 128, 112)
    b2row = jnp.tile(params["b_conv2"], OW2).reshape(1, L2).astype(f32)

    # conv3: 9 taps -> 3 merged matrices (all j for fixed i share the window).
    w3 = params["w_conv3"]                                        # (8, 8, 3, 3)
    m3 = []
    for i in range(K3):
        acc = jnp.zeros((L2, L3), f32)
        for j in range(K3):
            sel = jnp.zeros((OW2, OW3), f32).at[j:j + OW3].set(
                jnp.eye(OW3, dtype=f32))                          # sel[ow+j, ow]=1
            acc = acc + jnp.kron(sel, w3[:, :, i, j].T)
        m3.append(acc)
    m3 = jnp.stack(m3).astype(bf16)                               # (3, 112, 96)
    b3row = jnp.tile(params["b_conv3"], OW3).reshape(1, L3).astype(f32)

    # fc1: fold the PyTorch NCHW flatten order into a per-row weight stack;
    # zero-pad hidden and the state+action K dim so all fc GEMMs are lane-dense.
    wf1 = params["w_fc1"]                                         # (fc1_in, hidden) == W.T
    hid = wf1.shape[1]
    hid_pad = ((hid + 127) // 128) * 128
    dsa = wf1.shape[0] - FLAT
    dsa_pad = ((dsa + 127) // 128) * 128
    wc = (wf1[:FLAT]
          .reshape(C3, OH3, OW3, hid)                             # (co, oh, ow, h)
          .transpose(1, 2, 0, 3)                                  # (oh, ow, co, h)
          .reshape(OH3, OW3 * C3, hid))                           # (8, 96, hidden)
    wc = jnp.pad(wc, ((0, 0), (0, 0), (0, hid_pad - hid))).astype(bf16)
    wsa = jnp.pad(wf1[FLAT:],
                  ((0, dsa_pad - dsa), (0, hid_pad - hid))).astype(bf16)
    bf1 = jnp.pad(params["b_fc1"].reshape(1, hid),
                  ((0, 0), (0, hid_pad - hid))).astype(f32)

    # fc2: lane-dense (hid_pad, 128) with the real Q column in lane 0.
    wf2 = (jnp.zeros((hid_pad, Q_LANES), f32)
           .at[:hid, :1].set(params["w_fc2"]).astype(bf16))
    bf2 = jnp.zeros((1, Q_LANES), f32).at[0, 0].set(params["b_fc2"][0])

    return {
        "w1big": w1big, "b1row": b1row,
        "m2": m2, "b2row": b2row,
        "m3": m3, "b3row": b3row,
        "wc": wc, "wsa": wsa, "bf1": bf1,
        "wf2": wf2, "bf2": bf2,
    }


# ---------------------------------------------------------------------------
# QNetwork forward (Pallas path).
# ---------------------------------------------------------------------------
def qnetwork_forward(kparams, pixel, state, action, *, b_tile=None):
    reshaped = pixel.ndim == 4
    if reshaped:
        bsz, nd = pixel.shape[0], pixel.shape[1]
        nb = bsz * nd
    else:
        nb = pixel.shape[0]
    x = pixel.reshape(nb, H_IN, W_IN).astype(jnp.bfloat16)
    sa = jnp.concatenate([state.reshape(nb, -1), action.reshape(nb, -1)],
                         axis=1)

    hid_pad = kparams["bf1"].shape[1]
    dsa_pad = kparams["wsa"].shape[0]
    dsa = sa.shape[1]
    assert dsa <= dsa_pad

    if b_tile is None:
        b_tile = _pick_b_tile(nb)
    g = -(-nb // b_tile)
    nbp = g * b_tile
    if nbp != nb:
        x = jnp.pad(x, ((0, nbp - nb), (0, 0), (0, 0)))
        sa = jnp.pad(sa, ((0, nbp - nb), (0, 0)))
    sa = jnp.pad(sa, ((0, 0), (0, dsa_pad - dsa))).astype(jnp.bfloat16)
    sa = sa.reshape(g, b_tile, dsa_pad)

    patches = _conv1_patches_blocked(x, b_tile)        # (G, 48*B, 1024) bf16

    out = pl.pallas_call(
        _make_qnet_kernel(b_tile),
        out_shape=jax.ShapeDtypeStruct((g, b_tile, Q_LANES), jnp.float32),
        grid=(g,),
        in_specs=[
            pl.BlockSpec((None, P1_ROWS * b_tile, P1_COLS), lambda n: (n, 0, 0)),
            pl.BlockSpec((None, b_tile, dsa_pad), lambda n: (n, 0, 0)),
            pl.BlockSpec((P1_COLS, L1), lambda n: (0, 0)),                # w1big
            pl.BlockSpec((1, L1), lambda n: (0, 0)),                      # b1row
            pl.BlockSpec((2 * K2, L1, L2), lambda n: (0, 0, 0)),          # m2 (merged)
            pl.BlockSpec((1, L2), lambda n: (0, 0)),                      # b2row
            pl.BlockSpec((K3, L2, L3), lambda n: (0, 0, 0)),              # m3 (merged)
            pl.BlockSpec((1, L3), lambda n: (0, 0)),                      # b3row
            pl.BlockSpec((OH3, L3, hid_pad), lambda n: (0, 0, 0)),        # wc
            pl.BlockSpec((dsa_pad, hid_pad), lambda n: (0, 0)),           # wsa
            pl.BlockSpec((1, hid_pad), lambda n: (0, 0)),                 # bf1
            pl.BlockSpec((hid_pad, Q_LANES), lambda n: (0, 0)),           # wf2
            pl.BlockSpec((1, Q_LANES), lambda n: (0, 0)),                 # bf2
        ],
        out_specs=pl.BlockSpec((None, b_tile, Q_LANES), lambda n: (n, 0, 0)),
        scratch_shapes=[
            pltpu.VMEM((P1_ROWS * b_tile, L1), jnp.bfloat16),             # h1
            pltpu.VMEM((OH2 * b_tile, L2), jnp.bfloat16),                 # h2
            pltpu.VMEM((OH3 * b_tile, L3), jnp.bfloat16),                 # h3
        ],
        compiler_params=pltpu.CompilerParams(
            dimension_semantics=("parallel",),
            vmem_limit_bytes=48 * 1024 * 1024),
    )(patches, sa,
      kparams["w1big"], kparams["b1row"],
      kparams["m2"], kparams["b2row"],
      kparams["m3"], kparams["b3row"],
      kparams["wc"], kparams["wsa"], kparams["bf1"],
      kparams["wf2"], kparams["bf2"])

    q = out.reshape(nbp, Q_LANES)[:nb, :1]                         # (NB, 1)
    if reshaped:
        q = q.reshape(bsz, nd, 1)
    return q


# ---------------------------------------------------------------------------
# Deterministic synthetic parameters (shapes from QNetwork.__init__).
# ---------------------------------------------------------------------------
def init_params(key, obs_other_dim, action_dim, hidden_dim):
    fc1_in = FLAT + obs_other_dim + action_dim
    ks = jax.random.split(key, 8)

    def rnd(k, fan_in, shape):
        return (jax.random.normal(k, shape, jnp.float32) /
                jnp.sqrt(jnp.float32(fan_in)))

    return {
        "w_conv1": rnd(ks[0], 1 * 8 * 8, (8, 1, 8, 8)),
        "b_conv1": rnd(ks[1], 1 * 8 * 8, (8,)),
        "w_conv2": rnd(ks[2], 8 * 4 * 4, (8, 8, 4, 4)),
        "b_conv2": rnd(ks[3], 8 * 4 * 4, (8,)),
        "w_conv3": rnd(ks[4], 8 * 3 * 3, (8, 8, 3, 3)),
        "b_conv3": rnd(ks[5], 8 * 3 * 3, (8,)),
        # fc weights stored as (in, out) == PyTorch weight.T; biases = 0
        # (matches orthogonal_init's constant_(bias, 0); the orthogonal matrix
        # itself is replaced by a deterministic synthetic init).
        "w_fc1": rnd(ks[6], fc1_in, (fc1_in, hidden_dim)),
        "b_fc1": jnp.zeros((hidden_dim,), jnp.float32),
        "w_fc2": rnd(ks[7], hidden_dim, (hidden_dim, 1)),
        "b_fc2": jnp.zeros((1,), jnp.float32),
    }


# ---------------------------------------------------------------------------
# Pure-JAX reference (XLA conv, full f32 precision) for validation.
# ---------------------------------------------------------------------------
def reference_forward(params, pixel, state, action):
    bsz, nd = pixel.shape[0], pixel.shape[1]
    x = pixel.reshape(bsz * nd, 1, H_IN, W_IN)
    st = state.reshape(bsz * nd, -1)
    ac = action.reshape(bsz * nd, -1)
    hp = jax.lax.Precision.HIGHEST

    def conv(x, w, b, s):
        y = jax.lax.conv_general_dilated(
            x, w, (s, s), "VALID",
            dimension_numbers=("NCHW", "OIHW", "NCHW"),
            precision=hp)
        return jax.nn.relu(y + b[None, :, None, None])

    x = conv(x, params["w_conv1"], params["b_conv1"], 4)
    x = conv(x, params["w_conv2"], params["b_conv2"], 2)
    x = conv(x, params["w_conv3"], params["b_conv3"], 1)
    flat = x.reshape(x.shape[0], -1)
    feats = jnp.concatenate([flat, st, ac], axis=1)
    h = jax.nn.relu(jnp.dot(feats, params["w_fc1"], precision=hp)
                    + params["b_fc1"])
    q = jnp.dot(h, params["w_fc2"], precision=hp) + params["b_fc2"]
    return q.reshape(bsz, nd, -1)


if __name__ == "__main__":
    batch, n_drones = 2, 2
    obs_other_dim, action_dim, hidden_dim = 12, 4, 64

    key = jax.random.PRNGKey(0)
    kp, kx, ks, ka = jax.random.split(key, 4)

    params = init_params(kp, obs_other_dim, action_dim, hidden_dim)
    kparams = prepare_kernel_params(params)     # one-time weight repacking

    pixel = jax.random.normal(kx, (batch, n_drones, H_IN, W_IN), jnp.float32)
    state = jax.random.normal(ks, (batch, n_drones, obs_other_dim), jnp.float32)
    action = jax.random.normal(ka, (batch, n_drones, action_dim), jnp.float32)

    fwd = jax.jit(qnetwork_forward)
    q = jax.block_until_ready(fwd(kparams, pixel, state, action))

    q_ref = reference_forward(params, pixel, state, action)
    assert q.shape == (batch, n_drones, 1), q.shape
    # bf16 matmul operands vs f32 HIGHEST reference -> loosened tolerance.
    err = float(jnp.max(jnp.abs(q - q_ref)))
    assert jnp.allclose(q, q_ref, atol=5e-2, rtol=5e-2), err

    print("KERNEL_OK")
</pallas_src>

<mosaic_0001>
module attributes {stable_mosaic.version = 11 : i64} {
  func.func @kernel(%arg0: i32, %arg1: memref<1x384x1024xbf16, #tpu.memory_space<vmem>>, %arg2: memref<1x8x128xbf16, #tpu.memory_space<vmem>>, %arg3: memref<1024x128xbf16, #tpu.memory_space<vmem>>, %arg4: memref<1x128xf32, #tpu.memory_space<vmem>>, %arg5: memref<8x128x112xbf16, #tpu.memory_space<vmem>>, %arg6: memref<1x112xf32, #tpu.memory_space<vmem>>, %arg7: memref<3x112x96xbf16, #tpu.memory_space<vmem>>, %arg8: memref<1x96xf32, #tpu.memory_space<vmem>>, %arg9: memref<8x96x128xbf16, #tpu.memory_space<vmem>>, %arg10: memref<128x128xbf16, #tpu.memory_space<vmem>>, %arg11: memref<1x128xf32, #tpu.memory_space<vmem>>, %arg12: memref<128x128xbf16, #tpu.memory_space<vmem>>, %arg13: memref<1x128xf32, #tpu.memory_space<vmem>>, %arg14: memref<1x8x128xf32, #tpu.memory_space<vmem>>, %arg15: memref<384x128xbf16, #tpu.memory_space<vmem>>, %arg16: memref<80x112xbf16, #tpu.memory_space<vmem>>, %arg17: memref<64x96xbf16, #tpu.memory_space<vmem>>) attributes {dimension_semantics = [#tpu.dimension_semantics<parallel>], iteration_bounds = array<i64: 1>, scalar_prefetch = 0 : i64, scratch_operands = 3 : i64, tpu.core_type = #tpu.core_type<tc>, window_params = [{transform_indices = @transform_0, window_bounds = array<i64: 1, 384, 1024>}, {transform_indices = @transform_1, window_bounds = array<i64: 1, 8, 128>}, {pipeline_mode = #tpu.pipeline_mode<synchronous>, transform_indices = @transform_2, window_bounds = array<i64: 1024, 128>}, {pipeline_mode = #tpu.pipeline_mode<synchronous>, transform_indices = @transform_3, window_bounds = array<i64: 1, 128>}, {pipeline_mode = #tpu.pipeline_mode<synchronous>, transform_indices = @transform_4, window_bounds = array<i64: 8, 128, 112>}, {pipeline_mode = #tpu.pipeline_mode<synchronous>, transform_indices = @transform_5, window_bounds = array<i64: 1, 112>}, {pipeline_mode = #tpu.pipeline_mode<synchronous>, transform_indices = @transform_6, window_bounds = array<i64: 3, 112, 96>}, {pipeline_mode = #tpu.pipeline_mode<synchronous>, transform_indices = @transform_7, window_bounds = array<i64: 1, 96>}, {pipeline_mode = #tpu.pipeline_mode<synchronous>, transform_indices = @transform_8, window_bounds = array<i64: 8, 96, 128>}, {pipeline_mode = #tpu.pipeline_mode<synchronous>, transform_indices = @transform_9, window_bounds = array<i64: 128, 128>}, {pipeline_mode = #tpu.pipeline_mode<synchronous>, transform_indices = @transform_10, window_bounds = array<i64: 1, 128>}, {pipeline_mode = #tpu.pipeline_mode<synchronous>, transform_indices = @transform_11, window_bounds = array<i64: 128, 128>}, {pipeline_mode = #tpu.pipeline_mode<synchronous>, transform_indices = @transform_12, window_bounds = array<i64: 1, 128>}, {transform_indices = @transform_13, window_bounds = array<i64: 1, 8, 128>}]} {
    %c0 = arith.constant 0 : index
    %c0_0 = arith.constant 0 : index
    %c0_1 = arith.constant 0 : index
    %0 = vector.load %arg1[%c0, %c0_0, %c0_1] : memref<1x384x1024xbf16, #tpu.memory_space<vmem>>, vector<1x384x1024xbf16>
    %1 = vector.shape_cast %0 : vector<1x384x1024xbf16> to vector<384x1024xbf16>
    %c0_2 = arith.constant 0 : index
    %c0_3 = arith.constant 0 : index
    %2 = vector.load %arg3[%c0_2, %c0_3] : memref<1024x128xbf16, #tpu.memory_space<vmem>>, vector<1024x128xbf16>
    %cst = arith.constant dense<0.000000e+00> : vector<384x128xf32>
    %3 = tpu.matmul %1, %2, %cst {dimension_numbers = #tpu.dot_dimension_numbers<[1], [0], [0], [1], [0, 0, 1, 1], [], []>} : vector<384x1024xbf16>, vector<1024x128xbf16>, vector<384x128xf32> -> vector<384x128xf32>
    %c0_4 = arith.constant 0 : index
    %c0_5 = arith.constant 0 : index
    %4 = vector.load %arg4[%c0_4, %c0_5] : memref<1x128xf32, #tpu.memory_space<vmem>>, vector<1x128xf32>
    %5 = vector.broadcast %4 : vector<1x128xf32> to vector<384x128xf32>
    %6 = arith.addf %3, %5 : vector<384x128xf32>
    %cst_6 = arith.constant 0.000000e+00 : f32
    %7 = vector.broadcast %cst_6 : f32 to vector<384x128xf32>
    %8 = arith.maximumf %6, %7 : vector<384x128xf32>
    %9 = arith.truncf %8 : vector<384x128xf32> to vector<384x128xbf16>
    %c0_7 = arith.constant 0 : index
    %c0_8 = arith.constant 0 : index
    %10 = vector.load %arg15[%c0_7, %c0_8] : memref<384x128xbf16, #tpu.memory_space<vmem>>, vector<384x128xbf16>
    tpu.vector_store %arg15[%c0_7, %c0_8], %9 {strides = array<i32>} : memref<384x128xbf16, #tpu.memory_space<vmem>>, vector<384x128xbf16>,
    %cst_9 = arith.constant 0.000000e+00 : f32
    %11 = vector.broadcast %cst_9 : f32 to vector<80x112xf32>
    %c0_10 = arith.constant 0 : index
    %c0_11 = arith.constant 0 : index
    %12 = vector.load %arg15[%c0_10, %c0_11] : memref<384x128xbf16, #tpu.memory_space<vmem>>, vector<80x128xbf16>
    %c0_12 = arith.constant 0 : index
    %c0_13 = arith.constant 0 : index
    %c0_14 = arith.constant 0 : index
    %13 = vector.load %arg5[%c0_12, %c0_13, %c0_14] : memref<8x128x112xbf16, #tpu.memory_space<vmem>>, vector<1x128x112xbf16>
    %14 = vector.shape_cast %13 : vector<1x128x112xbf16> to vector<128x112xbf16>
    %cst_15 = arith.constant dense<0.000000e+00> : vector<80x112xf32>
    %15 = tpu.matmul %12, %14, %cst_15 {dimension_numbers = #tpu.dot_dimension_numbers<[1], [0], [0], [1], [0, 0, 1, 1], [], []>} : vector<80x128xbf16>, vector<128x112xbf16>, vector<80x112xf32> -> vector<80x112xf32>
    %16 = arith.addf %11, %15 : vector<80x112xf32>
    %c96 = arith.constant 96 : index
    %c0_16 = arith.constant 0 : index
    %17 = vector.load %arg15[%c96, %c0_16] : memref<384x128xbf16, #tpu.memory_space<vmem>>, vector<80x128xbf16>
    %c1 = arith.constant 1 : index
    %c0_17 = arith.constant 0 : index
    %c0_18 = arith.constant 0 : index
    %18 = vector.load %arg5[%c1, %c0_17, %c0_18] : memref<8x128x112xbf16, #tpu.memory_space<vmem>>, vector<1x128x112xbf16>
    %19 = vector.shape_cast %18 : vector<1x128x112xbf16> to vector<128x112xbf16>
    %cst_19 = arith.constant dense<0.000000e+00> : vector<80x112xf32>
    %20 = tpu.matmul %17, %19, %cst_19 {dimension_numbers = #tpu.dot_dimension_numbers<[1], [0], [0], [1], [0, 0, 1, 1], [], []>} : vector<80x128xbf16>, vector<128x112xbf16>, vector<80x112xf32> -> vector<80x112xf32>
    %21 = arith.addf %16, %20 : vector<80x112xf32>
    %c192 = arith.constant 192 : index
    %c0_20 = arith.constant 0 : index
    %22 = vector.load %arg15[%c192, %c0_20] : memref<384x128xbf16, #tpu.memory_space<vmem>>, vector<80x128xbf16>
    %c2 = arith.constant 2 : index
    %c0_21 = arith.constant 0 : index
    %c0_22 = arith.constant 0 : index
    %23 = vector.load %arg5[%c2, %c0_21, %c0_22] : memref<8x128x112xbf16, #tpu.memory_space<vmem>>, vector<1x128x112xbf16>
    %24 = vector.shape_cast %23 : vector<1x128x112xbf16> to vector<128x112xbf16>
    %cst_23 = arith.constant dense<0.000000e+00> : vector<80x112xf32>
    %25 = tpu.matmul %22, %24, %cst_23 {dimension_numbers = #tpu.dot_dimension_numbers<[1], [0], [0], [1], [0, 0, 1, 1], [], []>} : vector<80x128xbf16>, vector<128x112xbf16>, vector<80x112xf32> -> vector<80x112xf32>
    %26 = arith.addf %21, %25 : vector<80x112xf32>
    %c288 = arith.constant 288 : index
    %c0_24 = arith.constant 0 : index
    %27 = vector.load %arg15[%c288, %c0_24] : memref<384x128xbf16, #tpu.memory_space<vmem>>, vector<80x128xbf16>
    %c3 = arith.constant 3 : index
    %c0_25 = arith.constant 0 : index
    %c0_26 = arith.constant 0 : index
    %28 = vector.load %arg5[%c3, %c0_25, %c0_26] : memref<8x128x112xbf16, #tpu.memory_space<vmem>>, vector<1x128x112xbf16>
    %29 = vector.shape_cast %28 : vector<1x128x112xbf16> to vector<128x112xbf16>
    %cst_27 = arith.constant dense<0.000000e+00> : vector<80x112xf32>
    %30 = tpu.matmul %27, %29, %cst_27 {dimension_numbers = #tpu.dot_dimension_numbers<[1], [0], [0], [1], [0, 0, 1, 1], [], []>} : vector<80x128xbf16>, vector<128x112xbf16>, vector<80x112xf32> -> vector<80x112xf32>
    %31 = arith.addf %26, %30 : vector<80x112xf32>
    %c8 = arith.constant 8 : index
    %c0_28 = arith.constant 0 : index
    %32 = vector.load %arg15[%c8, %c0_28] : memref<384x128xbf16, #tpu.memory_space<vmem>>, vector<80x128xbf16>
    %c4 = arith.constant 4 : index
    %c0_29 = arith.constant 0 : index
    %c0_30 = arith.constant 0 : index
    %33 = vector.load %arg5[%c4, %c0_29, %c0_30] : memref<8x128x112xbf16, #tpu.memory_space<vmem>>, vector<1x128x112xbf16>
    %34 = vector.shape_cast %33 : vector<1x128x112xbf16> to vector<128x112xbf16>
    %cst_31 = arith.constant dense<0.000000e+00> : vector<80x112xf32>
    %35 = tpu.matmul %32, %34, %cst_31 {dimension_numbers = #tpu.dot_dimension_numbers<[1], [0], [0], [1], [0, 0, 1, 1], [], []>} : vector<80x128xbf16>, vector<128x112xbf16>, vector<80x112xf32> -> vector<80x112xf32>
    %36 = arith.addf %31, %35 : vector<80x112xf32>
    %c104 = arith.constant 104 : index
    %c0_32 = arith.constant 0 : index
    %37 = vector.load %arg15[%c104, %c0_32] : memref<384x128xbf16, #tpu.memory_space<vmem>>, vector<80x128xbf16>
    %c5 = arith.constant 5 : index
    %c0_33 = arith.constant 0 : index
    %c0_34 = arith.constant 0 : index
    %38 = vector.load %arg5[%c5, %c0_33, %c0_34] : memref<8x128x112xbf16, #tpu.memory_space<vmem>>, vector<1x128x112xbf16>
    %39 = vector.shape_cast %38 : vector<1x128x112xbf16> to vector<128x112xbf16>
    %cst_35 = arith.constant dense<0.000000e+00> : vector<80x112xf32>
    %40 = tpu.matmul %37, %39, %cst_35 {dimension_numbers = #tpu.dot_dimension_numbers<[1], [0], [0], [1], [0, 0, 1, 1], [], []>} : vector<80x128xbf16>, vector<128x112xbf16>, vector<80x112xf32> -> vector<80x112xf32>
    %41 = arith.addf %36, %40 : vector<80x112xf32>
    %c200 = arith.constant 200 : index
    %c0_36 = arith.constant 0 : index
    %42 = vector.load %arg15[%c200, %c0_36] : memref<384x128xbf16, #tpu.memory_space<vmem>>, vector<80x128xbf16>
    %c6 = arith.constant 6 : index
    %c0_37 = arith.constant 0 : index
    %c0_38 = arith.constant 0 : index
    %43 = vector.load %arg5[%c6, %c0_37, %c0_38] : memref<8x128x112xbf16, #tpu.memory_space<vmem>>, vector<1x128x112xbf16>
    %44 = vector.shape_cast %43 : vector<1x128x112xbf16> to vector<128x112xbf16>
    %cst_39 = arith.constant dense<0.000000e+00> : vector<80x112xf32>
    %45 = tpu.matmul %42, %44, %cst_39 {dimension_numbers = #tpu.dot_dimension_numbers<[1], [0], [0], [1], [0, 0, 1, 1], [], []>} : vector<80x128xbf16>, vector<128x112xbf16>, vector<80x112xf32> -> vector<80x112xf32>
    %46 = arith.addf %41, %45 : vector<80x112xf32>
    %c296 = arith.constant 296 : index
    %c0_40 = arith.constant 0 : index
    %47 = vector.load %arg15[%c296, %c0_40] : memref<384x128xbf16, #tpu.memory_space<vmem>>, vector<80x128xbf16>
    %c7 = arith.constant 7 : index
    %c0_41 = arith.constant 0 : index
    %c0_42 = arith.constant 0 : index
    %48 = vector.load %arg5[%c7, %c0_41, %c0_42] : memref<8x128x112xbf16, #tpu.memory_space<vmem>>, vector<1x128x112xbf16>
    %49 = vector.shape_cast %48 : vector<1x128x112xbf16> to vector<128x112xbf16>
    %cst_43 = arith.constant dense<0.000000e+00> : vector<80x112xf32>
    %50 = tpu.matmul %47, %49, %cst_43 {dimension_numbers = #tpu.dot_dimension_numbers<[1], [0], [0], [1], [0, 0, 1, 1], [], []>} : vector<80x128xbf16>, vector<128x112xbf16>, vector<80x112xf32> -> vector<80x112xf32>
    %51 = arith.addf %46, %50 : vector<80x112xf32>
    %c0_44 = arith.constant 0 : index
    %c0_45 = arith.constant 0 : index
    %52 = vector.load %arg6[%c0_44, %c0_45] : memref<1x112xf32, #tpu.memory_space<vmem>>, vector<1x112xf32>
    %53 = vector.broadcast %52 : vector<1x112xf32> to vector<80x112xf32>
    %54 = arith.addf %51, %53 : vector<80x112xf32>
    %cst_46 = arith.constant 0.000000e+00 : f32
    %55 = vector.broadcast %cst_46 : f32 to vector<80x112xf32>
    %56 = arith.maximumf %54, %55 : vector<80x112xf32>
    %57 = arith.truncf %56 : vector<80x112xf32> to vector<80x112xbf16>
    %c0_47 = arith.constant 0 : index
    %c0_48 = arith.constant 0 : index
    %58 = vector.load %arg16[%c0_47, %c0_48] : memref<80x112xbf16, #tpu.memory_space<vmem>>, vector<80x112xbf16>
    tpu.vector_store %arg16[%c0_47, %c0_48], %57 {strides = array<i32>} : memref<80x112xbf16, #tpu.memory_space<vmem>>, vector<80x112xbf16>,
    %cst_49 = arith.constant 0.000000e+00 : f32
    %59 = vector.broadcast %cst_49 : f32 to vector<64x96xf32>
    %c0_50 = arith.constant 0 : index
    %c0_51 = arith.constant 0 : index
    %60 = vector.load %arg16[%c0_50, %c0_51] : memref<80x112xbf16, #tpu.memory_space<vmem>>, vector<64x112xbf16>
    %c0_52 = arith.constant 0 : index
    %c0_53 = arith.constant 0 : index
    %c0_54 = arith.constant 0 : index
    %61 = vector.load %arg7[%c0_52, %c0_53, %c0_54] : memref<3x112x96xbf16, #tpu.memory_space<vmem>>, vector<1x112x96xbf16>
    %62 = vector.shape_cast %61 : vector<1x112x96xbf16> to vector<112x96xbf16>
    %cst_55 = arith.constant dense<0.000000e+00> : vector<64x96xf32>
    %63 = tpu.matmul %60, %62, %cst_55 {dimension_numbers = #tpu.dot_dimension_numbers<[1], [0], [0], [1], [0, 0, 1, 1], [], []>} : vector<64x112xbf16>, vector<112x96xbf16>, vector<64x96xf32> -> vector<64x96xf32>
    %64 = arith.addf %59, %63 : vector<64x96xf32>
    %c8_56 = arith.constant 8 : index
    %c0_57 = arith.constant 0 : index
    %65 = vector.load %arg16[%c8_56, %c0_57] : memref<80x112xbf16, #tpu.memory_space<vmem>>, vector<64x112xbf16>
    %c1_58 = arith.constant 1 : index
    %c0_59 = arith.constant 0 : index
    %c0_60 = arith.constant 0 : index
    %66 = vector.load %arg7[%c1_58, %c0_59, %c0_60] : memref<3x112x96xbf16, #tpu.memory_space<vmem>>, vector<1x112x96xbf16>
    %67 = vector.shape_cast %66 : vector<1x112x96xbf16> to vector<112x96xbf16>
    %cst_61 = arith.constant dense<0.000000e+00> : vector<64x96xf32>
    %68 = tpu.matmul %65, %67, %cst_61 {dimension_numbers = #tpu.dot_dimension_numbers<[1], [0], [0], [1], [0, 0, 1, 1], [], []>} : vector<64x112xbf16>, vector<112x96xbf16>, vector<64x96xf32> -> vector<64x96xf32>
    %69 = arith.addf %64, %68 : vector<64x96xf32>
    %c16 = arith.constant 16 : index
    %c0_62 = arith.constant 0 : index
    %70 = vector.load %arg16[%c16, %c0_62] : memref<80x112xbf16, #tpu.memory_space<vmem>>, vector<64x112xbf16>
    %c2_63 = arith.constant 2 : index
    %c0_64 = arith.constant 0 : index
    %c0_65 = arith.constant 0 : index
    %71 = vector.load %arg7[%c2_63, %c0_64, %c0_65] : memref<3x112x96xbf16, #tpu.memory_space<vmem>>, vector<1x112x96xbf16>
    %72 = vector.shape_cast %71 : vector<1x112x96xbf16> to vector<112x96xbf16>
    %cst_66 = arith.constant dense<0.000000e+00> : vector<64x96xf32>
    %73 = tpu.matmul %70, %72, %cst_66 {dimension_numbers = #tpu.dot_dimension_numbers<[1], [0], [0], [1], [0, 0, 1, 1], [], []>} : vector<64x112xbf16>, vector<112x96xbf16>, vector<64x96xf32> -> vector<64x96xf32>
    %74 = arith.addf %69, %73 : vector<64x96xf32>
    %c0_67 = arith.constant 0 : index
    %c0_68 = arith.constant 0 : index
    %75 = vector.load %arg8[%c0_67, %c0_68] : memref<1x96xf32, #tpu.memory_space<vmem>>, vector<1x96xf32>
    %76 = vector.broadcast %75 : vector<1x96xf32> to vector<64x96xf32>
    %77 = arith.addf %74, %76 : vector<64x96xf32>
    %cst_69 = arith.constant 0.000000e+00 : f32
    %78 = vector.broadcast %cst_69 : f32 to vector<64x96xf32>
    %79 = arith.maximumf %77, %78 : vector<64x96xf32>
    %80 = arith.truncf %79 : vector<64x96xf32> to vector<64x96xbf16>
    %c0_70 = arith.constant 0 : index
    %c0_71 = arith.constant 0 : index
    %81 = vector.load %arg17[%c0_70, %c0_71] : memref<64x96xbf16, #tpu.memory_space<vmem>>, vector<64x96xbf16>
    tpu.vector_store %arg17[%c0_70, %c0_71], %80 {strides = array<i32>} : memref<64x96xbf16, #tpu.memory_space<vmem>>, vector<64x96xbf16>,
    %c0_72 = arith.constant 0 : index
    %c0_73 = arith.constant 0 : index
    %c0_74 = arith.constant 0 : index
    %82 = vector.load %arg2[%c0_72, %c0_73, %c0_74] : memref<1x8x128xbf16, #tpu.memory_space<vmem>>, vector<1x8x128xbf16>
    %83 = vector.shape_cast %82 : vector<1x8x128xbf16> to vector<8x128xbf16>
    %c0_75 = arith.constant 0 : index
    %c0_76 = arith.constant 0 : index
    %84 = vector.load %arg10[%c0_75, %c0_76] : memref<128x128xbf16, #tpu.memory_space<vmem>>, vector<128x128xbf16>
    %cst_77 = arith.constant dense<0.000000e+00> : vector<8x128xf32>
    %85 = tpu.matmul %83, %84, %cst_77 {dimension_numbers = #tpu.dot_dimension_numbers<[1], [0], [0], [1], [0, 0, 1, 1], [], []>} : vector<8x128xbf16>, vector<128x128xbf16>, vector<8x128xf32> -> vector<8x128xf32>
    %c0_78 = arith.constant 0 : index
    %c0_79 = arith.constant 0 : index
    %86 = vector.load %arg17[%c0_78, %c0_79] : memref<64x96xbf16, #tpu.memory_space<vmem>>, vector<8x96xbf16>
    %c0_80 = arith.constant 0 : index
    %c0_81 = arith.constant 0 : index
    %c0_82 = arith.constant 0 : index
    %87 = vector.load %arg9[%c0_80, %c0_81, %c0_82] : memref<8x96x128xbf16, #tpu.memory_space<vmem>>, vector<1x96x128xbf16>
    %88 = vector.shape_cast %87 : vector<1x96x128xbf16> to vector<96x128xbf16>
    %cst_83 = arith.constant dense<0.000000e+00> : vector<8x128xf32>
    %89 = tpu.matmul %86, %88, %cst_83 {dimension_numbers = #tpu.dot_dimension_numbers<[1], [0], [0], [1], [0, 0, 1, 1], [], []>} : vector<8x96xbf16>, vector<96x128xbf16>, vector<8x128xf32> -> vector<8x128xf32>
    %90 = arith.addf %85, %89 : vector<8x128xf32>
    %c8_84 = arith.constant 8 : index
    %c0_85 = arith.constant 0 : index
    %91 = vector.load %arg17[%c8_84, %c0_85] : memref<64x96xbf16, #tpu.memory_space<vmem>>, vector<8x96xbf16>
    %c1_86 = arith.constant 1 : index
    %c0_87 = arith.constant 0 : index
    %c0_88 = arith.constant 0 : index
    %92 = vector.load %arg9[%c1_86, %c0_87, %c0_88] : memref<8x96x128xbf16, #tpu.memory_space<vmem>>, vector<1x96x128xbf16>
    %93 = vector.shape_cast %92 : vector<1x96x128xbf16> to vector<96x128xbf16>
    %cst_89 = arith.constant dense<0.000000e+00> : vector<8x128xf32>
    %94 = tpu.matmul %91, %93, %cst_89 {dimension_numbers = #tpu.dot_dimension_numbers<[1], [0], [0], [1], [0, 0, 1, 1], [], []>} : vector<8x96xbf16>, vector<96x128xbf16>, vector<8x128xf32> -> vector<8x128xf32>
    %95 = arith.addf %90, %94 : vector<8x128xf32>
    %c16_90 = arith.constant 16 : index
    %c0_91 = arith.constant 0 : index
    %96 = vector.load %arg17[%c16_90, %c0_91] : memref<64x96xbf16, #tpu.memory_space<vmem>>, vector<8x96xbf16>
    %c2_92 = arith.constant 2 : index
    %c0_93 = arith.constant 0 : index
    %c0_94 = arith.constant 0 : index
    %97 = vector.load %arg9[%c2_92, %c0_93, %c0_94] : memref<8x96x128xbf16, #tpu.memory_space<vmem>>, vector<1x96x128xbf16>
    %98 = vector.shape_cast %97 : vector<1x96x128xbf16> to vector<96x128xbf16>
    %cst_95 = arith.constant dense<0.000000e+00> : vector<8x128xf32>
    %99 = tpu.matmul %96, %98, %cst_95 {dimension_numbers = #tpu.dot_dimension_numbers<[1], [0], [0], [1], [0, 0, 1, 1], [], []>} : vector<8x96xbf16>, vector<96x128xbf16>, vector<8x128xf32> -> vector<8x128xf32>
    %100 = arith.addf %95, %99 : vector<8x128xf32>
    %c24 = arith.constant 24 : index
    %c0_96 = arith.constant 0 : index
    %101 = vector.load %arg17[%c24, %c0_96] : memref<64x96xbf16, #tpu.memory_space<vmem>>, vector<8x96xbf16>
    %c3_97 = arith.constant 3 : index
    %c0_98 = arith.constant 0 : index
    %c0_99 = arith.constant 0 : index
    %102 = vector.load %arg9[%c3_97, %c0_98, %c0_99] : memref<8x96x128xbf16, #tpu.memory_space<vmem>>, vector<1x96x128xbf16>
    %103 = vector.shape_cast %102 : vector<1x96x128xbf16> to vector<96x128xbf16>
    %cst_100 = arith.constant dense<0.000000e+00> : vector<8x128xf32>
    %104 = tpu.matmul %101, %103, %cst_100 {dimension_numbers = #tpu.dot_dimension_numbers<[1], [0], [0], [1], [0, 0, 1, 1], [], []>} : vector<8x96xbf16>, vector<96x128xbf16>, vector<8x128xf32> -> vector<8x128xf32>
    %105 = arith.addf %100, %104 : vector<8x128xf32>
    %c32 = arith.constant 32 : index
    %c0_101 = arith.constant 0 : index
    %106 = vector.load %arg17[%c32, %c0_101] : memref<64x96xbf16, #tpu.memory_space<vmem>>, vector<8x96xbf16>
    %c4_102 = arith.constant 4 : index
    %c0_103 = arith.constant 0 : index
    %c0_104 = arith.constant 0 : index
    %107 = vector.load %arg9[%c4_102, %c0_103, %c0_104] : memref<8x96x128xbf16, #tpu.memory_space<vmem>>, vector<1x96x128xbf16>
    %108 = vector.shape_cast %107 : vector<1x96x128xbf16> to vector<96x128xbf16>
    %cst_105 = arith.constant dense<0.000000e+00> : vector<8x128xf32>
    %109 = tpu.matmul %106, %108, %cst_105 {dimension_numbers = #tpu.dot_dimension_numbers<[1], [0], [0], [1], [0, 0, 1, 1], [], []>} : vector<8x96xbf16>, vector<96x128xbf16>, vector<8x128xf32> -> vector<8x128xf32>
    %110 = arith.addf %105, %109 : vector<8x128xf32>
    %c40 = arith.constant 40 : index
    %c0_106 = arith.constant 0 : index
    %111 = vector.load %arg17[%c40, %c0_106] : memref<64x96xbf16, #tpu.memory_space<vmem>>, vector<8x96xbf16>
    %c5_107 = arith.constant 5 : index
    %c0_108 = arith.constant 0 : index
    %c0_109 = arith.constant 0 : index
    %112 = vector.load %arg9[%c5_107, %c0_108, %c0_109] : memref<8x96x128xbf16, #tpu.memory_space<vmem>>, vector<1x96x128xbf16>
    %113 = vector.shape_cast %112 : vector<1x96x128xbf16> to vector<96x128xbf16>
    %cst_110 = arith.constant dense<0.000000e+00> : vector<8x128xf32>
    %114 = tpu.matmul %111, %113, %cst_110 {dimension_numbers = #tpu.dot_dimension_numbers<[1], [0], [0], [1], [0, 0, 1, 1], [], []>} : vector<8x96xbf16>, vector<96x128xbf16>, vector<8x128xf32> -> vector<8x128xf32>
    %115 = arith.addf %110, %114 : vector<8x128xf32>
    %c48 = arith.constant 48 : index
    %c0_111 = arith.constant 0 : index
    %116 = vector.load %arg17[%c48, %c0_111] : memref<64x96xbf16, #tpu.memory_space<vmem>>, vector<8x96xbf16>
    %c6_112 = arith.constant 6 : index
    %c0_113 = arith.constant 0 : index
    %c0_114 = arith.constant 0 : index
    %117 = vector.load %arg9[%c6_112, %c0_113, %c0_114] : memref<8x96x128xbf16, #tpu.memory_space<vmem>>, vector<1x96x128xbf16>
    %118 = vector.shape_cast %117 : vector<1x96x128xbf16> to vector<96x128xbf16>
    %cst_115 = arith.constant dense<0.000000e+00> : vector<8x128xf32>
    %119 = tpu.matmul %116, %118, %cst_115 {dimension_numbers = #tpu.dot_dimension_numbers<[1], [0], [0], [1], [0, 0, 1, 1], [], []>} : vector<8x96xbf16>, vector<96x128xbf16>, vector<8x128xf32> -> vector<8x128xf32>
    %120 = arith.addf %115, %119 : vector<8x128xf32>
    %c56 = arith.constant 56 : index
    %c0_116 = arith.constant 0 : index
    %121 = vector.load %arg17[%c56, %c0_116] : memref<64x96xbf16, #tpu.memory_space<vmem>>, vector<8x96xbf16>
    %c7_117 = arith.constant 7 : index
    %c0_118 = arith.constant 0 : index
    %c0_119 = arith.constant 0 : index
    %122 = vector.load %arg9[%c7_117, %c0_118, %c0_119] : memref<8x96x128xbf16, #tpu.memory_space<vmem>>, vector<1x96x128xbf16>
    %123 = vector.shape_cast %122 : vector<1x96x128xbf16> to vector<96x128xbf16>
    %cst_120 = arith.constant dense<0.000000e+00> : vector<8x128xf32>
    %124 = tpu.matmul %121, %123, %cst_120 {dimension_numbers = #tpu.dot_dimension_numbers<[1], [0], [0], [1], [0, 0, 1, 1], [], []>} : vector<8x96xbf16>, vector<96x128xbf16>, vector<8x128xf32> -> vector<8x128xf32>
    %125 = arith.addf %120, %124 : vector<8x128xf32>
    %c0_121 = arith.constant 0 : index
    %c0_122 = arith.constant 0 : index
    %126 = vector.load %arg11[%c0_121, %c0_122] : memref<1x128xf32, #tpu.memory_space<vmem>>, vector<1x128xf32>
    %127 = vector.broadcast %126 : vector<1x128xf32> to vector<8x128xf32>
    %128 = arith.addf %125, %127 : vector<8x128xf32>
    %cst_123 = arith.constant 0.000000e+00 : f32
    %129 = vector.broadcast %cst_123 : f32 to vector<8x128xf32>
    %130 = arith.maximumf %128, %129 : vector<8x128xf32>
    %131 = arith.truncf %130 : vector<8x128xf32> to vector<8x128xbf16>
    %c0_124 = arith.constant 0 : index
    %c0_125 = arith.constant 0 : index
    %132 = vector.load %arg12[%c0_124, %c0_125] : memref<128x128xbf16, #tpu.memory_space<vmem>>, vector<128x128xbf16>
    %cst_126 = arith.constant dense<0.000000e+00> : vector<8x128xf32>
    %133 = tpu.matmul %131, %132, %cst_126 {dimension_numbers = #tpu.dot_dimension_numbers<[1], [0], [0], [1], [0, 0, 1, 1], [], []>} : vector<8x128xbf16>, vector<128x128xbf16>, vector<8x128xf32> -> vector<8x128xf32>
    %c0_127 = arith.constant 0 : index
    %c0_128 = arith.constant 0 : index
    %134 = vector.load %arg13[%c0_127, %c0_128] : memref<1x128xf32, #tpu.memory_space<vmem>>, vector<1x128xf32>
    %135 = vector.broadcast %134 : vector<1x128xf32> to vector<8x128xf32>
    %136 = arith.addf %133, %135 : vector<8x128xf32>
    %c0_129 = arith.constant 0 : index
    %c0_130 = arith.constant 0 : index
    %c0_131 = arith.constant 0 : index
    %137 = vector.load %arg14[%c0_129, %c0_130, %c0_131] : memref<1x8x128xf32, #tpu.memory_space<vmem>>, vector<1x8x128xf32>
    %138 = vector.shape_cast %137 : vector<1x8x128xf32> to vector<8x128xf32>
    %139 = vector.shape_cast %136 : vector<8x128xf32> to vector<1x8x128xf32>
    tpu.vector_store %arg14[%c0_129, %c0_130, %c0_131], %139 {strides = array<i32>} : memref<1x8x128xf32, #tpu.memory_space<vmem>>, vector<1x8x128xf32>,
    return
  }
  func.func @transform_0(%arg0: i32) -> (i32, i32, i32) {
    %c0_i32 = arith.constant 0 : i32
    %c0_i32_0 = arith.constant 0 : i32
    %c0_i32_1 = arith.constant 0 : i32
    return %arg0, %c0_i32, %c0_i32_0 : i32, i32, i32
  }
  func.func @transform_1(%arg0: i32) -> (i32, i32, i32) {
    %c0_i32 = arith.constant 0 : i32
    %c0_i32_0 = arith.constant 0 : i32
    %c0_i32_1 = arith.constant 0 : i32
    return %arg0, %c0_i32, %c0_i32_0 : i32, i32, i32
  }
  func.func @transform_2(%arg0: i32) -> (i32, i32) {
    %c0_i32 = arith.constant 0 : i32
    %c0_i32_0 = arith.constant 0 : i32
    %c0_i32_1 = arith.constant 0 : i32
    return %c0_i32, %c0_i32_0 : i32, i32
  }
  func.func @transform_3(%arg0: i32) -> (i32, i32) {
    %c0_i32 = arith.constant 0 : i32
    %c0_i32_0 = arith.constant 0 : i32
    %c0_i32_1 = arith.constant 0 : i32
    return %c0_i32, %c0_i32_0 : i32, i32
  }
  func.func @transform_4(%arg0: i32) -> (i32, i32, i32) {
    %c0_i32 = arith.constant 0 : i32
    %c0_i32_0 = arith.constant 0 : i32
    %c0_i32_1 = arith.constant 0 : i32
    %c0_i32_2 = arith.constant 0 : i32
    return %c0_i32, %c0_i32_0, %c0_i32_1 : i32, i32, i32
  }
  func.func @transform_5(%arg0: i32) -> (i32, i32) {
    %c0_i32 = arith.constant 0 : i32
    %c0_i32_0 = arith.constant 0 : i32
    %c0_i32_1 = arith.constant 0 : i32
    return %c0_i32, %c0_i32_0 : i32, i32
  }
  func.func @transform_6(%arg0: i32) -> (i32, i32, i32) {
    %c0_i32 = arith.constant 0 : i32
    %c0_i32_0 = arith.constant 0 : i32
    %c0_i32_1 = arith.constant 0 : i32
    %c0_i32_2 = arith.constant 0 : i32
    return %c0_i32, %c0_i32_0, %c0_i32_1 : i32, i32, i32
  }
  func.func @transform_7(%arg0: i32) -> (i32, i32) {
    %c0_i32 = arith.constant 0 : i32
    %c0_i32_0 = arith.constant 0 : i32
    %c0_i32_1 = arith.constant 0 : i32
    return %c0_i32, %c0_i32_0 : i32, i32
  }
  func.func @transform_8(%arg0: i32) -> (i32, i32, i32) {
    %c0_i32 = arith.constant 0 : i32
    %c0_i32_0 = arith.constant 0 : i32
    %c0_i32_1 = arith.constant 0 : i32
    %c0_i32_2 = arith.constant 0 : i32
    return %c0_i32, %c0_i32_0, %c0_i32_1 : i32, i32, i32
  }
  func.func @transform_9(%arg0: i32) -> (i32, i32) {
    %c0_i32 = arith.constant 0 : i32
    %c0_i32_0 = arith.constant 0 : i32
    %c0_i32_1 = arith.constant 0 : i32
    return %c0_i32, %c0_i32_0 : i32, i32
  }
  func.func @transform_10(%arg0: i32) -> (i32, i32) {
    %c0_i32 = arith.constant 0 : i32
    %c0_i32_0 = arith.constant 0 : i32
    %c0_i32_1 = arith.constant 0 : i32
    return %c0_i32, %c0_i32_0 : i32, i32
  }
  func.func @transform_11(%arg0: i32) -> (i32, i32) {
    %c0_i32 = arith.constant 0 : i32
    %c0_i32_0 = arith.constant 0 : i32
    %c0_i32_1 = arith.constant 0 : i32
    return %c0_i32, %c0_i32_0 : i32, i32
  }
  func.func @transform_12(%arg0: i32) -> (i32, i32) {
    %c0_i32 = arith.constant 0 : i32
    %c0_i32_0 = arith.constant 0 : i32
    %c0_i32_1 = arith.constant 0 : i32
    return %c0_i32, %c0_i32_0 : i32, i32
  }
  func.func @transform_13(%arg0: i32) -> (i32, i32, i32) {
    %c0_i32 = arith.constant 0 : i32
    %c0_i32_0 = arith.constant 0 : i32
    %c0_i32_1 = arith.constant 0 : i32
    return %arg0, %c0_i32, %c0_i32_0 : i32, i32, i32
  }
}

</mosaic_0001>

<llo_original>
// kernel: qnetwork_forward.1
$region0: #{qnetwork_forward.1}
  #allocation0 [shape = 'u32[]', space=smem, size = 0x4, offset = 0x4, fixed_abs, tag = 'smem constant byte address 0x4 - core index']
  #allocation1 [shape = 'u32[144,128]{1,0:T(1,128)}', space=vmem, size = 0x12000, scoped, tag = 'internal scratch']
  #allocation2 [shape = 'bf16[384,128]{1,0:T(8,128)(2,1)}', space=vmem, size = 0x18000, scoped, tag = 'scratch operand']
  #allocation3 [shape = 'bf16[80,112]{1,0:T(8,128)(2,1)}', space=vmem, size = 0x5000, scoped, tag = 'scratch operand']
  #allocation4 [shape = 'bf16[64,96]{1,0:T(8,128)(2,1)}', space=vmem, size = 0x4000, scoped, tag = 'scratch operand']
  %s0 = inlined_call_operand.vmem [shape: bf16[1,384,1024], index: 0, kind: input, shape index: {}]
  %s1 = inlined_call_operand.vmem [shape: bf16[1,8,128], index: 1, kind: input, shape index: {}]
  %s2 = inlined_call_operand.vmem [shape: bf16[1024,128], index: 2, kind: input, shape index: {}]
  %s3 = inlined_call_operand.vmem [shape: f32[1,128], index: 3, kind: input, shape index: {}]
  %s4 = inlined_call_operand.vmem [shape: bf16[8,128,112], index: 4, kind: input, shape index: {}]
  %s5 = inlined_call_operand.vmem [shape: f32[1,112], index: 5, kind: input, shape index: {}]
  %s6 = inlined_call_operand.vmem [shape: bf16[3,112,96], index: 6, kind: input, shape index: {}]
  %s7 = inlined_call_operand.vmem [shape: f32[1,96], index: 7, kind: input, shape index: {}]
  %s8 = inlined_call_operand.vmem [shape: bf16[8,96,128], index: 8, kind: input, shape index: {}]
  %s9 = inlined_call_operand.vmem [shape: bf16[128,128], index: 9, kind: input, shape index: {}]
  %s10 = inlined_call_operand.vmem [shape: f32[1,128], index: 10, kind: input, shape index: {}]
  %s11 = inlined_call_operand.vmem [shape: bf16[128,128], index: 11, kind: input, shape index: {}]
  %s12 = inlined_call_operand.vmem [shape: f32[1,128], index: 12, kind: input, shape index: {}]
  %s13 = inlined_call_operand.vmem [shape: f32[1,8,128], index: 13, kind: output, shape index: {}]
  %s14 = sld [smem:[#allocation0]]
  $region62: #{qnetwork_forward.1} parent=0
    _
  %s16 = ssub.s32 1, %s14
  %s17 = scalar_select 0, %s16, %s14
  // Predicated region
  $region2: #{qnetwork_forward.1} parent=0 // pred_check
    _
  $region3: #{qnetwork_forward.1} parent=0 // pred_check_branch
    %19 = sbr.rel (0) target = $region5
  $region4: #{qnetwork_forward.1} parent=0 // pred_region
    _
  $region5: #{qnetwork_forward.1} parent=0 // pred_fallthru
    _
  // Predicated region
  $region6: #{qnetwork_forward.1} parent=0 // pred_check
    _
  $region7: #{qnetwork_forward.1} parent=0 // pred_check_branch
    %21 = sbr.rel (0) target = $region9
  $region8: #{qnetwork_forward.1} parent=0 // pred_region
    _
  $region9: #{qnetwork_forward.1} parent=0 // pred_fallthru
    _
  // Predicated region
  $region10: #{qnetwork_forward.1} parent=0 // pred_check
    _
  $region11: #{qnetwork_forward.1} parent=0 // pred_check_branch
    %23 = sbr.rel (0) target = $region13
  $region12: #{qnetwork_forward.1} parent=0 // pred_region
    _
  $region13: #{qnetwork_forward.1} parent=0 // pred_fallthru
    _
  // Predicated region
  $region14: #{qnetwork_forward.1} parent=0 // pred_check
    _
  $region15: #{qnetwork_forward.1} parent=0 // pred_check_branch
    %25 = sbr.rel (0) target = $region17
  $region16: #{qnetwork_forward.1} parent=0 // pred_region
    _
  $region17: #{qnetwork_forward.1} parent=0 // pred_fallthru
    _
  // Predicated region
  $region18: #{qnetwork_forward.1} parent=0 // pred_check
    _
  $region19: #{qnetwork_forward.1} parent=0 // pred_check_branch
    %27 = sbr.rel (0) target = $region21
  $region20: #{qnetwork_forward.1} parent=0 // pred_region
    _
  $region21: #{qnetwork_forward.1} parent=0 // pred_fallthru
    _
  // Predicated region
  $region22: #{qnetwork_forward.1} parent=0 // pred_check
    _
  $region23: #{qnetwork_forward.1} parent=0 // pred_check_branch
    %29 = sbr.rel (0) target = $region25
  $region24: #{qnetwork_forward.1} parent=0 // pred_region
    _
  $region25: #{qnetwork_forward.1} parent=0 // pred_fallthru
    _
  // Predicated region
  $region26: #{qnetwork_forward.1} parent=0 // pred_check
    _
  $region27: #{qnetwork_forward.1} parent=0 // pred_check_branch
    %31 = sbr.rel (0) target = $region29
  $region28: #{qnetwork_forward.1} parent=0 // pred_region
    _
  $region29: #{qnetwork_forward.1} parent=0 // pred_fallthru
    _
  // Predicated region
  $region30: #{qnetwork_forward.1} parent=0 // pred_check
    _
  $region31: #{qnetwork_forward.1} parent=0 // pred_check_branch
    %33 = sbr.rel (0) target = $region33
  $region32: #{qnetwork_forward.1} parent=0 // pred_region
    _
  $region33: #{qnetwork_forward.1} parent=0 // pred_fallthru
    _
  // Predicated region
  $region34: #{qnetwork_forward.1} parent=0 // pred_check
    _
  $region35: #{qnetwork_forward.1} parent=0 // pred_check_branch
    %35 = sbr.rel (0) target = $region37
  $region36: #{qnetwork_forward.1} parent=0 // pred_region
    _
  $region37: #{qnetwork_forward.1} parent=0 // pred_fallthru
    _
  // Predicated region
  $region38: #{qnetwork_forward.1} parent=0 // pred_check
    _
  $region39: #{qnetwork_forward.1} parent=0 // pred_check_branch
    %37 = sbr.rel (0) target = $region41
  $region40: #{qnetwork_forward.1} parent=0 // pred_region
    _
  $region41: #{qnetwork_forward.1} parent=0 // pred_fallthru
    _
  // Predicated region
  $region42: #{qnetwork_forward.1} parent=0 // pred_check
    _
  $region43: #{qnetwork_forward.1} parent=0 // pred_check_branch
    %39 = sbr.rel (0) target = $region45
  $region44: #{qnetwork_forward.1} parent=0 // pred_region
    _
  $region45: #{qnetwork_forward.1} parent=0 // pred_fallthru
    _
  // Predicated region
  $region46: #{qnetwork_forward.1} parent=0 // pred_check
    _
  $region47: #{qnetwork_forward.1} parent=0 // pred_check_branch
    %41 = sbr.rel (0) target = $region49
  $region48: #{qnetwork_forward.1} parent=0 // pred_region
    _
  $region49: #{qnetwork_forward.1} parent=0 // pred_fallthru
    _
  // Predicated region
  $region50: #{qnetwork_forward.1} parent=0 // pred_check
    _
  $region51: #{qnetwork_forward.1} parent=0 // pred_check_branch
    %43 = sbr.rel (0) target = $region53
  $region52: #{qnetwork_forward.1} parent=0 // pred_region
    _
  $region53: #{qnetwork_forward.1} parent=0 // pred_fallthru
    _
  %v45 = vld [vmem:[%s0] sm:$0xff]
  %v46 = vld [vmem:[%s0 + $0x8] sm:$0xff]
  %v47 = vld [vmem:[%s0 + $0x10] sm:$0xff]
  %v48 = vld [vmem:[%s0 + $0x18] sm:$0xff]
  %v49 = vld [vmem:[%s0 + $0x20] sm:$0xff]
  %v50 = vld [vmem:[%s0 + $0x28] sm:$0xff]
  %v51 = vld [vmem:[%s0 + $0x30] sm:$0xff]
  %v52 = vld [vmem:[%s0 + $0x38] sm:$0xff]
  %v53 = vld [vmem:[%s0 + $0x40] sm:$0xff]
  %v54 = vld [vmem:[%s0 + $0x48] sm:$0xff]
  %v55 = vld [vmem:[%s0 + $0x50] sm:$0xff]
  %v56 = vld [vmem:[%s0 + $0x58] sm:$0xff]
  %v57 = vld [vmem:[%s0 + $0x60] sm:$0xff]
  %v58 = vld [vmem:[%s0 + $0x68] sm:$0xff]
  %v59 = vld [vmem:[%s0 + $0x70] sm:$0xff]
  %v60 = vld [vmem:[%s0 + $0x78] sm:$0xff]
  %v61 = vld [vmem:[%s0 + $0x80] sm:$0xff]
  %v62 = vld [vmem:[%s0 + $0x88] sm:$0xff]
  %v63 = vld [vmem:[%s0 + $0x90] sm:$0xff]
  %v64 = vld [vmem:[%s0 + $0x98] sm:$0xff]
  %v65 = vld [vmem:[%s0 + $0xa0] sm:$0xff]
  %v66 = vld [vmem:[%s0 + $0xa8] sm:$0xff]
  %v67 = vld [vmem:[%s0 + $0xb0] sm:$0xff]
  %v68 = vld [vmem:[%s0 + $0xb8] sm:$0xff]
  %v69 = vld [vmem:[%s0 + $0xc0] sm:$0xff]
  %v70 = vld [vmem:[%s0 + $0xc8] sm:$0xff]
  %v71 = vld [vmem:[%s0 + $0xd0] sm:$0xff]
  %v72 = vld [vmem:[%s0 + $0xd8] sm:$0xff]
  %v73 = vld [vmem:[%s0 + $0xe0] sm:$0xff]
  %v74 = vld [vmem:[%s0 + $0xe8] sm:$0xff]
  %v75 = vld [vmem:[%s0 + $0xf0] sm:$0xff]
  %v76 = vld [vmem:[%s0 + $0xf8] sm:$0xff]
  %v77 = vld [vmem:[%s0 + $0x100] sm:$0xff]
  %v78 = vld [vmem:[%s0 + $0x108] sm:$0xff]
  %v79 = vld [vmem:[%s0 + $0x110] sm:$0xff]
  %v80 = vld [vmem:[%s0 + $0x118] sm:$0xff]
  %v81 = vld [vmem:[%s0 + $0x120] sm:$0xff]
  %v82 = vld [vmem:[%s0 + $0x128] sm:$0xff]
  %v83 = vld [vmem:[%s0 + $0x130] sm:$0xff]
  %v84 = vld [vmem:[%s0 + $0x138] sm:$0xff]
  %v85 = vld [vmem:[%s0 + $0x140] sm:$0xff]
  %v86 = vld [vmem:[%s0 + $0x148] sm:$0xff]
  %v87 = vld [vmem:[%s0 + $0x150] sm:$0xff]
  %v88 = vld [vmem:[%s0 + $0x158] sm:$0xff]
  %v89 = vld [vmem:[%s0 + $0x160] sm:$0xff]
  %v90 = vld [vmem:[%s0 + $0x168] sm:$0xff]
  %v91 = vld [vmem:[%s0 + $0x170] sm:$0xff]
  %v92 = vld [vmem:[%s0 + $0x178] sm:$0xff]
  %v93 = vld [vmem:[%s0 + $0x180] sm:$0xff]
  %v94 = vld [vmem:[%s0 + $0x188] sm:$0xff]
  %v95 = vld [vmem:[%s0 + $0x190] sm:$0xff]
  %v96 = vld [vmem:[%s0 + $0x198] sm:$0xff]
  %v97 = vld [vmem:[%s0 + $0x1a0] sm:$0xff]
  %v98 = vld [vmem:[%s0 + $0x1a8] sm:$0xff]
  %v99 = vld [vmem:[%s0 + $0x1b0] sm:$0xff]
  %v100 = vld [vmem:[%s0 + $0x1b8] sm:$0xff]
  %v101 = vld [vmem:[%s0 + $0x1c0] sm:$0xff]
  %v102 = vld [vmem:[%s0 + $0x1c8] sm:$0xff]
  %v103 = vld [vmem:[%s0 + $0x1d0] sm:$0xff]
  %v104 = vld [vmem:[%s0 + $0x1d8] sm:$0xff]
  %v105 = vld [vmem:[%s0 + $0x1e0] sm:$0xff]
  %v106 = vld [vmem:[%s0 + $0x1e8] sm:$0xff]
  %v107 = vld [vmem:[%s0 + $0x1f0] sm:$0xff]
  %v108 = vld [vmem:[%s0 + $0x1f8] sm:$0xff]
  %v109 = vld [vmem:[%s0 + $0x200] sm:$0xff]
  %v110 = vld [vmem:[%s0 + $0x208] sm:$0xff]
  %v111 = vld [vmem:[%s0 + $0x210] sm:$0xff]
  %v112 = vld [vmem:[%s0 + $0x218] sm:$0xff]
  %v113 = vld [vmem:[%s0 + $0x220] sm:$0xff]
  %v114 = vld [vmem:[%s0 + $0x228] sm:$0xff]
  %v115 = vld [vmem:[%s0 + $0x230] sm:$0xff]
  %v116 = vld [vmem:[%s0 + $0x238] sm:$0xff]
  %v117 = vld [vmem:[%s0 + $0x240] sm:$0xff]
  %v118 = vld [vmem:[%s0 + $0x248] sm:$0xff]
  %v119 = vld [vmem:[%s0 + $0x250] sm:$0xff]
  %v120 = vld [vmem:[%s0 + $0x258] sm:$0xff]
  %v121 = vld [vmem:[%s0 + $0x260] sm:$0xff]
  %v122 = vld [vmem:[%s0 + $0x268] sm:$0xff]
  %v123 = vld [vmem:[%s0 + $0x270] sm:$0xff]
  %v124 = vld [vmem:[%s0 + $0x278] sm:$0xff]
  %v125 = vld [vmem:[%s0 + $0x280] sm:$0xff]
  %v126 = vld [vmem:[%s0 + $0x288] sm:$0xff]
  %v127 = vld [vmem:[%s0 + $0x290] sm:$0xff]
  %v128 = vld [vmem:[%s0 + $0x298] sm:$0xff]
  %v129 = vld [vmem:[%s0 + $0x2a0] sm:$0xff]
  %v130 = vld [vmem:[%s0 + $0x2a8] sm:$0xff]
  %v131 = vld [vmem:[%s0 + $0x2b0] sm:$0xff]
  %v132 = vld [vmem:[%s0 + $0x2b8] sm:$0xff]
  %v133 = vld [vmem:[%s0 + $0x2c0] sm:$0xff]
  %v134 = vld [vmem:[%s0 + $0x2c8] sm:$0xff]
  %v135 = vld [vmem:[%s0 + $0x2d0] sm:$0xff]
  %v136 = vld [vmem:[%s0 + $0x2d8] sm:$0xff]
  %v137 = vld [vmem:[%s0 + $0x2e0] sm:$0xff]
  %v138 = vld [vmem:[%s0 + $0x2e8] sm:$0xff]
  %v139 = vld [vmem:[%s0 + $0x2f0] sm:$0xff]
  %v140 = vld [vmem:[%s0 + $0x2f8] sm:$0xff]
  %v141 = vld [vmem:[%s0 + $0x300] sm:$0xff]
  %v142 = vld [vmem:[%s0 + $0x308] sm:$0xff]
  %v143 = vld [vmem:[%s0 + $0x310] sm:$0xff]
  %v144 = vld [vmem:[%s0 + $0x318] sm:$0xff]
  %v145 = vld [vmem:[%s0 + $0x320] sm:$0xff]
  %v146 = vld [vmem:[%s0 + $0x328] sm:$0xff]
  %v147 = vld [vmem:[%s0 + $0x330] sm:$0xff]
  %v148 = vld [vmem:[%s0 + $0x338] sm:$0xff]
  %v149 = vld [vmem:[%s0 + $0x340] sm:$0xff]
  %v150 = vld [vmem:[%s0 + $0x348] sm:$0xff]
  %v151 = vld [vmem:[%s0 + $0x350] sm:$0xff]
  %v152 = vld [vmem:[%s0 + $0x358] sm:$0xff]
  %v153 = vld [vmem:[%s0 + $0x360] sm:$0xff]
  %v154 = vld [vmem:[%s0 + $0x368] sm:$0xff]
  %v155 = vld [vmem:[%s0 + $0x370] sm:$0xff]
  %v156 = vld [vmem:[%s0 + $0x378] sm:$0xff]
  %v157 = vld [vmem:[%s0 + $0x380] sm:$0xff]
  %v158 = vld [vmem:[%s0 + $0x388] sm:$0xff]
  %v159 = vld [vmem:[%s0 + $0x390] sm:$0xff]
  %v160 = vld [vmem:[%s0 + $0x398] sm:$0xff]
  %v161 = vld [vmem:[%s0 + $0x3a0] sm:$0xff]
  %v162 = vld [vmem:[%s0 + $0x3a8] sm:$0xff]
  %v163 = vld [vmem:[%s0 + $0x3b0] sm:$0xff]
  %v164 = vld [vmem:[%s0 + $0x3b8] sm:$0xff]
  %v165 = vld [vmem:[%s0 + $0x3c0] sm:$0xff]
  %v166 = vld [vmem:[%s0 + $0x3c8] sm:$0xff]
  %v167 = vld [vmem:[%s0 + $0x3d0] sm:$0xff]
  %v168 = vld [vmem:[%s0 + $0x3d8] sm:$0xff]
  %v169 = vld [vmem:[%s0 + $0x3e0] sm:$0xff]
  %v170 = vld [vmem:[%s0 + $0x3e8] sm:$0xff]
  %v171 = vld [vmem:[%s0 + $0x3f0] sm:$0xff]
  %v172 = vld [vmem:[%s0 + $0x3f8] sm:$0xff]
  %v173 = vld [vmem:[%s0 + $0x400] sm:$0xff]
  %v174 = vld [vmem:[%s0 + $0x408] sm:$0xff]
  %v175 = vld [vmem:[%s0 + $0x410] sm:$0xff]
  %v176 = vld [vmem:[%s0 + $0x418] sm:$0xff]
  %v177 = vld [vmem:[%s0 + $0x420] sm:$0xff]
  %v178 = vld [vmem:[%s0 + $0x428] sm:$0xff]
  %v179 = vld [vmem:[%s0 + $0x430] sm:$0xff]
  %v180 = vld [vmem:[%s0 + $0x438] sm:$0xff]
  %v181 = vld [vmem:[%s0 + $0x440] sm:$0xff]
  %v182 = vld [vmem:[%s0 + $0x448] sm:$0xff]
  %v183 = vld [vmem:[%s0 + $0x450] sm:$0xff]
  %v184 = vld [vmem:[%s0 + $0x458] sm:$0xff]
  %v185 = vld [vmem:[%s0 + $0x460] sm:$0xff]
  %v186 = vld [vmem:[%s0 + $0x468] sm:$0xff]
  %v187 = vld [vmem:[%s0 + $0x470] sm:$0xff]
  %v188 = vld [vmem:[%s0 + $0x478] sm:$0xff]
  %v189 = vld [vmem:[%s0 + $0x480] sm:$0xff]
  %v190 = vld [vmem:[%s0 + $0x488] sm:$0xff]
  %v191 = vld [vmem:[%s0 + $0x490] sm:$0xff]
  %v192 = vld [vmem:[%s0 + $0x498] sm:$0xff]
  %v193 = vld [vmem:[%s0 + $0x4a0] sm:$0xff]
  %v194 = vld [vmem:[%s0 + $0x4a8] sm:$0xff]
  %v195 = vld [vmem:[%s0 + $0x4b0] sm:$0xff]
  %v196 = vld [vmem:[%s0 + $0x4b8] sm:$0xff]
  %v197 = vld [vmem:[%s0 + $0x4c0] sm:$0xff]
  %v198 = vld [vmem:[%s0 + $0x4c8] sm:$0xff]
  %v199 = vld [vmem:[%s0 + $0x4d0] sm:$0xff]
  %v200 = vld [vmem:[%s0 + $0x4d8] sm:$0xff]
  %v201 = vld [vmem:[%s0 + $0x4e0] sm:$0xff]
  %v202 = vld [vmem:[%s0 + $0x4e8] sm:$0xff]
  %v203 = vld [vmem:[%s0 + $0x4f0] sm:$0xff]
  %v204 = vld [vmem:[%s0 + $0x4f8] sm:$0xff]
  %v205 = vld [vmem:[%s0 + $0x500] sm:$0xff]
  %v206 = vld [vmem:[%s0 + $0x508] sm:$0xff]
  %v207 = vld [vmem:[%s0 + $0x510] sm:$0xff]
  %v208 = vld [vmem:[%s0 + $0x518] sm:$0xff]
  %v209 = vld [vmem:[%s0 + $0x520] sm:$0xff]
  %v210 = vld [vmem:[%s0 + $0x528] sm:$0xff]
  %v211 = vld [vmem:[%s0 + $0x530] sm:$0xff]
  %v212 = vld [vmem:[%s0 + $0x538] sm:$0xff]
  %v213 = vld [vmem:[%s0 + $0x540] sm:$0xff]
  %v214 = vld [vmem:[%s0 + $0x548] sm:$0xff]
  %v215 = vld [vmem:[%s0 + $0x550] sm:$0xff]
  %v216 = vld [vmem:[%s0 + $0x558] sm:$0xff]
  %v217 = vld [vmem:[%s0 + $0x560] sm:$0xff]
  %v218 = vld [vmem:[%s0 + $0x568] sm:$0xff]
  %v219 = vld [vmem:[%s0 + $0x570] sm:$0xff]
  %v220 = vld [vmem:[%s0 + $0x578] sm:$0xff]
  %v221 = vld [vmem:[%s0 + $0x580] sm:$0xff]
  %v222 = vld [vmem:[%s0 + $0x588] sm:$0xff]
  %v223 = vld [vmem:[%s0 + $0x590] sm:$0xff]
  %v224 = vld [vmem:[%s0 + $0x598] sm:$0xff]
  %v225 = vld [vmem:[%s0 + $0x5a0] sm:$0xff]
  %v226 = vld [vmem:[%s0 + $0x5a8] sm:$0xff]
  %v227 = vld [vmem:[%s0 + $0x5b0] sm:$0xff]
  %v228 = vld [vmem:[%s0 + $0x5b8] sm:$0xff]
  %v229 = vld [vmem:[%s0 + $0x5c0] sm:$0xff]
  %v230 = vld [vmem:[%s0 + $0x5c8] sm:$0xff]
  %v231 = vld [vmem:[%s0 + $0x5d0] sm:$0xff]
  %v232 = vld [vmem:[%s0 + $0x5d8] sm:$0xff]
  %v233 = vld [vmem:[%s0 + $0x5e0] sm:$0xff]
  %v234 = vld [vmem:[%s0 + $0x5e8] sm:$0xff]
  %v235 = vld [vmem:[%s0 + $0x5f0] sm:$0xff]
  %v236 = vld [vmem:[%s0 + $0x5f8] sm:$0xff]
  %v237 = vld [vmem:[%s2] sm:$0xf]
  %v238 = vld [vmem:[%s2 + $0x4] sm:$0xf]
  %v239 = vld [vmem:[%s2 + $0x8] sm:$0xf]
  %v240 = vld [vmem:[%s2 + $0xc] sm:$0xf]
  %v241 = vld [vmem:[%s2 + $0x10] sm:$0xf]
  %v242 = vld [vmem:[%s2 + $0x14] sm:$0xf]
  %v243 = vld [vmem:[%s2 + $0x18] sm:$0xf]
  %v244 = vld [vmem:[%s2 + $0x1c] sm:$0xf]
  %v245 = vld [vmem:[%s2 + $0x20] sm:$0xf]
  %v246 = vld [vmem:[%s2 + $0x24] sm:$0xf]
  %v247 = vld [vmem:[%s2 + $0x28] sm:$0xf]
  %v248 = vld [vmem:[%s2 + $0x2c] sm:$0xf]
  %v249 = vld [vmem:[%s2 + $0x30] sm:$0xf]
  %v250 = vld [vmem:[%s2 + $0x34] sm:$0xf]
  %v251 = vld [vmem:[%s2 + $0x38] sm:$0xf]
  %v252 = vld [vmem:[%s2 + $0x3c] sm:$0xf]
  %v253 = vld [vmem:[%s2 + $0x40] sm:$0xf]
  %v254 = vld [vmem:[%s2 + $0x44] sm:$0xf]
  %v255 = vld [vmem:[%s2 + $0x48] sm:$0xf]
  %v256 = vld [vmem:[%s2 + $0x4c] sm:$0xf]
  %v257 = vld [vmem:[%s2 + $0x50] sm:$0xf]
  %v258 = vld [vmem:[%s2 + $0x54] sm:$0xf]
  %v259 = vld [vmem:[%s2 + $0x58] sm:$0xf]
  %v260 = vld [vmem:[%s2 + $0x5c] sm:$0xf]
  %v261 = vld [vmem:[%s2 + $0x60] sm:$0xf]
  %v262 = vld [vmem:[%s2 + $0x64] sm:$0xf]
  %v263 = vld [vmem:[%s2 + $0x68] sm:$0xf]
  %v264 = vld [vmem:[%s2 + $0x6c] sm:$0xf]
  %v265 = vld [vmem:[%s2 + $0x70] sm:$0xf]
  %v266 = vld [vmem:[%s2 + $0x74] sm:$0xf]
  %v267 = vld [vmem:[%s2 + $0x78] sm:$0xf]
  %v268 = vld [vmem:[%s2 + $0x7c] sm:$0xf]
  %v269 = vld [vmem:[%s2 + $0x80] sm:$0xf]
  %v270 = vld [vmem:[%s2 + $0x84] sm:$0xf]
  %v271 = vld [vmem:[%s2 + $0x88] sm:$0xf]
  %v272 = vld [vmem:[%s2 + $0x8c] sm:$0xf]
  %v273 = vld [vmem:[%s2 + $0x90] sm:$0xf]
  %v274 = vld [vmem:[%s2 + $0x94] sm:$0xf]
  %v275 = vld [vmem:[%s2 + $0x98] sm:$0xf]
  %v276 = vld [vmem:[%s2 + $0x9c] sm:$0xf]
  %v277 = vld [vmem:[%s2 + $0xa0] sm:$0xf]
  %v278 = vld [vmem:[%s2 + $0xa4] sm:$0xf]
  %v279 = vld [vmem:[%s2 + $0xa8] sm:$0xf]
  %v280 = vld [vmem:[%s2 + $0xac] sm:$0xf]
  %v281 = vld [vmem:[%s2 + $0xb0] sm:$0xf]
  %v282 = vld [vmem:[%s2 + $0xb4] sm:$0xf]
  %v283 = vld [vmem:[%s2 + $0xb8] sm:$0xf]
  %v284 = vld [vmem:[%s2 + $0xbc] sm:$0xf]
  %v285 = vld [vmem:[%s2 + $0xc0] sm:$0xf]
  %v286 = vld [vmem:[%s2 + $0xc4] sm:$0xf]
  %v287 = vld [vmem:[%s2 + $0xc8] sm:$0xf]
  %v288 = vld [vmem:[%s2 + $0xcc] sm:$0xf]
  %v289 = vld [vmem:[%s2 + $0xd0] sm:$0xf]
  %v290 = vld [vmem:[%s2 + $0xd4] sm:$0xf]
  %v291 = vld [vmem:[%s2 + $0xd8] sm:$0xf]
  %v292 = vld [vmem:[%s2 + $0xdc] sm:$0xf]
  %v293 = vld [vmem:[%s2 + $0xe0] sm:$0xf]
  %v294 = vld [vmem:[%s2 + $0xe4] sm:$0xf]
  %v295 = vld [vmem:[%s2 + $0xe8] sm:$0xf]
  %v296 = vld [vmem:[%s2 + $0xec] sm:$0xf]
  %v297 = vld [vmem:[%s2 + $0xf0] sm:$0xf]
  %v298 = vld [vmem:[%s2 + $0xf4] sm:$0xf]
  %v299 = vld [vmem:[%s2 + $0xf8] sm:$0xf]
  %v300 = vld [vmem:[%s2 + $0xfc] sm:$0xf]
  %v301 = vld [vmem:[%s2 + $0x100] sm:$0xf]
  %v302 = vld [vmem:[%s2 + $0x104] sm:$0xf]
  %v303 = vld [vmem:[%s2 + $0x108] sm:$0xf]
  %v304 = vld [vmem:[%s2 + $0x10c] sm:$0xf]
  %v305 = vld [vmem:[%s2 + $0x110] sm:$0xf]
  %v306 = vld [vmem:[%s2 + $0x114] sm:$0xf]
  %v307 = vld [vmem:[%s2 + $0x118] sm:$0xf]
  %v308 = vld [vmem:[%s2 + $0x11c] sm:$0xf]
  %v309 = vld [vmem:[%s2 + $0x120] sm:$0xf]
  %v310 = vld [vmem:[%s2 + $0x124] sm:$0xf]
  %v311 = vld [vmem:[%s2 + $0x128] sm:$0xf]
  %v312 = vld [vmem:[%s2 + $0x12c] sm:$0xf]
  %v313 = vld [vmem:[%s2 + $0x130] sm:$0xf]
  %v314 = vld [vmem:[%s2 + $0x134] sm:$0xf]
  %v315 = vld [vmem:[%s2 + $0x138] sm:$0xf]
  %v316 = vld [vmem:[%s2 + $0x13c] sm:$0xf]
  %v317 = vld [vmem:[%s2 + $0x140] sm:$0xf]
  %v318 = vld [vmem:[%s2 + $0x144] sm:$0xf]
  %v319 = vld [vmem:[%s2 + $0x148] sm:$0xf]
  %v320 = vld [vmem:[%s2 + $0x14c] sm:$0xf]
  %v321 = vld [vmem:[%s2 + $0x150] sm:$0xf]
  %v322 = vld [vmem:[%s2 + $0x154] sm:$0xf]
  %v323 = vld [vmem:[%s2 + $0x158] sm:$0xf]
  %v324 = vld [vmem:[%s2 + $0x15c] sm:$0xf]
  %v325 = vld [vmem:[%s2 + $0x160] sm:$0xf]
  %v326 = vld [vmem:[%s2 + $0x164] sm:$0xf]
  %v327 = vld [vmem:[%s2 + $0x168] sm:$0xf]
  %v328 = vld [vmem:[%s2 + $0x16c] sm:$0xf]
  %v329 = vld [vmem:[%s2 + $0x170] sm:$0xf]
  %v330 = vld [vmem:[%s2 + $0x174] sm:$0xf]
  %v331 = vld [vmem:[%s2 + $0x178] sm:$0xf]
  %v332 = vld [vmem:[%s2 + $0x17c] sm:$0xf]
  %v333 = vld [vmem:[%s2 + $0x180] sm:$0xf]
  %v334 = vld [vmem:[%s2 + $0x184] sm:$0xf]
  %v335 = vld [vmem:[%s2 + $0x188] sm:$0xf]
  %v336 = vld [vmem:[%s2 + $0x18c] sm:$0xf]
  %v337 = vld [vmem:[%s2 + $0x190] sm:$0xf]
  %v338 = vld [vmem:[%s2 + $0x194] sm:$0xf]
  %v339 = vld [vmem:[%s2 + $0x198] sm:$0xf]
  %v340 = vld [vmem:[%s2 + $0x19c] sm:$0xf]
  %v341 = vld [vmem:[%s2 + $0x1a0] sm:$0xf]
  %v342 = vld [vmem:[%s2 + $0x1a4] sm:$0xf]
  %v343 = vld [vmem:[%s2 + $0x1a8] sm:$0xf]
  %v344 = vld [vmem:[%s2 + $0x1ac] sm:$0xf]
  %v345 = vld [vmem:[%s2 + $0x1b0] sm:$0xf]
  %v346 = vld [vmem:[%s2 + $0x1b4] sm:$0xf]
  %v347 = vld [vmem:[%s2 + $0x1b8] sm:$0xf]
  %v348 = vld [vmem:[%s2 + $0x1bc] sm:$0xf]
  %v349 = vld [vmem:[%s2 + $0x1c0] sm:$0xf]
  %v350 = vld [vmem:[%s2 + $0x1c4] sm:$0xf]
  %v351 = vld [vmem:[%s2 + $0x1c8] sm:$0xf]
  %v352 = vld [vmem:[%s2 + $0x1cc] sm:$0xf]
  %v353 = vld [vmem:[%s2 + $0x1d0] sm:$0xf]
  %v354 = vld [vmem:[%s2 + $0x1d4] sm:$0xf]
  %v355 = vld [vmem:[%s2 + $0x1d8] sm:$0xf]
  %v356 = vld [vmem:[%s2 + $0x1dc] sm:$0xf]
  %v357 = vld [vmem:[%s2 + $0x1e0] sm:$0xf]
  %v358 = vld [vmem:[%s2 + $0x1e4] sm:$0xf]
  %v359 = vld [vmem:[%s2 + $0x1e8] sm:$0xf]
  %v360 = vld [vmem:[%s2 + $0x1ec] sm:$0xf]
  %v361 = vld [vmem:[%s2 + $0x1f0] sm:$0xf]
  %v362 = vld [vmem:[%s2 + $0x1f4] sm:$0xf]
  %v363 = vld [vmem:[%s2 + $0x1f8] sm:$0xf]
  %v364 = vld [vmem:[%s2 + $0x1fc] sm:$0xf]
  %v365 = vld [vmem:[%s3] sm:$0x1]
  %v367 = vlaneseq
  %v368 = vshrl.u32 %v367, 7
  %v369 = vsub.s32 0, %v368
  %v370 = vrot.slane %v365, %v369
  %v564 = vunpack.c.l.b16 %v45
  %v565 = vunpack.c.h.b16 %v45
  %v566 = vunpack.c.l.b16 %v46
  %v567 = vunpack.c.h.b16 %v46
  %v568 = vunpack.c.l.b16 %v47
  %v569 = vunpack.c.h.b16 %v47
  %v570 = vunpack.c.l.b16 %v48
  %v571 = vunpack.c.h.b16 %v48
  %v572 = vunpack.c.l.b16 %v49
  %v573 = vunpack.c.h.b16 %v49
  %v574 = vunpack.c.l.b16 %v50
  %v575 = vunpack.c.h.b16 %v50
  %v576 = vunpack.c.l.b16 %v51
  %v577 = vunpack.c.h.b16 %v51
  %v578 = vunpack.c.l.b16 %v52
  %v579 = vunpack.c.h.b16 %v52
  %v580 = vunpack.c.l.b16 %v53
  %v581 = vunpack.c.h.b16 %v53
  %v582 = vunpack.c.l.b16 %v54
  %v583 = vunpack.c.h.b16 %v54
  %v584 = vunpack.c.l.b16 %v55
  %v585 = vunpack.c.h.b16 %v55
  %v586 = vunpack.c.l.b16 %v56
  %v587 = vunpack.c.h.b16 %v56
  %v588 = vunpack.c.l.b16 %v57
  %v589 = vunpack.c.h.b16 %v57
  %v590 = vunpack.c.l.b16 %v58
  %v591 = vunpack.c.h.b16 %v58
  %v592 = vunpack.c.l.b16 %v59
  %v593 = vunpack.c.h.b16 %v59
  %v594 = vunpack.c.l.b16 %v60
  %v595 = vunpack.c.h.b16 %v60
  %v596 = vunpack.c.l.b16 %v61
  %v597 = vunpack.c.h.b16 %v61
  %v598 = vunpack.c.l.b16 %v62
  %v599 = vunpack.c.h.b16 %v62
  %v600 = vunpack.c.l.b16 %v63
  %v601 = vunpack.c.h.b16 %v63
  %v602 = vunpack.c.l.b16 %v64
  %v603 = vunpack.c.h.b16 %v64
  %v604 = vunpack.c.l.b16 %v65
  %v605 = vunpack.c.h.b16 %v65
  %v606 = vunpack.c.l.b16 %v66
  %v607 = vunpack.c.h.b16 %v66
  %v608 = vunpack.c.l.b16 %v67
  %v609 = vunpack.c.h.b16 %v67
  %v610 = vunpack.c.l.b16 %v68
  %v611 = vunpack.c.h.b16 %v68
  %v612 = vunpack.c.l.b16 %v69
  %v613 = vunpack.c.h.b16 %v69
  %v614 = vunpack.c.l.b16 %v70
  %v615 = vunpack.c.h.b16 %v70
  %v616 = vunpack.c.l.b16 %v71
  %v617 = vunpack.c.h.b16 %v71
  %v618 = vunpack.c.l.b16 %v72
  %v619 = vunpack.c.h.b16 %v72
  %v620 = vunpack.c.l.b16 %v73
  %v621 = vunpack.c.h.b16 %v73
  %v622 = vunpack.c.l.b16 %v74
  %v623 = vunpack.c.h.b16 %v74
  %v624 = vunpack.c.l.b16 %v75
  %v625 = vunpack.c.h.b16 %v75
  %v626 = vunpack.c.l.b16 %v76
  %v627 = vunpack.c.h.b16 %v76
  %v628 = vunpack.c.l.b16 %v77
  %v629 = vunpack.c.h.b16 %v77
  %v630 = vunpack.c.l.b16 %v78
  %v631 = vunpack.c.h.b16 %v78
  %v632 = vunpack.c.l.b16 %v79
  %v633 = vunpack.c.h.b16 %v79
  %v634 = vunpack.c.l.b16 %v80
  %v635 = vunpack.c.h.b16 %v80
  %v636 = vunpack.c.l.b16 %v81
  %v637 = vunpack.c.h.b16 %v81
  %v638 = vunpack.c.l.b16 %v82
  %v639 = vunpack.c.h.b16 %v82
  %v640 = vunpack.c.l.b16 %v83
  %v641 = vunpack.c.h.b16 %v83
  %v642 = vunpack.c.l.b16 %v84
  %v643 = vunpack.c.h.b16 %v84
  %v644 = vunpack.c.l.b16 %v85
  %v645 = vunpack.c.h.b16 %v85
  %v646 = vunpack.c.l.b16 %v86
  %v647 = vunpack.c.h.b16 %v86
  %v648 = vunpack.c.l.b16 %v87
  %v649 = vunpack.c.h.b16 %v87
  %v650 = vunpack.c.l.b16 %v88
  %v651 = vunpack.c.h.b16 %v88
  %v652 = vunpack.c.l.b16 %v89
  %v653 = vunpack.c.h.b16 %v89
  %v654 = vunpack.c.l.b16 %v90
  %v655 = vunpack.c.h.b16 %v90
  %v656 = vunpack.c.l.b16 %v91
  %v657 = vunpack.c.h.b16 %v91
  %v658 = vunpack.c.l.b16 %v92
  %v659 = vunpack.c.h.b16 %v92
  %v660 = vunpack.c.l.b16 %v93
  %v661 = vunpack.c.h.b16 %v93
  %v662 = vunpack.c.l.b16 %v94
  %v663 = vunpack.c.h.b16 %v94
  %v664 = vunpack.c.l.b16 %v95
  %v665 = vunpack.c.h.b16 %v95
  %v666 = vunpack.c.l.b16 %v96
  %v667 = vunpack.c.h.b16 %v96
  %v668 = vunpack.c.l.b16 %v97
  %v669 = vunpack.c.h.b16 %v97
  %v670 = vunpack.c.l.b16 %v98
  %v671 = vunpack.c.h.b16 %v98
  %v672 = vunpack.c.l.b16 %v99
  %v673 = vunpack.c.h.b16 %v99
  %v674 = vunpack.c.l.b16 %v100
  %v675 = vunpack.c.h.b16 %v100
  %v676 = vunpack.c.l.b16 %v101
  %v677 = vunpack.c.h.b16 %v101
  %v678 = vunpack.c.l.b16 %v102
  %v679 = vunpack.c.h.b16 %v102
  %v680 = vunpack.c.l.b16 %v103
  %v681 = vunpack.c.h.b16 %v103
  %v682 = vunpack.c.l.b16 %v104
  %v683 = vunpack.c.h.b16 %v104
  %v684 = vunpack.c.l.b16 %v105
  %v685 = vunpack.c.h.b16 %v105
  %v686 = vunpack.c.l.b16 %v106
  %v687 = vunpack.c.h.b16 %v106
  %v688 = vunpack.c.l.b16 %v107
  %v689 = vunpack.c.h.b16 %v107
  %v690 = vunpack.c.l.b16 %v108
  %v691 = vunpack.c.h.b16 %v108
  %v692 = vunpack.c.l.b16 %v109
  %v693 = vunpack.c.h.b16 %v109
  %v694 = vunpack.c.l.b16 %v110
  %v695 = vunpack.c.h.b16 %v110
  %v696 = vunpack.c.l.b16 %v111
  %v697 = vunpack.c.h.b16 %v111
  %v698 = vunpack.c.l.b16 %v112
  %v699 = vunpack.c.h.b16 %v112
  %v700 = vunpack.c.l.b16 %v113
  %v701 = vunpack.c.h.b16 %v113
  %v702 = vunpack.c.l.b16 %v114
  %v703 = vunpack.c.h.b16 %v114
  %v704 = vunpack.c.l.b16 %v115
  %v705 = vunpack.c.h.b16 %v115
  %v706 = vunpack.c.l.b16 %v116
  %v707 = vunpack.c.h.b16 %v116
  %v708 = vunpack.c.l.b16 %v117
  %v709 = vunpack.c.h.b16 %v117
  %v710 = vunpack.c.l.b16 %v118
  %v711 = vunpack.c.h.b16 %v118
  %v712 = vunpack.c.l.b16 %v119
  %v713 = vunpack.c.h.b16 %v119
  %v714 = vunpack.c.l.b16 %v120
  %v715 = vunpack.c.h.b16 %v120
  %v716 = vunpack.c.l.b16 %v121
  %v717 = vunpack.c.h.b16 %v121
  %v718 = vunpack.c.l.b16 %v122
  %v719 = vunpack.c.h.b16 %v122
  %v720 = vunpack.c.l.b16 %v123
  %v721 = vunpack.c.h.b16 %v123
  %v722 = vunpack.c.l.b16 %v124
  %v723 = vunpack.c.h.b16 %v124
  %v724 = vunpack.c.l.b16 %v125
  %v725 = vunpack.c.h.b16 %v125
  %v726 = vunpack.c.l.b16 %v126
  %v727 = vunpack.c.h.b16 %v126
  %v728 = vunpack.c.l.b16 %v127
  %v729 = vunpack.c.h.b16 %v127
  %v730 = vunpack.c.l.b16 %v128
  %v731 = vunpack.c.h.b16 %v128
  %v732 = vunpack.c.l.b16 %v129
  %v733 = vunpack.c.h.b16 %v129
  %v734 = vunpack.c.l.b16 %v130
  %v735 = vunpack.c.h.b16 %v130
  %v736 = vunpack.c.l.b16 %v131
  %v737 = vunpack.c.h.b16 %v131
  %v738 = vunpack.c.l.b16 %v132
  %v739 = vunpack.c.h.b16 %v132
  %v740 = vunpack.c.l.b16 %v133
  %v741 = vunpack.c.h.b16 %v133
  %v742 = vunpack.c.l.b16 %v134
  %v743 = vunpack.c.h.b16 %v134
  %v744 = vunpack.c.l.b16 %v135
  %v745 = vunpack.c.h.b16 %v135
  %v746 = vunpack.c.l.b16 %v136
  %v747 = vunpack.c.h.b16 %v136
  %v748 = vunpack.c.l.b16 %v137
  %v749 = vunpack.c.h.b16 %v137
  %v750 = vunpack.c.l.b16 %v138
  %v751 = vunpack.c.h.b16 %v138
  %v752 = vunpack.c.l.b16 %v139
  %v753 = vunpack.c.h.b16 %v139
  %v754 = vunpack.c.l.b16 %v140
  %v755 = vunpack.c.h.b16 %v140
  %v756 = vunpack.c.l.b16 %v141
  %v757 = vunpack.c.h.b16 %v141
  %v758 = vunpack.c.l.b16 %v142
  %v759 = vunpack.c.h.b16 %v142
  %v760 = vunpack.c.l.b16 %v143
  %v761 = vunpack.c.h.b16 %v143
  %v762 = vunpack.c.l.b16 %v144
  %v763 = vunpack.c.h.b16 %v144
  %v764 = vunpack.c.l.b16 %v145
  %v765 = vunpack.c.h.b16 %v145
  %v766 = vunpack.c.l.b16 %v146
  %v767 = vunpack.c.h.b16 %v146
  %v768 = vunpack.c.l.b16 %v147
  %v769 = vunpack.c.h.b16 %v147
  %v770 = vunpack.c.l.b16 %v148
  %v771 = vunpack.c.h.b16 %v148
  %v772 = vunpack.c.l.b16 %v149
  %v773 = vunpack.c.h.b16 %v149
  %v774 = vunpack.c.l.b16 %v150
  %v775 = vunpack.c.h.b16 %v150
  %v776 = vunpack.c.l.b16 %v151
  %v777 = vunpack.c.h.b16 %v151
  %v778 = vunpack.c.l.b16 %v152
  %v779 = vunpack.c.h.b16 %v152
  %v780 = vunpack.c.l.b16 %v153
  %v781 = vunpack.c.h.b16 %v153
  %v782 = vunpack.c.l.b16 %v154
  %v783 = vunpack.c.h.b16 %v154
  %v784 = vunpack.c.l.b16 %v155
  %v785 = vunpack.c.h.b16 %v155
  %v786 = vunpack.c.l.b16 %v156
  %v787 = vunpack.c.h.b16 %v156
  %v788 = vunpack.c.l.b16 %v157
  %v789 = vunpack.c.h.b16 %v157
  %v790 = vunpack.c.l.b16 %v158
  %v791 = vunpack.c.h.b16 %v158
  %v792 = vunpack.c.l.b16 %v159
  %v793 = vunpack.c.h.b16 %v159
  %v794 = vunpack.c.l.b16 %v160
  %v795 = vunpack.c.h.b16 %v160
  %v796 = vunpack.c.l.b16 %v161
  %v797 = vunpack.c.h.b16 %v161
  %v798 = vunpack.c.l.b16 %v162
  %v799 = vunpack.c.h.b16 %v162
  %v800 = vunpack.c.l.b16 %v163
  %v801 = vunpack.c.h.b16 %v163
  %v802 = vunpack.c.l.b16 %v164
  %v803 = vunpack.c.h.b16 %v164
  %v804 = vunpack.c.l.b16 %v165
  %v805 = vunpack.c.h.b16 %v165
  %v806 = vunpack.c.l.b16 %v166
  %v807 = vunpack.c.h.b16 %v166
  %v808 = vunpack.c.l.b16 %v167
  %v809 = vunpack.c.h.b16 %v167
  %v810 = vunpack.c.l.b16 %v168
  %v811 = vunpack.c.h.b16 %v168
  %v812 = vunpack.c.l.b16 %v169
  %v813 = vunpack.c.h.b16 %v169
  %v814 = vunpack.c.l.b16 %v170
  %v815 = vunpack.c.h.b16 %v170
  %v816 = vunpack.c.l.b16 %v171
  %v817 = vunpack.c.h.b16 %v171
  %v818 = vunpack.c.l.b16 %v172
  %v819 = vunpack.c.h.b16 %v172
  %v820 = vunpack.c.l.b16 %v173
  %v821 = vunpack.c.h.b16 %v173
  %v822 = vunpack.c.l.b16 %v174
  %v823 = vunpack.c.h.b16 %v174
  %v824 = vunpack.c.l.b16 %v175
  %v825 = vunpack.c.h.b16 %v175
  %v826 = vunpack.c.l.b16 %v176
  %v827 = vunpack.c.h.b16 %v176
  %v828 = vunpack.c.l.b16 %v177
  %v829 = vunpack.c.h.b16 %v177
  %v830 = vunpack.c.l.b16 %v178
  %v831 = vunpack.c.h.b16 %v178
  %v832 = vunpack.c.l.b16 %v179
  %v833 = vunpack.c.h.b16 %v179
  %v834 = vunpack.c.l.b16 %v180
  %v835 = vunpack.c.h.b16 %v180
  %v836 = vunpack.c.l.b16 %v181
  %v837 = vunpack.c.h.b16 %v181
  %v838 = vunpack.c.l.b16 %v182
  %v839 = vunpack.c.h.b16 %v182
  %v840 = vunpack.c.l.b16 %v183
  %v841 = vunpack.c.h.b16 %v183
  %v842 = vunpack.c.l.b16 %v184
  %v843 = vunpack.c.h.b16 %v184
  %v844 = vunpack.c.l.b16 %v185
  %v845 = vunpack.c.h.b16 %v185
  %v846 = vunpack.c.l.b16 %v186
  %v847 = vunpack.c.h.b16 %v186
  %v848 = vunpack.c.l.b16 %v187
  %v849 = vunpack.c.h.b16 %v187
  %v850 = vunpack.c.l.b16 %v188
  %v851 = vunpack.c.h.b16 %v188
  %v852 = vunpack.c.l.b16 %v189
  %v853 = vunpack.c.h.b16 %v189
  %v854 = vunpack.c.l.b16 %v190
  %v855 = vunpack.c.h.b16 %v190
  %v856 = vunpack.c.l.b16 %v191
  %v857 = vunpack.c.h.b16 %v191
  %v858 = vunpack.c.l.b16 %v192
  %v859 = vunpack.c.h.b16 %v192
  %v860 = vunpack.c.l.b16 %v193
  %v861 = vunpack.c.h.b16 %v193
  %v862 = vunpack.c.l.b16 %v194
  %v863 = vunpack.c.h.b16 %v194
  %v864 = vunpack.c.l.b16 %v195
  %v865 = vunpack.c.h.b16 %v195
  %v866 = vunpack.c.l.b16 %v196
  %v867 = vunpack.c.h.b16 %v196
  %v868 = vunpack.c.l.b16 %v197
  %v869 = vunpack.c.h.b16 %v197
  %v870 = vunpack.c.l.b16 %v198
  %v871 = vunpack.c.h.b16 %v198
  %v872 = vunpack.c.l.b16 %v199
  %v873 = vunpack.c.h.b16 %v199
  %v874 = vunpack.c.l.b16 %v200
  %v875 = vunpack.c.h.b16 %v200
  %v876 = vunpack.c.l.b16 %v201
  %v877 = vunpack.c.h.b16 %v201
  %v878 = vunpack.c.l.b16 %v202
  %v879 = vunpack.c.h.b16 %v202
  %v880 = vunpack.c.l.b16 %v203
  %v881 = vunpack.c.h.b16 %v203
  %v882 = vunpack.c.l.b16 %v204
  %v883 = vunpack.c.h.b16 %v204
  %v884 = vunpack.c.l.b16 %v205
  %v885 = vunpack.c.h.b16 %v205
  %v886 = vunpack.c.l.b16 %v206
  %v887 = vunpack.c.h.b16 %v206
  %v888 = vunpack.c.l.b16 %v207
  %v889 = vunpack.c.h.b16 %v207
  %v890 = vunpack.c.l.b16 %v208
  %v891 = vunpack.c.h.b16 %v208
  %v892 = vunpack.c.l.b16 %v209
  %v893 = vunpack.c.h.b16 %v209
  %v894 = vunpack.c.l.b16 %v210
  %v895 = vunpack.c.h.b16 %v210
  %v896 = vunpack.c.l.b16 %v211
  %v897 = vunpack.c.h.b16 %v211
  %v898 = vunpack.c.l.b16 %v212
  %v899 = vunpack.c.h.b16 %v212
  %v900 = vunpack.c.l.b16 %v213
  %v901 = vunpack.c.h.b16 %v213
  %v902 = vunpack.c.l.b16 %v214
  %v903 = vunpack.c.h.b16 %v214
  %v904 = vunpack.c.l.b16 %v215
  %v905 = vunpack.c.h.b16 %v215
  %v906 = vunpack.c.l.b16 %v216
  %v907 = vunpack.c.h.b16 %v216
  %v908 = vunpack.c.l.b16 %v217
  %v909 = vunpack.c.h.b16 %v217
  %v910 = vunpack.c.l.b16 %v218
  %v911 = vunpack.c.h.b16 %v218
  %v912 = vunpack.c.l.b16 %v219
  %v913 = vunpack.c.h.b16 %v219
  %v914 = vunpack.c.l.b16 %v220
  %v915 = vunpack.c.h.b16 %v220
  %v916 = vunpack.c.l.b16 %v221
  %v917 = vunpack.c.h.b16 %v221
  %v918 = vunpack.c.l.b16 %v222
  %v919 = vunpack.c.h.b16 %v222
  %v920 = vunpack.c.l.b16 %v223
  %v921 = vunpack.c.h.b16 %v223
  %v922 = vunpack.c.l.b16 %v224
  %v923 = vunpack.c.h.b16 %v224
  %v924 = vunpack.c.l.b16 %v225
  %v925 = vunpack.c.h.b16 %v225
  %v926 = vunpack.c.l.b16 %v226
  %v927 = vunpack.c.h.b16 %v226
  %v928 = vunpack.c.l.b16 %v227
  %v929 = vunpack.c.h.b16 %v227
  %v930 = vunpack.c.l.b16 %v228
  %v931 = vunpack.c.h.b16 %v228
  %v932 = vunpack.c.l.b16 %v229
  %v933 = vunpack.c.h.b16 %v229
  %v934 = vunpack.c.l.b16 %v230
  %v935 = vunpack.c.h.b16 %v230
  %v936 = vunpack.c.l.b16 %v231
  %v937 = vunpack.c.h.b16 %v231
  %v938 = vunpack.c.l.b16 %v232
  %v939 = vunpack.c.h.b16 %v232
  %v940 = vunpack.c.l.b16 %v233
  %v941 = vunpack.c.h.b16 %v233
  %v942 = vunpack.c.l.b16 %v234
  %v943 = vunpack.c.h.b16 %v234
  %v944 = vunpack.c.l.b16 %v235
  %v945 = vunpack.c.h.b16 %v235
  %v946 = vunpack.c.l.b16 %v236
  %v947 = vunpack.c.h.b16 %v236
  %v948 = vpack.c.b16 %v572, %v564
  %v949 = vpack.c.b16 %v573, %v565
  %v950 = vpack.c.b16 %v574, %v566
  %v951 = vpack.c.b16 %v575, %v567
  %v952 = vpack.c.b16 %v576, %v568
  %v953 = vpack.c.b16 %v577, %v569
  %v954 = vpack.c.b16 %v578, %v570
  %v955 = vpack.c.b16 %v579, %v571
  %v956 = vpack.c.b16 %v588, %v580
  %v957 = vpack.c.b16 %v589, %v581
  %v958 = vpack.c.b16 %v590, %v582
  %v959 = vpack.c.b16 %v591, %v583
  %v960 = vpack.c.b16 %v592, %v584
  %v961 = vpack.c.b16 %v593, %v585
  %v962 = vpack.c.b16 %v594, %v586
  %v963 = vpack.c.b16 %v595, %v587
  %v964 = vpack.c.b16 %v604, %v596
  %v965 = vpack.c.b16 %v605, %v597
  %v966 = vpack.c.b16 %v606, %v598
  %v967 = vpack.c.b16 %v607, %v599
  %v968 = vpack.c.b16 %v608, %v600
  %v969 = vpack.c.b16 %v609, %v601
  %v970 = vpack.c.b16 %v610, %v602
  %v971 = vpack.c.b16 %v611, %v603
  %v972 = vpack.c.b16 %v620, %v612
  %v973 = vpack.c.b16 %v621, %v613
  %v974 = vpack.c.b16 %v622, %v614
  %v975 = vpack.c.b16 %v623, %v615
  %v976 = vpack.c.b16 %v624, %v616
  %v977 = vpack.c.b16 %v625, %v617
  %v978 = vpack.c.b16 %v626, %v618
  %v979 = vpack.c.b16 %v627, %v619
  %v980 = vpack.c.b16 %v636, %v628
  %v981 = vpack.c.b16 %v637, %v629
  %v982 = vpack.c.b16 %v638, %v630
  %v983 = vpack.c.b16 %v639, %v631
  %v984 = vpack.c.b16 %v640, %v632
  %v985 = vpack.c.b16 %v641, %v633
  %v986 = vpack.c.b16 %v642, %v634
  %v987 = vpack.c.b16 %v643, %v635
  %v988 = vpack.c.b16 %v652, %v644
  %v989 = vpack.c.b16 %v653, %v645
  %v990 = vpack.c.b16 %v654, %v646
  %v991 = vpack.c.b16 %v655, %v647
  %v992 = vpack.c.b16 %v656, %v648
  %v993 = vpack.c.b16 %v657, %v649
  %v994 = vpack.c.b16 %v658, %v650
  %v995 = vpack.c.b16 %v659, %v651
  %v996 = vpack.c.b16 %v668, %v660
  %v997 = vpack.c.b16 %v669, %v661
  %v998 = vpack.c.b16 %v670, %v662
  %v999 = vpack.c.b16 %v671, %v663
  %v1000 = vpack.c.b16 %v672, %v664
  %v1001 = vpack.c.b16 %v673, %v665
  %v1002 = vpack.c.b16 %v674, %v666
  %v1003 = vpack.c.b16 %v675, %v667
  %v1004 = vpack.c.b16 %v684, %v676
  %v1005 = vpack.c.b16 %v685, %v677
  %v1006 = vpack.c.b16 %v686, %v678
  %v1007 = vpack.c.b16 %v687, %v679
  %v1008 = vpack.c.b16 %v688, %v680
  %v1009 = vpack.c.b16 %v689, %v681
  %v1010 = vpack.c.b16 %v690, %v682
  %v1011 = vpack.c.b16 %v691, %v683
  %v1012 = vpack.c.b16 %v700, %v692
  %v1013 = vpack.c.b16 %v701, %v693
  %v1014 = vpack.c.b16 %v702, %v694
  %v1015 = vpack.c.b16 %v703, %v695
  %v1016 = vpack.c.b16 %v704, %v696
  %v1017 = vpack.c.b16 %v705, %v697
  %v1018 = vpack.c.b16 %v706, %v698
  %v1019 = vpack.c.b16 %v707, %v699
  %v1020 = vpack.c.b16 %v716, %v708
  %v1021 = vpack.c.b16 %v717, %v709
  %v1022 = vpack.c.b16 %v718, %v710
  %v1023 = vpack.c.b16 %v719, %v711
  %v1024 = vpack.c.b16 %v720, %v712
  %v1025 = vpack.c.b16 %v721, %v713
  %v1026 = vpack.c.b16 %v722, %v714
  %v1027 = vpack.c.b16 %v723, %v715
  %v1028 = vpack.c.b16 %v732, %v724
  %v1029 = vpack.c.b16 %v733, %v725
  %v1030 = vpack.c.b16 %v734, %v726
  %v1031 = vpack.c.b16 %v735, %v727
  %v1032 = vpack.c.b16 %v736, %v728
  %v1033 = vpack.c.b16 %v737, %v729
  %v1034 = vpack.c.b16 %v738, %v730
  %v1035 = vpack.c.b16 %v739, %v731
  %v1036 = vpack.c.b16 %v748, %v740
  %v1037 = vpack.c.b16 %v749, %v741
  %v1038 = vpack.c.b16 %v750, %v742
  %v1039 = vpack.c.b16 %v751, %v743
  %v1040 = vpack.c.b16 %v752, %v744
  %v1041 = vpack.c.b16 %v753, %v745
  %v1042 = vpack.c.b16 %v754, %v746
  %v1043 = vpack.c.b16 %v755, %v747
  %v1044 = vpack.c.b16 %v764, %v756
  %v1045 = vpack.c.b16 %v765, %v757
  %v1046 = vpack.c.b16 %v766, %v758
  %v1047 = vpack.c.b16 %v767, %v759
  %v1048 = vpack.c.b16 %v768, %v760
  %v1049 = vpack.c.b16 %v769, %v761
  %v1050 = vpack.c.b16 %v770, %v762
  %v1051 = vpack.c.b16 %v771, %v763
  %v1052 = vpack.c.b16 %v780, %v772
  %v1053 = vpack.c.b16 %v781, %v773
  %v1054 = vpack.c.b16 %v782, %v774
  %v1055 = vpack.c.b16 %v783, %v775
  %v1056 = vpack.c.b16 %v784, %v776
  %v1057 = vpack.c.b16 %v785, %v777
  %v1058 = vpack.c.b16 %v786, %v778
  %v1059 = vpack.c.b16 %v787, %v779
  %v1060 = vpack.c.b16 %v796, %v788
  %v1061 = vpack.c.b16 %v797, %v789
  %v1062 = vpack.c.b16 %v798, %v790
  %v1063 = vpack.c.b16 %v799, %v791
  %v1064 = vpack.c.b16 %v800, %v792
  %v1065 = vpack.c.b16 %v801, %v793
  %v1066 = vpack.c.b16 %v802, %v794
  %v1067 = vpack.c.b16 %v803, %v795
  %v1068 = vpack.c.b16 %v812, %v804
  %v1069 = vpack.c.b16 %v813, %v805
  %v1070 = vpack.c.b16 %v814, %v806
  %v1071 = vpack.c.b16 %v815, %v807
  %v1072 = vpack.c.b16 %v816, %v808
  %v1073 = vpack.c.b16 %v817, %v809
  %v1074 = vpack.c.b16 %v818, %v810
  %v1075 = vpack.c.b16 %v819, %v811
  %v1076 = vpack.c.b16 %v828, %v820
  %v1077 = vpack.c.b16 %v829, %v821
  %v1078 = vpack.c.b16 %v830, %v822
  %v1079 = vpack.c.b16 %v831, %v823
  %v1080 = vpack.c.b16 %v832, %v824
  %v1081 = vpack.c.b16 %v833, %v825
  %v1082 = vpack.c.b16 %v834, %v826
  %v1083 = vpack.c.b16 %v835, %v827
  %v1084 = vpack.c.b16 %v844, %v836
  %v1085 = vpack.c.b16 %v845, %v837
  %v1086 = vpack.c.b16 %v846, %v838
  %v1087 = vpack.c.b16 %v847, %v839
  %v1088 = vpack.c.b16 %v848, %v840
  %v1089 = vpack.c.b16 %v849, %v841
  %v1090 = vpack.c.b16 %v850, %v842
  %v1091 = vpack.c.b16 %v851, %v843
  %v1092 = vpack.c.b16 %v860, %v852
  %v1093 = vpack.c.b16 %v861, %v853
  %v1094 = vpack.c.b16 %v862, %v854
  %v1095 = vpack.c.b16 %v863, %v855
  %v1096 = vpack.c.b16 %v864, %v856
  %v1097 = vpack.c.b16 %v865, %v857
  %v1098 = vpack.c.b16 %v866, %v858
  %v1099 = vpack.c.b16 %v867, %v859
  %v1100 = vpack.c.b16 %v876, %v868
  %v1101 = vpack.c.b16 %v877, %v869
  %v1102 = vpack.c.b16 %v878, %v870
  %v1103 = vpack.c.b16 %v879, %v871
  %v1104 = vpack.c.b16 %v880, %v872
  %v1105 = vpack.c.b16 %v881, %v873
  %v1106 = vpack.c.b16 %v882, %v874
  %v1107 = vpack.c.b16 %v883, %v875
  %v1108 = vpack.c.b16 %v892, %v884
  %v1109 = vpack.c.b16 %v893, %v885
  %v1110 = vpack.c.b16 %v894, %v886
  %v1111 = vpack.c.b16 %v895, %v887
  %v1112 = vpack.c.b16 %v896, %v888
  %v1113 = vpack.c.b16 %v897, %v889
  %v1114 = vpack.c.b16 %v898, %v890
  %v1115 = vpack.c.b16 %v899, %v891
  %v1116 = vpack.c.b16 %v908, %v900
  %v1117 = vpack.c.b16 %v909, %v901
  %v1118 = vpack.c.b16 %v910, %v902
  %v1119 = vpack.c.b16 %v911, %v903
  %v1120 = vpack.c.b16 %v912, %v904
  %v1121 = vpack.c.b16 %v913, %v905
  %v1122 = vpack.c.b16 %v914, %v906
  %v1123 = vpack.c.b16 %v915, %v907
  %v1124 = vpack.c.b16 %v924, %v916
  %v1125 = vpack.c.b16 %v925, %v917
  %v1126 = vpack.c.b16 %v926, %v918
  %v1127 = vpack.c.b16 %v927, %v919
  %v1128 = vpack.c.b16 %v928, %v920
  %v1129 = vpack.c.b16 %v929, %v921
  %v1130 = vpack.c.b16 %v930, %v922
  %v1131 = vpack.c.b16 %v931, %v923
  %v1132 = vpack.c.b16 %v940, %v932
  %v1133 = vpack.c.b16 %v941, %v933
  %v1134 = vpack.c.b16 %v942, %v934
  %v1135 = vpack.c.b16 %v943, %v935
  %v1136 = vpack.c.b16 %v944, %v936
  %v1137 = vpack.c.b16 %v945, %v937
  %v1138 = vpack.c.b16 %v946, %v938
  %v1139 = vpack.c.b16 %v947, %v939
  %v1460 = vunpack.c.l.b16 %v237
  %v1461 = vunpack.c.l.b16 %v238
  %v1462 = vunpack.c.l.b16 %v239
  %v1463 = vunpack.c.l.b16 %v240
  %v1464 = vunpack.c.l.b16 %v241
  %v1465 = vunpack.c.l.b16 %v242
  %v1466 = vunpack.c.l.b16 %v243
  %v1467 = vunpack.c.l.b16 %v244
  %v1468 = vunpack.c.l.b16 %v245
  %v1469 = vunpack.c.l.b16 %v246
  %v1470 = vunpack.c.l.b16 %v247
  %v1471 = vunpack.c.l.b16 %v248
  %v1472 = vunpack.c.l.b16 %v249
  %v1473 = vunpack.c.l.b16 %v250
  %v1474 = vunpack.c.l.b16 %v251
  %v1475 = vunpack.c.l.b16 %v252
  %v1476 = vunpack.c.l.b16 %v253
  %v1477 = vunpack.c.l.b16 %v254
  %v1478 = vunpack.c.l.b16 %v255
  %v1479 = vunpack.c.l.b16 %v256
  %v1480 = vunpack.c.l.b16 %v257
  %v1481 = vunpack.c.l.b16 %v258
  %v1482 = vunpack.c.l.b16 %v259
  %v1483 = vunpack.c.l.b16 %v260
  %v1484 = vunpack.c.l.b16 %v261
  %v1485 = vunpack.c.l.b16 %v262
  %v1486 = vunpack.c.l.b16 %v263
  %v1487 = vunpack.c.l.b16 %v264
  %v1488 = vunpack.c.l.b16 %v265
  %v1489 = vunpack.c.l.b16 %v266
  %v1490 = vunpack.c.l.b16 %v267
  %v1491 = vunpack.c.l.b16 %v268
  %v1492 = vunpack.c.l.b16 %v269
  %v1493 = vunpack.c.l.b16 %v270
  %v1494 = vunpack.c.l.b16 %v271
  %v1495 = vunpack.c.l.b16 %v272
  %v1496 = vunpack.c.l.b16 %v273
  %v1497 = vunpack.c.l.b16 %v274
  %v1498 = vunpack.c.l.b16 %v275
  %v1499 = vunpack.c.l.b16 %v276
  %v1500 = vunpack.c.l.b16 %v277
  %v1501 = vunpack.c.l.b16 %v278
  %v1502 = vunpack.c.l.b16 %v279
  %v1503 = vunpack.c.l.b16 %v280
  %v1504 = vunpack.c.l.b16 %v281
  %v1505 = vunpack.c.l.b16 %v282
  %v1506 = vunpack.c.l.b16 %v283
  %v1507 = vunpack.c.l.b16 %v284
  %v1508 = vunpack.c.l.b16 %v285
  %v1509 = vunpack.c.l.b16 %v286
  %v1510 = vunpack.c.l.b16 %v287
  %v1511 = vunpack.c.l.b16 %v288
  %v1512 = vunpack.c.l.b16 %v289
  %v1513 = vunpack.c.l.b16 %v290
  %v1514 = vunpack.c.l.b16 %v291
  %v1515 = vunpack.c.l.b16 %v292
  %v1516 = vunpack.c.l.b16 %v293
  %v1517 = vunpack.c.l.b16 %v294
  %v1518 = vunpack.c.l.b16 %v295
  %v1519 = vunpack.c.l.b16 %v296
  %v1520 = vunpack.c.l.b16 %v297
  %v1521 = vunpack.c.l.b16 %v298
  %v1522 = vunpack.c.l.b16 %v299
  %v1523 = vunpack.c.l.b16 %v300
  %v1524 = vunpack.c.l.b16 %v301
  %v1525 = vunpack.c.l.b16 %v302
  %v1526 = vunpack.c.l.b16 %v303
  %v1527 = vunpack.c.l.b16 %v304
  %v1528 = vunpack.c.l.b16 %v305
  %v1529 = vunpack.c.l.b16 %v306
  %v1530 = vunpack.c.l.b16 %v307
  %v1531 = vunpack.c.l.b16 %v308
  %v1532 = vunpack.c.l.b16 %v309
  %v1533 = vunpack.c.l.b16 %v310
  %v1534 = vunpack.c.l.b16 %v311
  %v1535 = vunpack.c.l.b16 %v312
  %v1536 = vunpack.c.l.b16 %v313
  %v1537 = vunpack.c.l.b16 %v314
  %v1538 = vunpack.c.l.b16 %v315
  %v1539 = vunpack.c.l.b16 %v316
  %v1540 = vunpack.c.l.b16 %v317
  %v1541 = vunpack.c.l.b16 %v318
  %v1542 = vunpack.c.l.b16 %v319
  %v1543 = vunpack.c.l.b16 %v320
  %v1544 = vunpack.c.l.b16 %v321
  %v1545 = vunpack.c.l.b16 %v322
  %v1546 = vunpack.c.l.b16 %v323
  %v1547 = vunpack.c.l.b16 %v324
  %v1548 = vunpack.c.l.b16 %v325
  %v1549 = vunpack.c.l.b16 %v326
  %v1550 = vunpack.c.l.b16 %v327
  %v1551 = vunpack.c.l.b16 %v328
  %v1552 = vunpack.c.l.b16 %v329
  %v1553 = vunpack.c.l.b16 %v330
  %v1554 = vunpack.c.l.b16 %v331
  %v1555 = vunpack.c.l.b16 %v332
  %v1556 = vunpack.c.l.b16 %v333
  %v1557 = vunpack.c.l.b16 %v334
  %v1558 = vunpack.c.l.b16 %v335
  %v1559 = vunpack.c.l.b16 %v336
  %v1560 = vunpack.c.l.b16 %v337
  %v1561 = vunpack.c.l.b16 %v338
  %v1562 = vunpack.c.l.b16 %v339
  %v1563 = vunpack.c.l.b16 %v340
  %v1564 = vunpack.c.l.b16 %v341
  %v1565 = vunpack.c.l.b16 %v342
  %v1566 = vunpack.c.l.b16 %v343
  %v1567 = vunpack.c.l.b16 %v344
  %v1568 = vunpack.c.l.b16 %v345
  %v1569 = vunpack.c.l.b16 %v346
  %v1570 = vunpack.c.l.b16 %v347
  %v1571 = vunpack.c.l.b16 %v348
  %v1572 = vunpack.c.l.b16 %v349
  %v1573 = vunpack.c.l.b16 %v350
  %v1574 = vunpack.c.l.b16 %v351
  %v1575 = vunpack.c.l.b16 %v352
  %v1576 = vunpack.c.l.b16 %v353
  %v1577 = vunpack.c.l.b16 %v354
  %v1578 = vunpack.c.l.b16 %v355
  %v1579 = vunpack.c.l.b16 %v356
  %v1580 = vunpack.c.l.b16 %v357
  %v1581 = vunpack.c.l.b16 %v358
  %v1582 = vunpack.c.l.b16 %v359
  %v1583 = vunpack.c.l.b16 %v360
  %v1584 = vunpack.c.l.b16 %v361
  %v1585 = vunpack.c.l.b16 %v362
  %v1586 = vunpack.c.l.b16 %v363
  %v1587 = vunpack.c.l.b16 %v364
  %v1588 = vpack.c.b16 %v1461, %v1460
  %v1589 = vpack.c.b16 %v1463, %v1462
  %v1590 = vpack.c.b16 %v1465, %v1464
  %v1591 = vpack.c.b16 %v1467, %v1466
  %v1592 = vpack.c.b16 %v1469, %v1468
  %v1593 = vpack.c.b16 %v1471, %v1470
  %v1594 = vpack.c.b16 %v1473, %v1472
  %v1595 = vpack.c.b16 %v1475, %v1474
  %v1596 = vpack.c.b16 %v1477, %v1476
  %v1597 = vpack.c.b16 %v1479, %v1478
  %v1598 = vpack.c.b16 %v1481, %v1480
  %v1599 = vpack.c.b16 %v1483, %v1482
  %v1600 = vpack.c.b16 %v1485, %v1484
  %v1601 = vpack.c.b16 %v1487, %v1486
  %v1602 = vpack.c.b16 %v1489, %v1488
  %v1603 = vpack.c.b16 %v1491, %v1490
  %v1604 = vpack.c.b16 %v1493, %v1492
  %v1605 = vpack.c.b16 %v1495, %v1494
  %v1606 = vpack.c.b16 %v1497, %v1496
  %v1607 = vpack.c.b16 %v1499, %v1498
  %v1608 = vpack.c.b16 %v1501, %v1500
  %v1609 = vpack.c.b16 %v1503, %v1502
  %v1610 = vpack.c.b16 %v1505, %v1504
  %v1611 = vpack.c.b16 %v1507, %v1506
  %v1612 = vpack.c.b16 %v1509, %v1508
  %v1613 = vpack.c.b16 %v1511, %v1510
  %v1614 = vpack.c.b16 %v1513, %v1512
  %v1615 = vpack.c.b16 %v1515, %v1514
  %v1616 = vpack.c.b16 %v1517, %v1516
  %v1617 = vpack.c.b16 %v1519, %v1518
  %v1618 = vpack.c.b16 %v1521, %v1520
  %v1619 = vpack.c.b16 %v1523, %v1522
  %v1620 = vpack.c.b16 %v1525, %v1524
  %v1621 = vpack.c.b16 %v1527, %v1526
  %v1622 = vpack.c.b16 %v1529, %v1528
  %v1623 = vpack.c.b16 %v1531, %v1530
  %v1624 = vpack.c.b16 %v1533, %v1532
  %v1625 = vpack.c.b16 %v1535, %v1534
  %v1626 = vpack.c.b16 %v1537, %v1536
  %v1627 = vpack.c.b16 %v1539, %v1538
  %v1628 = vpack.c.b16 %v1541, %v1540
  %v1629 = vpack.c.b16 %v1543, %v1542
  %v1630 = vpack.c.b16 %v1545, %v1544
  %v1631 = vpack.c.b16 %v1547, %v1546
  %v1632 = vpack.c.b16 %v1549, %v1548
  %v1633 = vpack.c.b16 %v1551, %v1550
  %v1634 = vpack.c.b16 %v1553, %v1552
  %v1635 = vpack.c.b16 %v1555, %v1554
  %v1636 = vpack.c.b16 %v1557, %v1556
  %v1637 = vpack.c.b16 %v1559, %v1558
  %v1638 = vpack.c.b16 %v1561, %v1560
  %v1639 = vpack.c.b16 %v1563, %v1562
  %v1640 = vpack.c.b16 %v1565, %v1564
  %v1641 = vpack.c.b16 %v1567, %v1566
  %v1642 = vpack.c.b16 %v1569, %v1568
  %v1643 = vpack.c.b16 %v1571, %v1570
  %v1644 = vpack.c.b16 %v1573, %v1572
  %v1645 = vpack.c.b16 %v1575, %v1574
  %v1646 = vpack.c.b16 %v1577, %v1576
  %v1647 = vpack.c.b16 %v1579, %v1578
  %v1648 = vpack.c.b16 %v1581, %v1580
  %v1649 = vpack.c.b16 %v1583, %v1582
  %v1650 = vpack.c.b16 %v1585, %v1584
  %v1651 = vpack.c.b16 %v1587, %v1586
  %1716 = vmatprep.subr.bf16.mxu0 0
  %1717 = vmatpush1.bf16.msra.mxu0 %v1595
  %1718 = vmatprep.subr.bf16.mxu0 0
  %1719 = vmatpush1.bf16.msra.mxu0 %v1594
  %1720 = vmatprep.subr.bf16.mxu0 0
  %1721 = vmatpush1.bf16.msra.mxu0 %v1593
  %1722 = vmatprep.subr.bf16.mxu0 0
  %1723 = vmatpush1.bf16.msra.mxu0 %v1592
  %1724 = vmatprep.subr.bf16.mxu0 0
  %1725 = vmatpush1.bf16.msra.mxu0 %v1591
  %1726 = vmatprep.subr.bf16.mxu0 0
  %1727 = vmatpush1.bf16.msra.mxu0 %v1590
  %1728 = vmatprep.subr.bf16.mxu0 0
  %1729 = vmatpush1.bf16.msra.mxu0 %v1589
  %1730 = vmatprep.subr.bf16.mxu0 0
  %1731 = vmatpush1.bf16.msra.mxu0 %v1588
  %1732 = vmatprep.subr.bf16.mxu0 0
  %1733 = vmatpush2.bf16.msra.mxu0 %v1603
  %1734 = vmatprep.subr.bf16.mxu0 0
  %1735 = vmatpush2.bf16.msra.mxu0 %v1602
  %1736 = vmatprep.subr.bf16.mxu0 0
  %1737 = vmatpush2.bf16.msra.mxu0 %v1601
  %1738 = vmatprep.subr.bf16.mxu0 0
  %1739 = vmatpush2.bf16.msra.mxu0 %v1600
  %1740 = vmatprep.subr.bf16.mxu0 0
  %1741 = vmatpush2.bf16.msra.mxu0 %v1599
  %1742 = vmatprep.subr.bf16.mxu0 0
  %1743 = vmatpush2.bf16.msra.mxu0 %v1598
  %1744 = vmatprep.subr.bf16.mxu0 0
  %1745 = vmatpush2.bf16.msra.mxu0 %v1597
  %1746 = vmatprep.subr.bf16.mxu0 0
  %1747 = vmatpush2.bf16.msra.mxu0 %v1596
  %1748 = vmatprep.mubr.bf16.mxu0 %v949
  %1749 = vmatmul.mubr.bf16.gmra.mxu0 %v948
  %v1750 = vpop.f32.mrf.mxu0
  %v1751 = vadd.f32 %v370, %v1750
  %v1752 = vpop.f32.mrf.mxu0
  %v1753 = vpop.f32.mrf.mxu0
  %v1754 = vadd.f32 %v370, %v1753
  %v1755 = vpop.f32.mrf.mxu0
  %1756 = vmatprep.mubr.bf16.mxu0 %v957
  %1757 = vmatmul.mubr.bf16.gmra.mxu0 %v956
  %v1758 = vpop.f32.mrf.mxu0
  %v1759 = vadd.f32 %v370, %v1758
  %v1760 = vpop.f32.mrf.mxu0
  %v1761 = vpop.f32.mrf.mxu0
  %v1762 = vadd.f32 %v370, %v1761
  %v1763 = vpop.f32.mrf.mxu0
  %1764 = vmatprep.mubr.bf16.mxu0 %v965
  %1765 = vmatmul.mubr.bf16.gmra.mxu0 %v964
  %v1766 = vpop.f32.mrf.mxu0
  %v1767 = vadd.f32 %v370, %v1766
  %v1768 = vpop.f32.mrf.mxu0
  %v1769 = vpop.f32.mrf.mxu0
  %v1770 = vadd.f32 %v370, %v1769
  %v1771 = vpop.f32.mrf.mxu0
  %1772 = vmatprep.mubr.bf16.mxu0 %v973
  %1773 = vmatmul.mubr.bf16.gmra.mxu0 %v972
  %v1774 = vpop.f32.mrf.mxu0
  %v1775 = vadd.f32 %v370, %v1774
  %v1776 = vpop.f32.mrf.mxu0
  %v1777 = vpop.f32.mrf.mxu0
  %v1778 = vadd.f32 %v370, %v1777
  %v1779 = vpop.f32.mrf.mxu0
  %1780 = vmatprep.mubr.bf16.mxu0 %v981
  %1781 = vmatmul.mubr.bf16.gmra.mxu0 %v980
  %v1782 = vpop.f32.mrf.mxu0
  %v1783 = vadd.f32 %v370, %v1782
  %v1784 = vpop.f32.mrf.mxu0
  %v1785 = vpop.f32.mrf.mxu0
  %v1786 = vadd.f32 %v370, %v1785
  %v1787 = vpop.f32.mrf.mxu0
  %1788 = vmatprep.mubr.bf16.mxu0 %v989
  %1789 = vmatmul.mubr.bf16.gmra.mxu0 %v988
  %v1790 = vpop.f32.mrf.mxu0
  %v1791 = vadd.f32 %v370, %v1790
  %v1792 = vpop.f32.mrf.mxu0
  %v1793 = vpop.f32.mrf.mxu0
  %v1794 = vadd.f32 %v370, %v1793
  %v1795 = vpop.f32.mrf.mxu0
  %1796 = vmatprep.mubr.bf16.mxu0 %v997
  %1797 = vmatmul.mubr.bf16.gmra.mxu0 %v996
  %v1798 = vpop.f32.mrf.mxu0
  %v1799 = vadd.f32 %v370, %v1798
  %v1800 = vpop.f32.mrf.mxu0
  %v1801 = vpop.f32.mrf.mxu0
  %v1802 = vadd.f32 %v370, %v1801
  %v1803 = vpop.f32.mrf.mxu0
  %1804 = vmatprep.mubr.bf16.mxu0 %v1005
  %1805 = vmatmul.mubr.bf16.gmra.mxu0 %v1004
  %v1806 = vpop.f32.mrf.mxu0
  %v1807 = vadd.f32 %v370, %v1806
  %v1808 = vpop.f32.mrf.mxu0
  %v1809 = vpop.f32.mrf.mxu0
  %v1810 = vadd.f32 %v370, %v1809
  %v1811 = vpop.f32.mrf.mxu0
  %1812 = vmatprep.mubr.bf16.mxu0 %v1013
  %1813 = vmatmul.mubr.bf16.gmra.mxu0 %v1012
  %v1814 = vpop.f32.mrf.mxu0
  %v1815 = vadd.f32 %v370, %v1814
  %v1816 = vpop.f32.mrf.mxu0
  %v1817 = vpop.f32.mrf.mxu0
  %v1818 = vadd.f32 %v370, %v1817
  %v1819 = vpop.f32.mrf.mxu0
  %1820 = vmatprep.mubr.bf16.mxu0 %v1021
  %1821 = vmatmul.mubr.bf16.gmra.mxu0 %v1020
  %v1822 = vpop.f32.mrf.mxu0
  %v1823 = vadd.f32 %v370, %v1822
  %v1824 = vpop.f32.mrf.mxu0
  %v1825 = vpop.f32.mrf.mxu0
  %v1826 = vadd.f32 %v370, %v1825
  %v1827 = vpop.f32.mrf.mxu0
  %1828 = vmatprep.mubr.bf16.mxu0 %v1029
  %1829 = vmatmul.mubr.bf16.gmra.mxu0 %v1028
  %v1830 = vpop.f32.mrf.mxu0
  %v1831 = vadd.f32 %v370, %v1830
  %v1832 = vpop.f32.mrf.mxu0
  %v1833 = vpop.f32.mrf.mxu0
  %v1834 = vadd.f32 %v370, %v1833
  %v1835 = vpop.f32.mrf.mxu0
  %1836 = vmatprep.mubr.bf16.mxu0 %v1037
  %1837 = vmatmul.mubr.bf16.gmra.mxu0 %v1036
  %v1838 = vpop.f32.mrf.mxu0
  %v1839 = vadd.f32 %v370, %v1838
  %v1840 = vpop.f32.mrf.mxu0
  %v1841 = vpop.f32.mrf.mxu0
  %v1842 = vadd.f32 %v370, %v1841
  %v1843 = vpop.f32.mrf.mxu0
  %1844 = vmatprep.mubr.bf16.mxu0 %v1045
  %1845 = vmatmul.mubr.bf16.gmra.mxu0 %v1044
  %v1846 = vpop.f32.mrf.mxu0
  %v1847 = vadd.f32 %v370, %v1846
  %v1848 = vpop.f32.mrf.mxu0
  %v1849 = vpop.f32.mrf.mxu0
  %v1850 = vadd.f32 %v370, %v1849
  %v1851 = vpop.f32.mrf.mxu0
  %1852 = vmatprep.mubr.bf16.mxu0 %v1053
  %1853 = vmatmul.mubr.bf16.gmra.mxu0 %v1052
  %v1854 = vpop.f32.mrf.mxu0
  %v1855 = vadd.f32 %v370, %v1854
  %v1856 = vpop.f32.mrf.mxu0
  %v1857 = vpop.f32.mrf.mxu0
  %v1858 = vadd.f32 %v370, %v1857
  %v1859 = vpop.f32.mrf.mxu0
  %1860 = vmatprep.mubr.bf16.mxu0 %v1061
  %1861 = vmatmul.mubr.bf16.gmra.mxu0 %v1060
  %v1862 = vpop.f32.mrf.mxu0
  %v1863 = vadd.f32 %v370, %v1862
  %v1864 = vpop.f32.mrf.mxu0
  %v1865 = vpop.f32.mrf.mxu0
  %v1866 = vadd.f32 %v370, %v1865
  %v1867 = vpop.f32.mrf.mxu0
  %1868 = vmatprep.mubr.bf16.mxu0 %v1069
  %1869 = vmatmul.mubr.bf16.gmra.mxu0 %v1068
  %v1870 = vpop.f32.mrf.mxu0
  %v1871 = vadd.f32 %v370, %v1870
  %v1872 = vpop.f32.mrf.mxu0
  %v1873 = vpop.f32.mrf.mxu0
  %v1874 = vadd.f32 %v370, %v1873
  %v1875 = vpop.f32.mrf.mxu0
  %1876 = vmatprep.mubr.bf16.mxu0 %v1077
  %1877 = vmatmul.mubr.bf16.gmra.mxu0 %v1076
  %v1878 = vpop.f32.mrf.mxu0
  %v1879 = vadd.f32 %v370, %v1878
  %v1880 = vpop.f32.mrf.mxu0
  %v1881 = vpop.f32.mrf.mxu0
  %v1882 = vadd.f32 %v370, %v1881
  %v1883 = vpop.f32.mrf.mxu0
  %1884 = vmatprep.mubr.bf16.mxu0 %v1085
  %1885 = vmatmul.mubr.bf16.gmra.mxu0 %v1084
  %v1886 = vpop.f32.mrf.mxu0
  %v1887 = vadd.f32 %v370, %v1886
  %v1888 = vpop.f32.mrf.mxu0
  %v1889 = vpop.f32.mrf.mxu0
  %v1890 = vadd.f32 %v370, %v1889
  %v1891 = vpop.f32.mrf.mxu0
  %1892 = vmatprep.mubr.bf16.mxu0 %v1093
  %1893 = vmatmul.mubr.bf16.gmra.mxu0 %v1092
  %v1894 = vpop.f32.mrf.mxu0
  %v1895 = vadd.f32 %v370, %v1894
  %v1896 = vpop.f32.mrf.mxu0
  %v1897 = vpop.f32.mrf.mxu0
  %v1898 = vadd.f32 %v370, %v1897
  %v1899 = vpop.f32.mrf.mxu0
  %1900 = vmatprep.mubr.bf16.mxu0 %v1101
  %1901 = vmatmul.mubr.bf16.gmra.mxu0 %v1100
  %v1902 = vpop.f32.mrf.mxu0
  %v1903 = vadd.f32 %v370, %v1902
  %v1904 = vpop.f32.mrf.mxu0
  %v1905 = vpop.f32.mrf.mxu0
  %v1906 = vadd.f32 %v370, %v1905
  %v1907 = vpop.f32.mrf.mxu0
  %1908 = vmatprep.mubr.bf16.mxu0 %v1109
  %1909 = vmatmul.mubr.bf16.gmra.mxu0 %v1108
  %v1910 = vpop.f32.mrf.mxu0
  %v1911 = vadd.f32 %v370, %v1910
  %v1912 = vpop.f32.mrf.mxu0
  %v1913 = vpop.f32.mrf.mxu0
  %v1914 = vadd.f32 %v370, %v1913
  %v1915 = vpop.f32.mrf.mxu0
  %1916 = vmatprep.mubr.bf16.mxu0 %v1117
  %1917 = vmatmul.mubr.bf16.gmra.mxu0 %v1116
  %v1918 = vpop.f32.mrf.mxu0
  %v1919 = vadd.f32 %v370, %v1918
  %v1920 = vpop.f32.mrf.mxu0
  %v1921 = vpop.f32.mrf.mxu0
  %v1922 = vadd.f32 %v370, %v1921
  %v1923 = vpop.f32.mrf.mxu0
  %1924 = vmatprep.mubr.bf16.mxu0 %v1125
  %1925 = vmatmul.mubr.bf16.gmra.mxu0 %v1124
  %v1926 = vpop.f32.mrf.mxu0
  %v1927 = vadd.f32 %v370, %v1926
  %v1928 = vpop.f32.mrf.mxu0
  %v1929 = vpop.f32.mrf.mxu0
  %v1930 = vadd.f32 %v370, %v1929
  %v1931 = vpop.f32.mrf.mxu0
  %1932 = vmatprep.mubr.bf16.mxu0 %v1133
  %1933 = vmatmul.mubr.bf16.gmra.mxu0 %v1132
  %v1934 = vpop.f32.mrf.mxu0
  %v1935 = vadd.f32 %v370, %v1934
  %v1936 = vpop.f32.mrf.mxu0
  %v1937 = vpop.f32.mrf.mxu0
  %v1938 = vadd.f32 %v370, %v1937
  %v1939 = vpop.f32.mrf.mxu0
  %1940 = vdwg.mxu0
  %1941 = vmatprep.subr.bf16.mxu0 0
  %1942 = vmatpush1.bf16.msra.mxu0 %v1611
  %1943 = vmatprep.subr.bf16.mxu0 0
  %1944 = vmatpush1.bf16.msra.mxu0 %v1610
  %1945 = vmatprep.subr.bf16.mxu0 0
  %1946 = vmatpush1.bf16.msra.mxu0 %v1609
  %1947 = vmatprep.subr.bf16.mxu0 0
  %1948 = vmatpush1.bf16.msra.mxu0 %v1608
  %1949 = vmatprep.subr.bf16.mxu0 0
  %1950 = vmatpush1.bf16.msra.mxu0 %v1607
  %1951 = vmatprep.subr.bf16.mxu0 0
  %1952 = vmatpush1.bf16.msra.mxu0 %v1606
  %1953 = vmatprep.subr.bf16.mxu0 0
  %1954 = vmatpush1.bf16.msra.mxu0 %v1605
  %1955 = vmatprep.subr.bf16.mxu0 0
  %1956 = vmatpush1.bf16.msra.mxu0 %v1604
  %1957 = vmatprep.subr.bf16.mxu0 0
  %1958 = vmatpush2.bf16.msra.mxu0 %v1619
  %1959 = vmatprep.subr.bf16.mxu0 0
  %1960 = vmatpush2.bf16.msra.mxu0 %v1618
  %1961 = vmatprep.subr.bf16.mxu0 0
  %1962 = vmatpush2.bf16.msra.mxu0 %v1617
  %1963 = vmatprep.subr.bf16.mxu0 0
  %1964 = vmatpush2.bf16.msra.mxu0 %v1616
  %1965 = vmatprep.subr.bf16.mxu0 0
  %1966 = vmatpush2.bf16.msra.mxu0 %v1615
  %1967 = vmatprep.subr.bf16.mxu0 0
  %1968 = vmatpush2.bf16.msra.mxu0 %v1614
  %1969 = vmatprep.subr.bf16.mxu0 0
  %1970 = vmatpush2.bf16.msra.mxu0 %v1613
  %1971 = vmatprep.subr.bf16.mxu0 0
  %1972 = vmatpush2.bf16.msra.mxu0 %v1612
  %1973 = vmatprep.mubr.bf16.mxu0 %v951
  %1974 = vmatmul.mubr.bf16.gmra.mxu0 %v950
  %v1975 = vpop.f32.mrf.mxu0
  %v1976 = vadd.f32 %v1751, %v1975
  %v1977 = vpop.f32.mrf.mxu0
  %v1978 = vpop.f32.mrf.mxu0
  %v1979 = vadd.f32 %v1754, %v1978
  %v1980 = vpop.f32.mrf.mxu0
  %1981 = vmatprep.mubr.bf16.mxu0 %v959
  %1982 = vmatmul.mubr.bf16.gmra.mxu0 %v958
  %v1983 = vpop.f32.mrf.mxu0
  %v1984 = vadd.f32 %v1759, %v1983
  %v1985 = vpop.f32.mrf.mxu0
  %v1986 = vpop.f32.mrf.mxu0
  %v1987 = vadd.f32 %v1762, %v1986
  %v1988 = vpop.f32.mrf.mxu0
  %1989 = vmatprep.mubr.bf16.mxu0 %v967
  %1990 = vmatmul.mubr.bf16.gmra.mxu0 %v966
  %v1991 = vpop.f32.mrf.mxu0
  %v1992 = vadd.f32 %v1767, %v1991
  %v1993 = vpop.f32.mrf.mxu0
  %v1994 = vpop.f32.mrf.mxu0
  %v1995 = vadd.f32 %v1770, %v1994
  %v1996 = vpop.f32.mrf.mxu0
  %1997 = vmatprep.mubr.bf16.mxu0 %v975
  %1998 = vmatmul.mubr.bf16.gmra.mxu0 %v974
  %v1999 = vpop.f32.mrf.mxu0
  %v2000 = vadd.f32 %v1775, %v1999
  %v2001 = vpop.f32.mrf.mxu0
  %v2002 = vpop.f32.mrf.mxu0
  %v2003 = vadd.f32 %v1778, %v2002
  %v2004 = vpop.f32.mrf.mxu0
  %2005 = vmatprep.mubr.bf16.mxu0 %v983
  %2006 = vmatmul.mubr.bf16.gmra.mxu0 %v982
  %v2007 = vpop.f32.mrf.mxu0
  %v2008 = vadd.f32 %v1783, %v2007
  %v2009 = vpop.f32.mrf.mxu0
  %v2010 = vpop.f32.mrf.mxu0
  %v2011 = vadd.f32 %v1786, %v2010
  %v2012 = vpop.f32.mrf.mxu0
  %2013 = vmatprep.mubr.bf16.mxu0 %v991
  %2014 = vmatmul.mubr.bf16.gmra.mxu0 %v990
  %v2015 = vpop.f32.mrf.mxu0
  %v2016 = vadd.f32 %v1791, %v2015
  %v2017 = vpop.f32.mrf.mxu0
  %v2018 = vpop.f32.mrf.mxu0
  %v2019 = vadd.f32 %v1794, %v2018
  %v2020 = vpop.f32.mrf.mxu0
  %2021 = vmatprep.mubr.bf16.mxu0 %v999
  %2022 = vmatmul.mubr.bf16.gmra.mxu0 %v998
  %v2023 = vpop.f32.mrf.mxu0
  %v2024 = vadd.f32 %v1799, %v2023
  %v2025 = vpop.f32.mrf.mxu0
  %v2026 = vpop.f32.mrf.mxu0
  %v2027 = vadd.f32 %v1802, %v2026
  %v2028 = vpop.f32.mrf.mxu0
  %2029 = vmatprep.mubr.bf16.mxu0 %v1007
  %2030 = vmatmul.mubr.bf16.gmra.mxu0 %v1006
  %v2031 = vpop.f32.mrf.mxu0
  %v2032 = vadd.f32 %v1807, %v2031
  %v2033 = vpop.f32.mrf.mxu0
  %v2034 = vpop.f32.mrf.mxu0
  %v2035 = vadd.f32 %v1810, %v2034
  %v2036 = vpop.f32.mrf.mxu0
  %2037 = vmatprep.mubr.bf16.mxu0 %v1015
  %2038 = vmatmul.mubr.bf16.gmra.mxu0 %v1014
  %v2039 = vpop.f32.mrf.mxu0
  %v2040 = vadd.f32 %v1815, %v2039
  %v2041 = vpop.f32.mrf.mxu0
  %v2042 = vpop.f32.mrf.mxu0
  %v2043 = vadd.f32 %v1818, %v2042
  %v2044 = vpop.f32.mrf.mxu0
  %2045 = vmatprep.mubr.bf16.mxu0 %v1023
  %2046 = vmatmul.mubr.bf16.gmra.mxu0 %v1022
  %v2047 = vpop.f32.mrf.mxu0
  %v2048 = vadd.f32 %v1823, %v2047
  %v2049 = vpop.f32.mrf.mxu0
  %v2050 = vpop.f32.mrf.mxu0
  %v2051 = vadd.f32 %v1826, %v2050
  %v2052 = vpop.f32.mrf.mxu0
  %2053 = vmatprep.mubr.bf16.mxu0 %v1031
  %2054 = vmatmul.mubr.bf16.gmra.mxu0 %v1030
  %v2055 = vpop.f32.mrf.mxu0
  %v2056 = vadd.f32 %v1831, %v2055
  %v2057 = vpop.f32.mrf.mxu0
  %v2058 = vpop.f32.mrf.mxu0
  %v2059 = vadd.f32 %v1834, %v2058
  %v2060 = vpop.f32.mrf.mxu0
  %2061 = vmatprep.mubr.bf16.mxu0 %v1039
  %2062 = vmatmul.mubr.bf16.gmra.mxu0 %v1038
  %v2063 = vpop.f32.mrf.mxu0
  %v2064 = vadd.f32 %v1839, %v2063
  %v2065 = vpop.f32.mrf.mxu0
  %v2066 = vpop.f32.mrf.mxu0
  %v2067 = vadd.f32 %v1842, %v2066
  %v2068 = vpop.f32.mrf.mxu0
  %2069 = vmatprep.mubr.bf16.mxu0 %v1047
  %2070 = vmatmul.mubr.bf16.gmra.mxu0 %v1046
  %v2071 = vpop.f32.mrf.mxu0
  %v2072 = vadd.f32 %v1847, %v2071
  %v2073 = vpop.f32.mrf.mxu0
  %v2074 = vpop.f32.mrf.mxu0
  %v2075 = vadd.f32 %v1850, %v2074
  %v2076 = vpop.f32.mrf.mxu0
  %2077 = vmatprep.mubr.bf16.mxu0 %v1055
  %2078 = vmatmul.mubr.bf16.gmra.mxu0 %v1054
  %v2079 = vpop.f32.mrf.mxu0
  %v2080 = vadd.f32 %v1855, %v2079
  %v2081 = vpop.f32.mrf.mxu0
  %v2082 = vpop.f32.mrf.mxu0
  %v2083 = vadd.f32 %v1858, %v2082
  %v2084 = vpop.f32.mrf.mxu0
  %2085 = vmatprep.mubr.bf16.mxu0 %v1063
  %2086 = vmatmul.mubr.bf16.gmra.mxu0 %v1062
  %v2087 = vpop.f32.mrf.mxu0
  %v2088 = vadd.f32 %v1863, %v2087
  %v2089 = vpop.f32.mrf.mxu0
  %v2090 = vpop.f32.mrf.mxu0
  %v2091 = vadd.f32 %v1866, %v2090
  %v2092 = vpop.f32.mrf.mxu0
  %2093 = vmatprep.mubr.bf16.mxu0 %v1071
  %2094 = vmatmul.mubr.bf16.gmra.mxu0 %v1070
  %v2095 = vpop.f32.mrf.mxu0
  %v2096 = vadd.f32 %v1871, %v2095
  %v2097 = vpop.f32.mrf.mxu0
  %v2098 = vpop.f32.mrf.mxu0
  %v2099 = vadd.f32 %v1874, %v2098
  %v2100 = vpop.f32.mrf.mxu0
  %2101 = vmatprep.mubr.bf16.mxu0 %v1079
  %2102 = vmatmul.mubr.bf16.gmra.mxu0 %v1078
  %v2103 = vpop.f32.mrf.mxu0
  %v2104 = vadd.f32 %v1879, %v2103
  %v2105 = vpop.f32.mrf.mxu0
  %v2106 = vpop.f32.mrf.mxu0
  %v2107 = vadd.f32 %v1882, %v2106
  %v2108 = vpop.f32.mrf.mxu0
  %2109 = vmatprep.mubr.bf16.mxu0 %v1087
  %2110 = vmatmul.mubr.bf16.gmra.mxu0 %v1086
  %v2111 = vpop.f32.mrf.mxu0
  %v2112 = vadd.f32 %v1887, %v2111
  %v2113 = vpop.f32.mrf.mxu0
  %v2114 = vpop.f32.mrf.mxu0
  %v2115 = vadd.f32 %v1890, %v2114
  %v2116 = vpop.f32.mrf.mxu0
  %2117 = vmatprep.mubr.bf16.mxu0 %v1095
  %2118 = vmatmul.mubr.bf16.gmra.mxu0 %v1094
  %v2119 = vpop.f32.mrf.mxu0
  %v2120 = vadd.f32 %v1895, %v2119
  %v2121 = vpop.f32.mrf.mxu0
  %v2122 = vpop.f32.mrf.mxu0
  %v2123 = vadd.f32 %v1898, %v2122
  %v2124 = vpop.f32.mrf.mxu0
  %2125 = vmatprep.mubr.bf16.mxu0 %v1103
  %2126 = vmatmul.mubr.bf16.gmra.mxu0 %v1102
  %v2127 = vpop.f32.mrf.mxu0
  %v2128 = vadd.f32 %v1903, %v2127
  %v2129 = vpop.f32.mrf.mxu0
  %v2130 = vpop.f32.mrf.mxu0
  %v2131 = vadd.f32 %v1906, %v2130
  %v2132 = vpop.f32.mrf.mxu0
  %2133 = vmatprep.mubr.bf16.mxu0 %v1111
  %2134 = vmatmul.mubr.bf16.gmra.mxu0 %v1110
  %v2135 = vpop.f32.mrf.mxu0
  %v2136 = vadd.f32 %v1911, %v2135
  %v2137 = vpop.f32.mrf.mxu0
  %v2138 = vpop.f32.mrf.mxu0
  %v2139 = vadd.f32 %v1914, %v2138
  %v2140 = vpop.f32.mrf.mxu0
  %2141 = vmatprep.mubr.bf16.mxu0 %v1119
  %2142 = vmatmul.mubr.bf16.gmra.mxu0 %v1118
  %v2143 = vpop.f32.mrf.mxu0
  %v2144 = vadd.f32 %v1919, %v2143
  %v2145 = vpop.f32.mrf.mxu0
  %v2146 = vpop.f32.mrf.mxu0
  %v2147 = vadd.f32 %v1922, %v2146
  %v2148 = vpop.f32.mrf.mxu0
  %2149 = vmatprep.mubr.bf16.mxu0 %v1127
  %2150 = vmatmul.mubr.bf16.gmra.mxu0 %v1126
  %v2151 = vpop.f32.mrf.mxu0
  %v2152 = vadd.f32 %v1927, %v2151
  %v2153 = vpop.f32.mrf.mxu0
  %v2154 = vpop.f32.mrf.mxu0
  %v2155 = vadd.f32 %v1930, %v2154
  %v2156 = vpop.f32.mrf.mxu0
  %2157 = vmatprep.mubr.bf16.mxu0 %v1135
  %2158 = vmatmul.mubr.bf16.gmra.mxu0 %v1134
  %v2159 = vpop.f32.mrf.mxu0
  %v2160 = vadd.f32 %v1935, %v2159
  %v2161 = vpop.f32.mrf.mxu0
  %v2162 = vpop.f32.mrf.mxu0
  %v2163 = vadd.f32 %v1938, %v2162
  %v2164 = vpop.f32.mrf.mxu0
  %2165 = vdwg.mxu0
  %2166 = vmatprep.subr.bf16.mxu0 0
  %2167 = vmatpush1.bf16.msra.mxu0 %v1627
  %2168 = vmatprep.subr.bf16.mxu0 0
  %2169 = vmatpush1.bf16.msra.mxu0 %v1626
  %2170 = vmatprep.subr.bf16.mxu0 0
  %2171 = vmatpush1.bf16.msra.mxu0 %v1625
  %2172 = vmatprep.subr.bf16.mxu0 0
  %2173 = vmatpush1.bf16.msra.mxu0 %v1624
  %2174 = vmatprep.subr.bf16.mxu0 0
  %2175 = vmatpush1.bf16.msra.mxu0 %v1623
  %2176 = vmatprep.subr.bf16.mxu0 0
  %2177 = vmatpush1.bf16.msra.mxu0 %v1622
  %2178 = vmatprep.subr.bf16.mxu0 0
  %2179 = vmatpush1.bf16.msra.mxu0 %v1621
  %2180 = vmatprep.subr.bf16.mxu0 0
  %2181 = vmatpush1.bf16.msra.mxu0 %v1620
  %2182 = vmatprep.subr.bf16.mxu0 0
  %2183 = vmatpush2.bf16.msra.mxu0 %v1635
  %2184 = vmatprep.subr.bf16.mxu0 0
  %2185 = vmatpush2.bf16.msra.mxu0 %v1634
  %2186 = vmatprep.subr.bf16.mxu0 0
  %2187 = vmatpush2.bf16.msra.mxu0 %v1633
  %2188 = vmatprep.subr.bf16.mxu0 0
  %2189 = vmatpush2.bf16.msra.mxu0 %v1632
  %2190 = vmatprep.subr.bf16.mxu0 0
  %2191 = vmatpush2.bf16.msra.mxu0 %v1631
  %2192 = vmatprep.subr.bf16.mxu0 0
  %2193 = vmatpush2.bf16.msra.mxu0 %v1630
  %2194 = vmatprep.subr.bf16.mxu0 0
  %2195 = vmatpush2.bf16.msra.mxu0 %v1629
  %2196 = vmatprep.subr.bf16.mxu0 0
  %2197 = vmatpush2.bf16.msra.mxu0 %v1628
  %2198 = vmatprep.mubr.bf16.mxu0 %v953
  %2199 = vmatmul.mubr.bf16.gmra.mxu0 %v952
  %v2200 = vpop.f32.mrf.mxu0
  %v2201 = vadd.f32 %v1976, %v2200
  %v2202 = vpop.f32.mrf.mxu0
  %v2203 = vpop.f32.mrf.mxu0
  %v2204 = vadd.f32 %v1979, %v2203
  %v2205 = vpop.f32.mrf.mxu0
  %2206 = vmatprep.mubr.bf16.mxu0 %v961
  %2207 = vmatmul.mubr.bf16.gmra.mxu0 %v960
  %v2208 = vpop.f32.mrf.mxu0
  %v2209 = vadd.f32 %v1984, %v2208
  %v2210 = vpop.f32.mrf.mxu0
  %v2211 = vpop.f32.mrf.mxu0
  %v2212 = vadd.f32 %v1987, %v2211
  %v2213 = vpop.f32.mrf.mxu0
  %2214 = vmatprep.mubr.bf16.mxu0 %v969
  %2215 = vmatmul.mubr.bf16.gmra.mxu0 %v968
  %v2216 = vpop.f32.mrf.mxu0
  %v2217 = vadd.f32 %v1992, %v2216
  %v2218 = vpop.f32.mrf.mxu0
  %v2219 = vpop.f32.mrf.mxu0
  %v2220 = vadd.f32 %v1995, %v2219
  %v2221 = vpop.f32.mrf.mxu0
  %2222 = vmatprep.mubr.bf16.mxu0 %v977
  %2223 = vmatmul.mubr.bf16.gmra.mxu0 %v976
  %v2224 = vpop.f32.mrf.mxu0
  %v2225 = vadd.f32 %v2000, %v2224
  %v2226 = vpop.f32.mrf.mxu0
  %v2227 = vpop.f32.mrf.mxu0
  %v2228 = vadd.f32 %v2003, %v2227
  %v2229 = vpop.f32.mrf.mxu0
  %2230 = vmatprep.mubr.bf16.mxu0 %v985
  %2231 = vmatmul.mubr.bf16.gmra.mxu0 %v984
  %v2232 = vpop.f32.mrf.mxu0
  %v2233 = vadd.f32 %v2008, %v2232
  %v2234 = vpop.f32.mrf.mxu0
  %v2235 = vpop.f32.mrf.mxu0
  %v2236 = vadd.f32 %v2011, %v2235
  %v2237 = vpop.f32.mrf.mxu0
  %2238 = vmatprep.mubr.bf16.mxu0 %v993
  %2239 = vmatmul.mubr.bf16.gmra.mxu0 %v992
  %v2240 = vpop.f32.mrf.mxu0
  %v2241 = vadd.f32 %v2016, %v2240
  %v2242 = vpop.f32.mrf.mxu0
  %v2243 = vpop.f32.mrf.mxu0
  %v2244 = vadd.f32 %v2019, %v2243
  %v2245 = vpop.f32.mrf.mxu0
  %2246 = vmatprep.mubr.bf16.mxu0 %v1001
  %2247 = vmatmul.mubr.bf16.gmra.mxu0 %v1000
  %v2248 = vpop.f32.mrf.mxu0
  %v2249 = vadd.f32 %v2024, %v2248
  %v2250 = vpop.f32.mrf.mxu0
  %v2251 = vpop.f32.mrf.mxu0
  %v2252 = vadd.f32 %v2027, %v2251
  %v2253 = vpop.f32.mrf.mxu0
  %2254 = vmatprep.mubr.bf16.mxu0 %v1009
  %2255 = vmatmul.mubr.bf16.gmra.mxu0 %v1008
  %v2256 = vpop.f32.mrf.mxu0
  %v2257 = vadd.f32 %v2032, %v2256
  %v2258 = vpop.f32.mrf.mxu0
  %v2259 = vpop.f32.mrf.mxu0
  %v2260 = vadd.f32 %v2035, %v2259
  %v2261 = vpop.f32.mrf.mxu0
  %2262 = vmatprep.mubr.bf16.mxu0 %v1017
  %2263 = vmatmul.mubr.bf16.gmra.mxu0 %v1016
  %v2264 = vpop.f32.mrf.mxu0
  %v2265 = vadd.f32 %v2040, %v2264
  %v2266 = vpop.f32.mrf.mxu0
  %v2267 = vpop.f32.mrf.mxu0
  %v2268 = vadd.f32 %v2043, %v2267
  %v2269 = vpop.f32.mrf.mxu0
  %2270 = vmatprep.mubr.bf16.mxu0 %v1025
  %2271 = vmatmul.mubr.bf16.gmra.mxu0 %v1024
  %v2272 = vpop.f32.mrf.mxu0
  %v2273 = vadd.f32 %v2048, %v2272
  %v2274 = vpop.f32.mrf.mxu0
  %v2275 = vpop.f32.mrf.mxu0
  %v2276 = vadd.f32 %v2051, %v2275
  %v2277 = vpop.f32.mrf.mxu0
  %2278 = vmatprep.mubr.bf16.mxu0 %v1033
  %2279 = vmatmul.mubr.bf16.gmra.mxu0 %v1032
  %v2280 = vpop.f32.mrf.mxu0
  %v2281 = vadd.f32 %v2056, %v2280
  %v2282 = vpop.f32.mrf.mxu0
  %v2283 = vpop.f32.mrf.mxu0
  %v2284 = vadd.f32 %v2059, %v2283
  %v2285 = vpop.f32.mrf.mxu0
  %2286 = vmatprep.mubr.bf16.mxu0 %v1041
  %2287 = vmatmul.mubr.bf16.gmra.mxu0 %v1040
  %v2288 = vpop.f32.mrf.mxu0
  %v2289 = vadd.f32 %v2064, %v2288
  %v2290 = vpop.f32.mrf.mxu0
  %v2291 = vpop.f32.mrf.mxu0
  %v2292 = vadd.f32 %v2067, %v2291
  %v2293 = vpop.f32.mrf.mxu0
  %2294 = vmatprep.mubr.bf16.mxu0 %v1049
  %2295 = vmatmul.mubr.bf16.gmra.mxu0 %v1048
  %v2296 = vpop.f32.mrf.mxu0
  %v2297 = vadd.f32 %v2072, %v2296
  %v2298 = vpop.f32.mrf.mxu0
  %v2299 = vpop.f32.mrf.mxu0
  %v2300 = vadd.f32 %v2075, %v2299
  %v2301 = vpop.f32.mrf.mxu0
  %2302 = vmatprep.mubr.bf16.mxu0 %v1057
  %2303 = vmatmul.mubr.bf16.gmra.mxu0 %v1056
  %v2304 = vpop.f32.mrf.mxu0
  %v2305 = vadd.f32 %v2080, %v2304
  %v2306 = vpop.f32.mrf.mxu0
  %v2307 = vpop.f32.mrf.mxu0
  %v2308 = vadd.f32 %v2083, %v2307
  %v2309 = vpop.f32.mrf.mxu0
  %2310 = vmatprep.mubr.bf16.mxu0 %v1065
  %2311 = vmatmul.mubr.bf16.gmra.mxu0 %v1064
  %v2312 = vpop.f32.mrf.mxu0
  %v2313 = vadd.f32 %v2088, %v2312
  %v2314 = vpop.f32.mrf.mxu0
  %v2315 = vpop.f32.mrf.mxu0
  %v2316 = vadd.f32 %v2091, %v2315
  %v2317 = vpop.f32.mrf.mxu0
  %2318 = vmatprep.mubr.bf16.mxu0 %v1073
  %2319 = vmatmul.mubr.bf16.gmra.mxu0 %v1072
  %v2320 = vpop.f32.mrf.mxu0
  %v2321 = vadd.f32 %v2096, %v2320
  %v2322 = vpop.f32.mrf.mxu0
  %v2323 = vpop.f32.mrf.mxu0
  %v2324 = vadd.f32 %v2099, %v2323
  %v2325 = vpop.f32.mrf.mxu0
  %2326 = vmatprep.mubr.bf16.mxu0 %v1081
  %2327 = vmatmul.mubr.bf16.gmra.mxu0 %v1080
  %v2328 = vpop.f32.mrf.mxu0
  %v2329 = vadd.f32 %v2104, %v2328
  %v2330 = vpop.f32.mrf.mxu0
  %v2331 = vpop.f32.mrf.mxu0
  %v2332 = vadd.f32 %v2107, %v2331
  %v2333 = vpop.f32.mrf.mxu0
  %2334 = vmatprep.mubr.bf16.mxu0 %v1089
  %2335 = vmatmul.mubr.bf16.gmra.mxu0 %v1088
  %v2336 = vpop.f32.mrf.mxu0
  %v2337 = vadd.f32 %v2112, %v2336
  %v2338 = vpop.f32.mrf.mxu0
  %v2339 = vpop.f32.mrf.mxu0
  %v2340 = vadd.f32 %v2115, %v2339
  %v2341 = vpop.f32.mrf.mxu0
  %2342 = vmatprep.mubr.bf16.mxu0 %v1097
  %2343 = vmatmul.mubr.bf16.gmra.mxu0 %v1096
  %v2344 = vpop.f32.mrf.mxu0
  %v2345 = vadd.f32 %v2120, %v2344
  %v2346 = vpop.f32.mrf.mxu0
  %v2347 = vpop.f32.mrf.mxu0
  %v2348 = vadd.f32 %v2123, %v2347
  %v2349 = vpop.f32.mrf.mxu0
  %2350 = vmatprep.mubr.bf16.mxu0 %v1105
  %2351 = vmatmul.mubr.bf16.gmra.mxu0 %v1104
  %v2352 = vpop.f32.mrf.mxu0
  %v2353 = vadd.f32 %v2128, %v2352
  %v2354 = vpop.f32.mrf.mxu0
  %v2355 = vpop.f32.mrf.mxu0
  %v2356 = vadd.f32 %v2131, %v2355
  %v2357 = vpop.f32.mrf.mxu0
  %2358 = vmatprep.mubr.bf16.mxu0 %v1113
  %2359 = vmatmul.mubr.bf16.gmra.mxu0 %v1112
  %v2360 = vpop.f32.mrf.mxu0
  %v2361 = vadd.f32 %v2136, %v2360
  %v2362 = vpop.f32.mrf.mxu0
  %v2363 = vpop.f32.mrf.mxu0
  %v2364 = vadd.f32 %v2139, %v2363
  %v2365 = vpop.f32.mrf.mxu0
  %2366 = vmatprep.mubr.bf16.mxu0 %v1121
  %2367 = vmatmul.mubr.bf16.gmra.mxu0 %v1120
  %v2368 = vpop.f32.mrf.mxu0
  %v2369 = vadd.f32 %v2144, %v2368
  %v2370 = vpop.f32.mrf.mxu0
  %v2371 = vpop.f32.mrf.mxu0
  %v2372 = vadd.f32 %v2147, %v2371
  %v2373 = vpop.f32.mrf.mxu0
  %2374 = vmatprep.mubr.bf16.mxu0 %v1129
  %2375 = vmatmul.mubr.bf16.gmra.mxu0 %v1128
  %v2376 = vpop.f32.mrf.mxu0
  %v2377 = vadd.f32 %v2152, %v2376
  %v2378 = vpop.f32.mrf.mxu0
  %v2379 = vpop.f32.mrf.mxu0
  %v2380 = vadd.f32 %v2155, %v2379
  %v2381 = vpop.f32.mrf.mxu0
  %2382 = vmatprep.mubr.bf16.mxu0 %v1137
  %2383 = vmatmul.mubr.bf16.gmra.mxu0 %v1136
  %v2384 = vpop.f32.mrf.mxu0
  %v2385 = vadd.f32 %v2160, %v2384
  %v2386 = vpop.f32.mrf.mxu0
  %v2387 = vpop.f32.mrf.mxu0
  %v2388 = vadd.f32 %v2163, %v2387
  %v2389 = vpop.f32.mrf.mxu0
  %2390 = vdwg.mxu0
  %2391 = vmatprep.subr.bf16.mxu0 0
  %2392 = vmatpush1.bf16.msra.mxu0 %v1643
  %2393 = vmatprep.subr.bf16.mxu0 0
  %2394 = vmatpush1.bf16.msra.mxu0 %v1642
  %2395 = vmatprep.subr.bf16.mxu0 0
  %2396 = vmatpush1.bf16.msra.mxu0 %v1641
  %2397 = vmatprep.subr.bf16.mxu0 0
  %2398 = vmatpush1.bf16.msra.mxu0 %v1640
  %2399 = vmatprep.subr.bf16.mxu0 0
  %2400 = vmatpush1.bf16.msra.mxu0 %v1639
  %2401 = vmatprep.subr.bf16.mxu0 0
  %2402 = vmatpush1.bf16.msra.mxu0 %v1638
  %2403 = vmatprep.subr.bf16.mxu0 0
  %2404 = vmatpush1.bf16.msra.mxu0 %v1637
  %2405 = vmatprep.subr.bf16.mxu0 0
  %2406 = vmatpush1.bf16.msra.mxu0 %v1636
  %2407 = vmatprep.subr.bf16.mxu0 0
  %2408 = vmatpush2.bf16.msra.mxu0 %v1651
  %2409 = vmatprep.subr.bf16.mxu0 0
  %2410 = vmatpush2.bf16.msra.mxu0 %v1650
  %2411 = vmatprep.subr.bf16.mxu0 0
  %2412 = vmatpush2.bf16.msra.mxu0 %v1649
  %2413 = vmatprep.subr.bf16.mxu0 0
  %2414 = vmatpush2.bf16.msra.mxu0 %v1648
  %2415 = vmatprep.subr.bf16.mxu0 0
  %2416 = vmatpush2.bf16.msra.mxu0 %v1647
  %2417 = vmatprep.subr.bf16.mxu0 0
  %2418 = vmatpush2.bf16.msra.mxu0 %v1646
  %2419 = vmatprep.subr.bf16.mxu0 0
  %2420 = vmatpush2.bf16.msra.mxu0 %v1645
  %2421 = vmatprep.subr.bf16.mxu0 0
  %2422 = vmatpush2.bf16.msra.mxu0 %v1644
  %2423 = vmatprep.mubr.bf16.mxu0 %v955
  %2424 = vmatmul.mubr.bf16.gmra.mxu0 %v954
  %v2425 = vpop.f32.mrf.mxu0
  %v2426 = vadd.f32 %v2201, %v2425
  %v2427 = vpop.f32.mrf.mxu0
  %v2428 = vpop.f32.mrf.mxu0
  %v2429 = vadd.f32 %v2204, %v2428
  %v2430 = vpop.f32.mrf.mxu0
  %2431 = vmatprep.mubr.bf16.mxu0 %v963
  %2432 = vmatmul.mubr.bf16.gmra.mxu0 %v962
  %v2433 = vpop.f32.mrf.mxu0
  %v2434 = vadd.f32 %v2209, %v2433
  %v2435 = vpop.f32.mrf.mxu0
  %v2436 = vpop.f32.mrf.mxu0
  %v2437 = vadd.f32 %v2212, %v2436
  %v2438 = vpop.f32.mrf.mxu0
  %2439 = vmatprep.mubr.bf16.mxu0 %v971
  %2440 = vmatmul.mubr.bf16.gmra.mxu0 %v970
  %v2441 = vpop.f32.mrf.mxu0
  %v2442 = vadd.f32 %v2217, %v2441
  %v2443 = vpop.f32.mrf.mxu0
  %v2444 = vpop.f32.mrf.mxu0
  %v2445 = vadd.f32 %v2220, %v2444
  %v2446 = vpop.f32.mrf.mxu0
  %2447 = vmatprep.mubr.bf16.mxu0 %v979
  %2448 = vmatmul.mubr.bf16.gmra.mxu0 %v978
  %v2449 = vpop.f32.mrf.mxu0
  %v2450 = vadd.f32 %v2225, %v2449
  %v2451 = vpop.f32.mrf.mxu0
  %v2452 = vpop.f32.mrf.mxu0
  %v2453 = vadd.f32 %v2228, %v2452
  %v2454 = vpop.f32.mrf.mxu0
  %2455 = vmatprep.mubr.bf16.mxu0 %v987
  %2456 = vmatmul.mubr.bf16.gmra.mxu0 %v986
  %v2457 = vpop.f32.mrf.mxu0
  %v2458 = vadd.f32 %v2233, %v2457
  %v2459 = vpop.f32.mrf.mxu0
  %v2460 = vpop.f32.mrf.mxu0
  %v2461 = vadd.f32 %v2236, %v2460
  %v2462 = vpop.f32.mrf.mxu0
  %2463 = vmatprep.mubr.bf16.mxu0 %v995
  %2464 = vmatmul.mubr.bf16.gmra.mxu0 %v994
  %v2465 = vpop.f32.mrf.mxu0
  %v2466 = vadd.f32 %v2241, %v2465
  %v2467 = vpop.f32.mrf.mxu0
  %v2468 = vpop.f32.mrf.mxu0
  %v2469 = vadd.f32 %v2244, %v2468
  %v2470 = vpop.f32.mrf.mxu0
  %2471 = vmatprep.mubr.bf16.mxu0 %v1003
  %2472 = vmatmul.mubr.bf16.gmra.mxu0 %v1002
  %v2473 = vpop.f32.mrf.mxu0
  %v2474 = vadd.f32 %v2249, %v2473
  %v2475 = vpop.f32.mrf.mxu0
  %v2476 = vpop.f32.mrf.mxu0
  %v2477 = vadd.f32 %v2252, %v2476
  %v2478 = vpop.f32.mrf.mxu0
  %2479 = vmatprep.mubr.bf16.mxu0 %v1011
  %2480 = vmatmul.mubr.bf16.gmra.mxu0 %v1010
  %v2481 = vpop.f32.mrf.mxu0
  %v2482 = vadd.f32 %v2257, %v2481
  %v2483 = vpop.f32.mrf.mxu0
  %v2484 = vpop.f32.mrf.mxu0
  %v2485 = vadd.f32 %v2260, %v2484
  %v2486 = vpop.f32.mrf.mxu0
  %2487 = vmatprep.mubr.bf16.mxu0 %v1019
  %2488 = vmatmul.mubr.bf16.gmra.mxu0 %v1018
  %v2489 = vpop.f32.mrf.mxu0
  %v2490 = vadd.f32 %v2265, %v2489
  %v2491 = vpop.f32.mrf.mxu0
  %v2492 = vpop.f32.mrf.mxu0
  %v2493 = vadd.f32 %v2268, %v2492
  %v2494 = vpop.f32.mrf.mxu0
  %2495 = vmatprep.mubr.bf16.mxu0 %v1027
  %2496 = vmatmul.mubr.bf16.gmra.mxu0 %v1026
  %v2497 = vpop.f32.mrf.mxu0
  %v2498 = vadd.f32 %v2273, %v2497
  %v2499 = vpop.f32.mrf.mxu0
  %v2500 = vpop.f32.mrf.mxu0
  %v2501 = vadd.f32 %v2276, %v2500
  %v2502 = vpop.f32.mrf.mxu0
  %2503 = vmatprep.mubr.bf16.mxu0 %v1035
  %2504 = vmatmul.mubr.bf16.gmra.mxu0 %v1034
  %v2505 = vpop.f32.mrf.mxu0
  %v2506 = vadd.f32 %v2281, %v2505
  %v2507 = vpop.f32.mrf.mxu0
  %v2508 = vpop.f32.mrf.mxu0
  %v2509 = vadd.f32 %v2284, %v2508
  %v2510 = vpop.f32.mrf.mxu0
  %2511 = vmatprep.mubr.bf16.mxu0 %v1043
  %2512 = vmatmul.mubr.bf16.gmra.mxu0 %v1042
  %v2513 = vpop.f32.mrf.mxu0
  %v2514 = vadd.f32 %v2289, %v2513
  %v2515 = vpop.f32.mrf.mxu0
  %v2516 = vpop.f32.mrf.mxu0
  %v2517 = vadd.f32 %v2292, %v2516
  %v2518 = vpop.f32.mrf.mxu0
  %2519 = vmatprep.mubr.bf16.mxu0 %v1051
  %2520 = vmatmul.mubr.bf16.gmra.mxu0 %v1050
  %v2521 = vpop.f32.mrf.mxu0
  %v2522 = vadd.f32 %v2297, %v2521
  %v2523 = vpop.f32.mrf.mxu0
  %v2524 = vpop.f32.mrf.mxu0
  %v2525 = vadd.f32 %v2300, %v2524
  %v2526 = vpop.f32.mrf.mxu0
  %2527 = vmatprep.mubr.bf16.mxu0 %v1059
  %2528 = vmatmul.mubr.bf16.gmra.mxu0 %v1058
  %v2529 = vpop.f32.mrf.mxu0
  %v2530 = vadd.f32 %v2305, %v2529
  %v2531 = vpop.f32.mrf.mxu0
  %v2532 = vpop.f32.mrf.mxu0
  %v2533 = vadd.f32 %v2308, %v2532
  %v2534 = vpop.f32.mrf.mxu0
  %2535 = vmatprep.mubr.bf16.mxu0 %v1067
  %2536 = vmatmul.mubr.bf16.gmra.mxu0 %v1066
  %v2537 = vpop.f32.mrf.mxu0
  %v2538 = vadd.f32 %v2313, %v2537
  %v2539 = vpop.f32.mrf.mxu0
  %v2540 = vpop.f32.mrf.mxu0
  %v2541 = vadd.f32 %v2316, %v2540
  %v2542 = vpop.f32.mrf.mxu0
  %2543 = vmatprep.mubr.bf16.mxu0 %v1075
  %2544 = vmatmul.mubr.bf16.gmra.mxu0 %v1074
  %v2545 = vpop.f32.mrf.mxu0
  %v2546 = vadd.f32 %v2321, %v2545
  %v2547 = vpop.f32.mrf.mxu0
  %v2548 = vpop.f32.mrf.mxu0
  %v2549 = vadd.f32 %v2324, %v2548
  %v2550 = vpop.f32.mrf.mxu0
  %2551 = vmatprep.mubr.bf16.mxu0 %v1083
  %2552 = vmatmul.mubr.bf16.gmra.mxu0 %v1082
  %v2553 = vpop.f32.mrf.mxu0
  %v2554 = vadd.f32 %v2329, %v2553
  %v2555 = vpop.f32.mrf.mxu0
  %v2556 = vpop.f32.mrf.mxu0
  %v2557 = vadd.f32 %v2332, %v2556
  %v2558 = vpop.f32.mrf.mxu0
  %2559 = vmatprep.mubr.bf16.mxu0 %v1091
  %2560 = vmatmul.mubr.bf16.gmra.mxu0 %v1090
  %v2561 = vpop.f32.mrf.mxu0
  %v2562 = vadd.f32 %v2337, %v2561
  %v2563 = vpop.f32.mrf.mxu0
  %v2564 = vpop.f32.mrf.mxu0
  %v2565 = vadd.f32 %v2340, %v2564
  %v2566 = vpop.f32.mrf.mxu0
  %2567 = vmatprep.mubr.bf16.mxu0 %v1099
  %2568 = vmatmul.mubr.bf16.gmra.mxu0 %v1098
  %v2569 = vpop.f32.mrf.mxu0
  %v2570 = vadd.f32 %v2345, %v2569
  %v2571 = vpop.f32.mrf.mxu0
  %v2572 = vpop.f32.mrf.mxu0
  %v2573 = vadd.f32 %v2348, %v2572
  %v2574 = vpop.f32.mrf.mxu0
  %2575 = vmatprep.mubr.bf16.mxu0 %v1107
  %2576 = vmatmul.mubr.bf16.gmra.mxu0 %v1106
  %v2577 = vpop.f32.mrf.mxu0
  %v2578 = vadd.f32 %v2353, %v2577
  %v2579 = vpop.f32.mrf.mxu0
  %v2580 = vpop.f32.mrf.mxu0
  %v2581 = vadd.f32 %v2356, %v2580
  %v2582 = vpop.f32.mrf.mxu0
  %2583 = vmatprep.mubr.bf16.mxu0 %v1115
  %2584 = vmatmul.mubr.bf16.gmra.mxu0 %v1114
  %v2585 = vpop.f32.mrf.mxu0
  %v2586 = vadd.f32 %v2361, %v2585
  %v2587 = vpop.f32.mrf.mxu0
  %v2588 = vpop.f32.mrf.mxu0
  %v2589 = vadd.f32 %v2364, %v2588
  %v2590 = vpop.f32.mrf.mxu0
  %2591 = vmatprep.mubr.bf16.mxu0 %v1123
  %2592 = vmatmul.mubr.bf16.gmra.mxu0 %v1122
  %v2593 = vpop.f32.mrf.mxu0
  %v2594 = vadd.f32 %v2369, %v2593
  %v2595 = vpop.f32.mrf.mxu0
  %v2596 = vpop.f32.mrf.mxu0
  %v2597 = vadd.f32 %v2372, %v2596
  %v2598 = vpop.f32.mrf.mxu0
  %2599 = vmatprep.mubr.bf16.mxu0 %v1131
  %2600 = vmatmul.mubr.bf16.gmra.mxu0 %v1130
  %v2601 = vpop.f32.mrf.mxu0
  %v2602 = vadd.f32 %v2377, %v2601
  %v2603 = vpop.f32.mrf.mxu0
  %v2604 = vpop.f32.mrf.mxu0
  %v2605 = vadd.f32 %v2380, %v2604
  %v2606 = vpop.f32.mrf.mxu0
  %2607 = vmatprep.mubr.bf16.mxu0 %v1139
  %2608 = vmatmul.mubr.bf16.gmra.mxu0 %v1138
  %v2609 = vpop.f32.mrf.mxu0
  %v2610 = vadd.f32 %v2385, %v2609
  %v2611 = vpop.f32.mrf.mxu0
  %v2612 = vpop.f32.mrf.mxu0
  %v2613 = vadd.f32 %v2388, %v2612
  %v2614 = vpop.f32.mrf.mxu0
  %2615 = vdwg.mxu0
  %v2616 = vmax.f32 %v2426, 0.0
  %v2617 = vmax.f32 %v2429, 0.0
  %v2618 = vmax.f32 %v2434, 0.0
  %v2619 = vmax.f32 %v2437, 0.0
  %v2620 = vmax.f32 %v2442, 0.0
  %v2621 = vmax.f32 %v2445, 0.0
  %v2622 = vmax.f32 %v2450, 0.0
  %v2623 = vmax.f32 %v2453, 0.0
  %v2624 = vmax.f32 %v2458, 0.0
  %v2625 = vmax.f32 %v2461, 0.0
  %v2626 = vmax.f32 %v2466, 0.0
  %v2627 = vmax.f32 %v2469, 0.0
  %v2628 = vmax.f32 %v2474, 0.0
  %v2629 = vmax.f32 %v2477, 0.0
  %v2630 = vmax.f32 %v2482, 0.0
  %v2631 = vmax.f32 %v2485, 0.0
  %v2632 = vmax.f32 %v2490, 0.0
  %v2633 = vmax.f32 %v2493, 0.0
  %v2634 = vmax.f32 %v2498, 0.0
  %v2635 = vmax.f32 %v2501, 0.0
  %v2636 = vmax.f32 %v2506, 0.0
  %v2637 = vmax.f32 %v2509, 0.0
  %v2638 = vmax.f32 %v2514, 0.0
  %v2639 = vmax.f32 %v2517, 0.0
  %v2640 = vmax.f32 %v2522, 0.0
  %v2641 = vmax.f32 %v2525, 0.0
  %v2642 = vmax.f32 %v2530, 0.0
  %v2643 = vmax.f32 %v2533, 0.0
  %v2644 = vmax.f32 %v2538, 0.0
  %v2645 = vmax.f32 %v2541, 0.0
  %v2646 = vmax.f32 %v2546, 0.0
  %v2647 = vmax.f32 %v2549, 0.0
  %v2648 = vmax.f32 %v2554, 0.0
  %v2649 = vmax.f32 %v2557, 0.0
  %v2650 = vmax.f32 %v2562, 0.0
  %v2651 = vmax.f32 %v2565, 0.0
  %v2652 = vmax.f32 %v2570, 0.0
  %v2653 = vmax.f32 %v2573, 0.0
  %v2654 = vmax.f32 %v2578, 0.0
  %v2655 = vmax.f32 %v2581, 0.0
  %v2656 = vmax.f32 %v2586, 0.0
  %v2657 = vmax.f32 %v2589, 0.0
  %v2658 = vmax.f32 %v2594, 0.0
  %v2659 = vmax.f32 %v2597, 0.0
  %v2660 = vmax.f32 %v2602, 0.0
  %v2661 = vmax.f32 %v2605, 0.0
  %v2662 = vmax.f32 %v2610, 0.0
  %v2663 = vmax.f32 %v2613, 0.0
  %v2664 = vpack.c.bf16 %v2617, %v2616
  %v2665 = vpack.c.bf16 %v2619, %v2618
  %v2666 = vpack.c.bf16 %v2621, %v2620
  %v2667 = vpack.c.bf16 %v2623, %v2622
  %v2668 = vpack.c.bf16 %v2625, %v2624
  %v2669 = vpack.c.bf16 %v2627, %v2626
  %v2670 = vpack.c.bf16 %v2629, %v2628
  %v2671 = vpack.c.bf16 %v2631, %v2630
  %v2672 = vpack.c.bf16 %v2633, %v2632
  %v2673 = vpack.c.bf16 %v2635, %v2634
  %v2674 = vpack.c.bf16 %v2637, %v2636
  %v2675 = vpack.c.bf16 %v2639, %v2638
  %v2676 = vpack.c.bf16 %v2641, %v2640
  %v2677 = vpack.c.bf16 %v2643, %v2642
  %v2678 = vpack.c.bf16 %v2645, %v2644
  %v2679 = vpack.c.bf16 %v2647, %v2646
  %v2680 = vpack.c.bf16 %v2649, %v2648
  %v2681 = vpack.c.bf16 %v2651, %v2650
  %v2682 = vpack.c.bf16 %v2653, %v2652
  %v2683 = vpack.c.bf16 %v2655, %v2654
  %v2684 = vpack.c.bf16 %v2657, %v2656
  %v2685 = vpack.c.bf16 %v2659, %v2658
  %v2686 = vpack.c.bf16 %v2661, %v2660
  %v2687 = vpack.c.bf16 %v2663, %v2662
  %v2712 = vunpack.c.l.b16 %v2664
  %v2713 = vunpack.c.h.b16 %v2664
  %v2714 = vunpack.c.l.b16 %v2665
  %v2715 = vunpack.c.h.b16 %v2665
  %v2716 = vunpack.c.l.b16 %v2666
  %v2717 = vunpack.c.h.b16 %v2666
  %v2718 = vunpack.c.l.b16 %v2667
  %v2719 = vunpack.c.h.b16 %v2667
  %v2720 = vunpack.c.l.b16 %v2668
  %v2721 = vunpack.c.h.b16 %v2668
  %v2722 = vunpack.c.l.b16 %v2669
  %v2723 = vunpack.c.h.b16 %v2669
  %v2724 = vunpack.c.l.b16 %v2670
  %v2725 = vunpack.c.h.b16 %v2670
  %v2726 = vunpack.c.l.b16 %v2671
  %v2727 = vunpack.c.h.b16 %v2671
  %v2728 = vunpack.c.l.b16 %v2672
  %v2729 = vunpack.c.h.b16 %v2672
  %v2730 = vunpack.c.l.b16 %v2673
  %v2731 = vunpack.c.h.b16 %v2673
  %v2732 = vunpack.c.l.b16 %v2674
  %v2733 = vunpack.c.h.b16 %v2674
  %v2734 = vunpack.c.l.b16 %v2675
  %v2735 = vunpack.c.h.b16 %v2675
  %v2736 = vunpack.c.l.b16 %v2676
  %v2737 = vunpack.c.h.b16 %v2676
  %v2738 = vunpack.c.l.b16 %v2677
  %v2739 = vunpack.c.h.b16 %v2677
  %v2740 = vunpack.c.l.b16 %v2678
  %v2741 = vunpack.c.h.b16 %v2678
  %v2742 = vunpack.c.l.b16 %v2679
  %v2743 = vunpack.c.h.b16 %v2679
  %v2744 = vunpack.c.l.b16 %v2680
  %v2745 = vunpack.c.h.b16 %v2680
  %v2746 = vunpack.c.l.b16 %v2681
  %v2747 = vunpack.c.h.b16 %v2681
  %v2748 = vunpack.c.l.b16 %v2682
  %v2749 = vunpack.c.h.b16 %v2682
  %v2750 = vunpack.c.l.b16 %v2683
  %v2751 = vunpack.c.h.b16 %v2683
  %v2752 = vunpack.c.l.b16 %v2684
  %v2753 = vunpack.c.h.b16 %v2684
  %v2754 = vunpack.c.l.b16 %v2685
  %v2755 = vunpack.c.h.b16 %v2685
  %v2756 = vunpack.c.l.b16 %v2686
  %v2757 = vunpack.c.h.b16 %v2686
  %v2758 = vunpack.c.l.b16 %v2687
  %v2759 = vunpack.c.h.b16 %v2687
  %v2760 = vpack.c.b16 %v2712, %v2712
  %v2761 = vpack.c.b16 %v2713, %v2713
  %v2762 = vpack.c.b16 %v2714, %v2714
  %v2763 = vpack.c.b16 %v2715, %v2715
  %v2764 = vpack.c.b16 %v2716, %v2716
  %v2765 = vpack.c.b16 %v2717, %v2717
  %v2766 = vpack.c.b16 %v2718, %v2718
  %v2767 = vpack.c.b16 %v2719, %v2719
  %v2768 = vpack.c.b16 %v2720, %v2720
  %v2769 = vpack.c.b16 %v2721, %v2721
  %v2770 = vpack.c.b16 %v2722, %v2722
  %v2771 = vpack.c.b16 %v2723, %v2723
  %v2772 = vpack.c.b16 %v2724, %v2724
  %v2773 = vpack.c.b16 %v2725, %v2725
  %v2774 = vpack.c.b16 %v2726, %v2726
  %v2775 = vpack.c.b16 %v2727, %v2727
  %v2776 = vpack.c.b16 %v2728, %v2728
  %v2777 = vpack.c.b16 %v2729, %v2729
  %v2778 = vpack.c.b16 %v2730, %v2730
  %v2779 = vpack.c.b16 %v2731, %v2731
  %v2780 = vpack.c.b16 %v2732, %v2732
  %v2781 = vpack.c.b16 %v2733, %v2733
  %v2782 = vpack.c.b16 %v2734, %v2734
  %v2783 = vpack.c.b16 %v2735, %v2735
  %v2784 = vpack.c.b16 %v2736, %v2736
  %v2785 = vpack.c.b16 %v2737, %v2737
  %v2786 = vpack.c.b16 %v2738, %v2738
  %v2787 = vpack.c.b16 %v2739, %v2739
  %v2788 = vpack.c.b16 %v2740, %v2740
  %v2789 = vpack.c.b16 %v2741, %v2741
  %v2790 = vpack.c.b16 %v2742, %v2742
  %v2791 = vpack.c.b16 %v2743, %v2743
  %v2792 = vpack.c.b16 %v2744, %v2744
  %v2793 = vpack.c.b16 %v2745, %v2745
  %v2794 = vpack.c.b16 %v2746, %v2746
  %v2795 = vpack.c.b16 %v2747, %v2747
  %v2796 = vpack.c.b16 %v2748, %v2748
  %v2797 = vpack.c.b16 %v2749, %v2749
  %v2798 = vpack.c.b16 %v2750, %v2750
  %v2799 = vpack.c.b16 %v2751, %v2751
  %v2800 = vpack.c.b16 %v2752, %v2752
  %v2801 = vpack.c.b16 %v2753, %v2753
  %v2802 = vpack.c.b16 %v2754, %v2754
  %v2803 = vpack.c.b16 %v2755, %v2755
  %v2804 = vpack.c.b16 %v2756, %v2756
  %v2805 = vpack.c.b16 %v2757, %v2757
  %v2806 = vpack.c.b16 %v2758, %v2758
  %v2807 = vpack.c.b16 %v2759, %v2759
  %2856 = vst [vmem:[#allocation2] sm:$0xf] %v2760
  %2857 = vst [vmem:[#allocation2 + $0x4] sm:$0xf] %v2761
  %2858 = vst [vmem:[#allocation2 + $0x8] sm:$0xf] %v2762
  %2859 = vst [vmem:[#allocation2 + $0xc] sm:$0xf] %v2763
  %2860 = vst [vmem:[#allocation2 + $0x10] sm:$0xf] %v2764
  %2861 = vst [vmem:[#allocation2 + $0x14] sm:$0xf] %v2765
  %2862 = vst [vmem:[#allocation2 + $0x18] sm:$0xf] %v2766
  %2863 = vst [vmem:[#allocation2 + $0x1c] sm:$0xf] %v2767
  %2864 = vst [vmem:[#allocation2 + $0x20] sm:$0xf] %v2768
  %2865 = vst [vmem:[#allocation2 + $0x24] sm:$0xf] %v2769
  %2866 = vst [vmem:[#allocation2 + $0x28] sm:$0xf] %v2770
  %2867 = vst [vmem:[#allocation2 + $0x2c] sm:$0xf] %v2771
  %2868 = vst [vmem:[#allocation2 + $0x30] sm:$0xf] %v2772
  %2869 = vst [vmem:[#allocation2 + $0x34] sm:$0xf] %v2773
  %2870 = vst [vmem:[#allocation2 + $0x38] sm:$0xf] %v2774
  %2871 = vst [vmem:[#allocation2 + $0x3c] sm:$0xf] %v2775
  %2872 = vst [vmem:[#allocation2 + $0x40] sm:$0xf] %v2776
  %2873 = vst [vmem:[#allocation2 + $0x44] sm:$0xf] %v2777
  %2874 = vst [vmem:[#allocation2 + $0x48] sm:$0xf] %v2778
  %2875 = vst [vmem:[#allocation2 + $0x4c] sm:$0xf] %v2779
  %2876 = vst [vmem:[#allocation2 + $0x50] sm:$0xf] %v2780
  %2877 = vst [vmem:[#allocation2 + $0x54] sm:$0xf] %v2781
  %2878 = vst [vmem:[#allocation2 + $0x58] sm:$0xf] %v2782
  %2879 = vst [vmem:[#allocation2 + $0x5c] sm:$0xf] %v2783
  %2880 = vst [vmem:[#allocation2 + $0x60] sm:$0xf] %v2784
  %2881 = vst [vmem:[#allocation2 + $0x64] sm:$0xf] %v2785
  %2882 = vst [vmem:[#allocation2 + $0x68] sm:$0xf] %v2786
  %2883 = vst [vmem:[#allocation2 + $0x6c] sm:$0xf] %v2787
  %2884 = vst [vmem:[#allocation2 + $0x70] sm:$0xf] %v2788
  %2885 = vst [vmem:[#allocation2 + $0x74] sm:$0xf] %v2789
  %2886 = vst [vmem:[#allocation2 + $0x78] sm:$0xf] %v2790
  %2887 = vst [vmem:[#allocation2 + $0x7c] sm:$0xf] %v2791
  %2888 = vst [vmem:[#allocation2 + $0x80] sm:$0xf] %v2792
  %2889 = vst [vmem:[#allocation2 + $0x84] sm:$0xf] %v2793
  %2890 = vst [vmem:[#allocation2 + $0x88] sm:$0xf] %v2794
  %2891 = vst [vmem:[#allocation2 + $0x8c] sm:$0xf] %v2795
  %2892 = vst [vmem:[#allocation2 + $0x90] sm:$0xf] %v2796
  %2893 = vst [vmem:[#allocation2 + $0x94] sm:$0xf] %v2797
  %2894 = vst [vmem:[#allocation2 + $0x98] sm:$0xf] %v2798
  %2895 = vst [vmem:[#allocation2 + $0x9c] sm:$0xf] %v2799
  %2896 = vst [vmem:[#allocation2 + $0xa0] sm:$0xf] %v2800
  %2897 = vst [vmem:[#allocation2 + $0xa4] sm:$0xf] %v2801
  %2898 = vst [vmem:[#allocation2 + $0xa8] sm:$0xf] %v2802
  %2899 = vst [vmem:[#allocation2 + $0xac] sm:$0xf] %v2803
  %2900 = vst [vmem:[#allocation2 + $0xb0] sm:$0xf] %v2804
  %2901 = vst [vmem:[#allocation2 + $0xb4] sm:$0xf] %v2805
  %2902 = vst [vmem:[#allocation2 + $0xb8] sm:$0xf] %v2806
  %2903 = vst [vmem:[#allocation2 + $0xbc] sm:$0xf] %v2807
  %v2904 = vld [vmem:[#allocation2] sm:$0xf]
  %v2905 = vld [vmem:[#allocation2 + $0x4] sm:$0xf]
  %v2906 = vld [vmem:[#allocation2 + $0x8] sm:$0xf]
  %v2907 = vld [vmem:[#allocation2 + $0xc] sm:$0xf]
  %v2908 = vld [vmem:[#allocation2 + $0x10] sm:$0xf]
  %v2909 = vld [vmem:[#allocation2 + $0x14] sm:$0xf]
  %v2910 = vld [vmem:[#allocation2 + $0x18] sm:$0xf]
  %v2911 = vld [vmem:[#allocation2 + $0x1c] sm:$0xf]
  %v2912 = vld [vmem:[#allocation2 + $0x20] sm:$0xf]
  %v2913 = vld [vmem:[#allocation2 + $0x24] sm:$0xf]
  %v2914 = vld [vmem:[%s4] sm:$0xf]
  %v2915 = vld [vmem:[%s4 + $0x4] sm:$0xf]
  %v2916 = vld [vmem:[%s4 + $0x8] sm:$0xf]
  %v2917 = vld [vmem:[%s4 + $0xc] sm:$0xf]
  %v2918 = vld [vmem:[%s4 + $0x10] sm:$0xf]
  %v2919 = vld [vmem:[%s4 + $0x14] sm:$0xf]
  %v2920 = vld [vmem:[%s4 + $0x18] sm:$0xf]
  %v2921 = vld [vmem:[%s4 + $0x1c] sm:$0xf]
  %v2922 = vld [vmem:[%s4 + $0x20] sm:$0xf]
  %v2923 = vld [vmem:[%s4 + $0x24] sm:$0xf]
  %v2924 = vld [vmem:[%s4 + $0x28] sm:$0xf]
  %v2925 = vld [vmem:[%s4 + $0x2c] sm:$0xf]
  %v2926 = vld [vmem:[%s4 + $0x30] sm:$0xf]
  %v2927 = vld [vmem:[%s4 + $0x34] sm:$0xf]
  %v2928 = vld [vmem:[%s4 + $0x38] sm:$0xf]
  %v2929 = vld [vmem:[%s4 + $0x3c] sm:$0xf]
  %v2930 = vld [vmem:[#allocation2 + $0x30] sm:$0xf]
  %v2931 = vld [vmem:[#allocation2 + $0x34] sm:$0xf]
  %v2932 = vld [vmem:[#allocation2 + $0x38] sm:$0xf]
  %v2933 = vld [vmem:[#allocation2 + $0x3c] sm:$0xf]
  %v2934 = vld [vmem:[#allocation2 + $0x40] sm:$0xf]
  %v2935 = vld [vmem:[#allocation2 + $0x44] sm:$0xf]
  %v2936 = vld [vmem:[#allocation2 + $0x48] sm:$0xf]
  %v2937 = vld [vmem:[#allocation2 + $0x4c] sm:$0xf]
  %v2938 = vld [vmem:[#allocation2 + $0x50] sm:$0xf]
  %v2939 = vld [vmem:[#allocation2 + $0x54] sm:$0xf]
  %s2940 = scalar_lea.vmem %s4, 64
  %v2941 = vld [vmem:[%s2940] sm:$0xf]
  %v2942 = vld [vmem:[%s2940 + $0x4] sm:$0xf]
  %v2943 = vld [vmem:[%s2940 + $0x8] sm:$0xf]
  %v2944 = vld [vmem:[%s2940 + $0xc] sm:$0xf]
  %v2945 = vld [vmem:[%s2940 + $0x10] sm:$0xf]
  %v2946 = vld [vmem:[%s2940 + $0x14] sm:$0xf]
  %v2947 = vld [vmem:[%s2940 + $0x18] sm:$0xf]
  %v2948 = vld [vmem:[%s2940 + $0x1c] sm:$0xf]
  %v2949 = vld [vmem:[%s2940 + $0x20] sm:$0xf]
  %v2950 = vld [vmem:[%s2940 + $0x24] sm:$0xf]
  %v2951 = vld [vmem:[%s2940 + $0x28] sm:$0xf]
  %v2952 = vld [vmem:[%s2940 + $0x2c] sm:$0xf]
  %v2953 = vld [vmem:[%s2940 + $0x30] sm:$0xf]
  %v2954 = vld [vmem:[%s2940 + $0x34] sm:$0xf]
  %v2955 = vld [vmem:[%s2940 + $0x38] sm:$0xf]
  %v2956 = vld [vmem:[%s2940 + $0x3c] sm:$0xf]
  %v2967 = vunpack.c.l.b16 %v2930
  %v2968 = vunpack.c.l.b16 %v2931
  %v2969 = vunpack.c.l.b16 %v2932
  %v2970 = vunpack.c.l.b16 %v2933
  %v2971 = vunpack.c.l.b16 %v2934
  %v2972 = vunpack.c.l.b16 %v2935
  %v2973 = vunpack.c.l.b16 %v2936
  %v2974 = vunpack.c.l.b16 %v2937
  %v2975 = vunpack.c.l.b16 %v2938
  %v2976 = vunpack.c.l.b16 %v2939
  %v2977 = vpack.c.b16 %v2968, %v2967
  %v2978 = vpack.c.b16 %v2970, %v2969
  %v2979 = vpack.c.b16 %v2972, %v2971
  %v2980 = vpack.c.b16 %v2974, %v2973
  %v2981 = vpack.c.b16 %v2976, %v2975
  %v3003 = vunpack.c.l.b16 %v2941
  %v3004 = vunpack.c.l.b16 %v2942
  %v3005 = vunpack.c.l.b16 %v2943
  %v3006 = vunpack.c.l.b16 %v2944
  %v3007 = vunpack.c.l.b16 %v2945
  %v3008 = vunpack.c.l.b16 %v2946
  %v3009 = vunpack.c.l.b16 %v2947
  %v3010 = vunpack.c.l.b16 %v2948
  %v3011 = vunpack.c.l.b16 %v2949
  %v3012 = vunpack.c.l.b16 %v2950
  %v3013 = vunpack.c.l.b16 %v2951
  %v3014 = vunpack.c.l.b16 %v2952
  %v3015 = vunpack.c.l.b16 %v2953
  %v3016 = vunpack.c.l.b16 %v2954
  %v3017 = vunpack.c.l.b16 %v2955
  %v3018 = vunpack.c.l.b16 %v2956
  %v3019 = vpack.c.b16 %v3004, %v3003
  %v3020 = vpack.c.b16 %v3006, %v3005
  %v3021 = vpack.c.b16 %v3008, %v3007
  %v3022 = vpack.c.b16 %v3010, %v3009
  %v3023 = vpack.c.b16 %v3012, %v3011
  %v3024 = vpack.c.b16 %v3014, %v3013
  %v3025 = vpack.c.b16 %v3016, %v3015
  %v3026 = vpack.c.b16 %v3018, %v3017
  %3035 = vmatprep.subr.bf16.mxu0 0
  %3036 = vmatpush1.bf16.msra.mxu0 %v3026
  %3037 = vmatprep.subr.bf16.mxu0 0
  %3038 = vmatpush1.bf16.msra.mxu0 %v3025
  %3039 = vmatprep.subr.bf16.mxu0 0
  %3040 = vmatpush1.bf16.msra.mxu0 %v3024
  %3041 = vmatprep.subr.bf16.mxu0 0
  %3042 = vmatpush1.bf16.msra.mxu0 %v3023
  %3043 = vmatprep.subr.bf16.mxu0 0
  %3044 = vmatpush1.bf16.msra.mxu0 %v3022
  %3045 = vmatprep.subr.bf16.mxu0 0
  %3046 = vmatpush1.bf16.msra.mxu0 %v3021
  %3047 = vmatprep.subr.bf16.mxu0 0
  %3048 = vmatpush1.bf16.msra.mxu0 %v3020
  %3049 = vmatprep.subr.bf16.mxu0 0
  %3050 = vmatpush1.bf16.msra.mxu0 %v3019
  %3051 = vmatprep.subr.bf16.mxu0 0
  %3052 = vmatpush2.bf16.msra.mxu0 0
  %3053 = vmatprep.subr.bf16.mxu0 0
  %3054 = vmatpush2.bf16.msra.mxu0 0
  %3055 = vmatprep.subr.bf16.mxu0 0
  %3056 = vmatpush2.bf16.msra.mxu0 0
  %3057 = vmatprep.subr.bf16.mxu0 0
  %3058 = vmatpush2.bf16.msra.mxu0 0
  %3059 = vmatprep.subr.bf16.mxu0 0
  %3060 = vmatpush2.bf16.msra.mxu0 0
  %3061 = vmatprep.subr.bf16.mxu0 0
  %3062 = vmatpush2.bf16.msra.mxu0 0
  %3063 = vmatprep.subr.bf16.mxu0 0
  %3064 = vmatpush2.bf16.msra.mxu0 0
  %3065 = vmatprep.subr.bf16.mxu0 0
  %3066 = vmatpush2.bf16.msra.mxu0 0
  %3067 = vmatprep.mubr.bf16.mxu0 0
  %3068 = vmatmul.mubr.bf16.gmra.mxu0 %v2977
  %v3069 = vpop.f32.mrf.mxu0
  %v3070 = vadd.f32 0.0, %v3069
  %v3071 = vpop.f32.mrf.mxu0
  %v3072 = vpop.f32.mrf.mxu0
  %v3073 = vadd.f32 0.0, %v3072
  %v3074 = vpop.f32.mrf.mxu0
  %3075 = vmatprep.mubr.bf16.mxu0 0
  %3076 = vmatmul.mubr.bf16.gmra.mxu0 %v2978
  %v3077 = vpop.f32.mrf.mxu0
  %v3078 = vadd.f32 0.0, %v3077
  %v3079 = vpop.f32.mrf.mxu0
  %v3080 = vpop.f32.mrf.mxu0
  %v3081 = vadd.f32 0.0, %v3080
  %v3082 = vpop.f32.mrf.mxu0
  %3083 = vmatprep.mubr.bf16.mxu0 0
  %3084 = vmatmul.mubr.bf16.gmra.mxu0 %v2979
  %v3085 = vpop.f32.mrf.mxu0
  %v3086 = vadd.f32 0.0, %v3085
  %v3087 = vpop.f32.mrf.mxu0
  %v3088 = vpop.f32.mrf.mxu0
  %v3089 = vadd.f32 0.0, %v3088
  %v3090 = vpop.f32.mrf.mxu0
  %3091 = vmatprep.mubr.bf16.mxu0 0
  %3092 = vmatmul.mubr.bf16.gmra.mxu0 %v2980
  %v3093 = vpop.f32.mrf.mxu0
  %v3094 = vadd.f32 0.0, %v3093
  %v3095 = vpop.f32.mrf.mxu0
  %v3096 = vpop.f32.mrf.mxu0
  %v3097 = vadd.f32 0.0, %v3096
  %v3098 = vpop.f32.mrf.mxu0
  %3099 = vmatprep.mubr.bf16.mxu0 0
  %3100 = vmatmul.mubr.bf16.gmra.mxu0 %v2981
  %v3101 = vpop.f32.mrf.mxu0
  %v3102 = vadd.f32 0.0, %v3101
  %v3103 = vpop.f32.mrf.mxu0
  %v3104 = vpop.f32.mrf.mxu0
  %v3105 = vadd.f32 0.0, %v3104
  %v3106 = vpop.f32.mrf.mxu0
  %3107 = vdwg.mxu0
  %v3118 = vunpack.c.l.b16 %v2904
  %v3119 = vunpack.c.l.b16 %v2905
  %v3120 = vunpack.c.l.b16 %v2906
  %v3121 = vunpack.c.l.b16 %v2907
  %v3122 = vunpack.c.l.b16 %v2908
  %v3123 = vunpack.c.l.b16 %v2909
  %v3124 = vunpack.c.l.b16 %v2910
  %v3125 = vunpack.c.l.b16 %v2911
  %v3126 = vunpack.c.l.b16 %v2912
  %v3127 = vunpack.c.l.b16 %v2913
  %v3128 = vpack.c.b16 %v3119, %v3118
  %v3129 = vpack.c.b16 %v3121, %v3120
  %v3130 = vpack.c.b16 %v3123, %v3122
  %v3131 = vpack.c.b16 %v3125, %v3124
  %v3132 = vpack.c.b16 %v3127, %v3126
  %v3154 = vunpack.c.l.b16 %v2914
  %v3155 = vunpack.c.l.b16 %v2915
  %v3156 = vunpack.c.l.b16 %v2916
  %v3157 = vunpack.c.l.b16 %v2917
  %v3158 = vunpack.c.l.b16 %v2918
  %v3159 = vunpack.c.l.b16 %v2919
  %v3160 = vunpack.c.l.b16 %v2920
  %v3161 = vunpack.c.l.b16 %v2921
  %v3162 = vunpack.c.l.b16 %v2922
  %v3163 = vunpack.c.l.b16 %v2923
  %v3164 = vunpack.c.l.b16 %v2924
  %v3165 = vunpack.c.l.b16 %v2925
  %v3166 = vunpack.c.l.b16 %v2926
  %v3167 = vunpack.c.l.b16 %v2927
  %v3168 = vunpack.c.l.b16 %v2928
  %v3169 = vunpack.c.l.b16 %v2929
  %v3170 = vpack.c.b16 %v3155, %v3154
  %v3171 = vpack.c.b16 %v3157, %v3156
  %v3172 = vpack.c.b16 %v3159, %v3158
  %v3173 = vpack.c.b16 %v3161, %v3160
  %v3174 = vpack.c.b16 %v3163, %v3162
  %v3175 = vpack.c.b16 %v3165, %v3164
  %v3176 = vpack.c.b16 %v3167, %v3166
  %v3177 = vpack.c.b16 %v3169, %v3168
  %3186 = vmatprep.subr.bf16.mxu0 0
  %3187 = vmatpush1.bf16.msra.mxu0 %v3177
  %3188 = vmatprep.subr.bf16.mxu0 0
  %3189 = vmatpush1.bf16.msra.mxu0 %v3176
  %3190 = vmatprep.subr.bf16.mxu0 0
  %3191 = vmatpush1.bf16.msra.mxu0 %v3175
  %3192 = vmatprep.subr.bf16.mxu0 0
  %3193 = vmatpush1.bf16.msra.mxu0 %v3174
  %3194 = vmatprep.subr.bf16.mxu0 0
  %3195 = vmatpush1.bf16.msra.mxu0 %v3173
  %3196 = vmatprep.subr.bf16.mxu0 0
  %3197 = vmatpush1.bf16.msra.mxu0 %v3172
  %3198 = vmatprep.subr.bf16.mxu0 0
  %3199 = vmatpush1.bf16.msra.mxu0 %v3171
  %3200 = vmatprep.subr.bf16.mxu0 0
  %3201 = vmatpush1.bf16.msra.mxu0 %v3170
  %3202 = vmatprep.subr.bf16.mxu0 0
  %3203 = vmatpush2.bf16.msra.mxu0 0
  %3204 = vmatprep.subr.bf16.mxu0 0
  %3205 = vmatpush2.bf16.msra.mxu0 0
  %3206 = vmatprep.subr.bf16.mxu0 0
  %3207 = vmatpush2.bf16.msra.mxu0 0
  %3208 = vmatprep.subr.bf16.mxu0 0
  %3209 = vmatpush2.bf16.msra.mxu0 0
  %3210 = vmatprep.subr.bf16.mxu0 0
  %3211 = vmatpush2.bf16.msra.mxu0 0
  %3212 = vmatprep.subr.bf16.mxu0 0
  %3213 = vmatpush2.bf16.msra.mxu0 0
  %3214 = vmatprep.subr.bf16.mxu0 0
  %3215 = vmatpush2.bf16.msra.mxu0 0
  %3216 = vmatprep.subr.bf16.mxu0 0
  %3217 = vmatpush2.bf16.msra.mxu0 0
  %3218 = vmatprep.mubr.bf16.mxu0 0
  %3219 = vmatmul.mubr.bf16.gmra.mxu0 %v3128
  %v3220 = vpop.f32.mrf.mxu0
  %v3221 = vadd.f32 %v3070, %v3220
  %v3222 = vpop.f32.mrf.mxu0
  %v3223 = vpop.f32.mrf.mxu0
  %v3224 = vadd.f32 %v3073, %v3223
  %v3225 = vpop.f32.mrf.mxu0
  %3226 = vmatprep.mubr.bf16.mxu0 0
  %3227 = vmatmul.mubr.bf16.gmra.mxu0 %v3129
  %v3228 = vpop.f32.mrf.mxu0
  %v3229 = vadd.f32 %v3078, %v3228
  %v3230 = vpop.f32.mrf.mxu0
  %v3231 = vpop.f32.mrf.mxu0
  %v3232 = vadd.f32 %v3081, %v3231
  %v3233 = vpop.f32.mrf.mxu0
  %3234 = vmatprep.mubr.bf16.mxu0 0
  %3235 = vmatmul.mubr.bf16.gmra.mxu0 %v3130
  %v3236 = vpop.f32.mrf.mxu0
  %v3237 = vadd.f32 %v3086, %v3236
  %v3238 = vpop.f32.mrf.mxu0
  %v3239 = vpop.f32.mrf.mxu0
  %v3240 = vadd.f32 %v3089, %v3239
  %v3241 = vpop.f32.mrf.mxu0
  %3242 = vmatprep.mubr.bf16.mxu0 0
  %3243 = vmatmul.mubr.bf16.gmra.mxu0 %v3131
  %v3244 = vpop.f32.mrf.mxu0
  %v3245 = vadd.f32 %v3094, %v3244
  %v3246 = vpop.f32.mrf.mxu0
  %v3247 = vpop.f32.mrf.mxu0
  %v3248 = vadd.f32 %v3097, %v3247
  %v3249 = vpop.f32.mrf.mxu0
  %3250 = vmatprep.mubr.bf16.mxu0 0
  %3251 = vmatmul.mubr.bf16.gmra.mxu0 %v3132
  %v3252 = vpop.f32.mrf.mxu0
  %v3253 = vadd.f32 %v3102, %v3252
  %v3254 = vpop.f32.mrf.mxu0
  %v3255 = vpop.f32.mrf.mxu0
  %v3256 = vadd.f32 %v3105, %v3255
  %v3257 = vpop.f32.mrf.mxu0
  %3258 = vdwg.mxu0
  %v3259 = vld [vmem:[#allocation2 + $0x60] sm:$0xf]
  %v3260 = vld [vmem:[#allocation2 + $0x64] sm:$0xf]
  %v3261 = vld [vmem:[#allocation2 + $0x68] sm:$0xf]
  %v3262 = vld [vmem:[#allocation2 + $0x6c] sm:$0xf]
  %v3263 = vld [vmem:[#allocation2 + $0x70] sm:$0xf]
  %v3264 = vld [vmem:[#allocation2 + $0x74] sm:$0xf]
  %v3265 = vld [vmem:[#allocation2 + $0x78] sm:$0xf]
  %v3266 = vld [vmem:[#allocation2 + $0x7c] sm:$0xf]
  %v3267 = vld [vmem:[#allocation2 + $0x80] sm:$0xf]
  %v3268 = vld [vmem:[#allocation2 + $0x84] sm:$0xf]
  %s3269 = scalar_lea.vmem %s4, 128
  %v3270 = vld [vmem:[%s3269] sm:$0xf]
  %v3271 = vld [vmem:[%s3269 + $0x4] sm:$0xf]
  %v3272 = vld [vmem:[%s3269 + $0x8] sm:$0xf]
  %v3273 = vld [vmem:[%s3269 + $0xc] sm:$0xf]
  %v3274 = vld [vmem:[%s3269 + $0x10] sm:$0xf]
  %v3275 = vld [vmem:[%s3269 + $0x14] sm:$0xf]
  %v3276 = vld [vmem:[%s3269 + $0x18] sm:$0xf]
  %v3277 = vld [vmem:[%s3269 + $0x1c] sm:$0xf]
  %v3278 = vld [vmem:[%s3269 + $0x20] sm:$0xf]
  %v3279 = vld [vmem:[%s3269 + $0x24] sm:$0xf]
  %v3280 = vld [vmem:[%s3269 + $0x28] sm:$0xf]
  %v3281 = vld [vmem:[%s3269 + $0x2c] sm:$0xf]
  %v3282 = vld [vmem:[%s3269 + $0x30] sm:$0xf]
  %v3283 = vld [vmem:[%s3269 + $0x34] sm:$0xf]
  %v3284 = vld [vmem:[%s3269 + $0x38] sm:$0xf]
  %v3285 = vld [vmem:[%s3269 + $0x3c] sm:$0xf]
  %v3296 = vunpack.c.l.b16 %v3259
  %v3297 = vunpack.c.l.b16 %v3260
  %v3298 = vunpack.c.l.b16 %v3261
  %v3299 = vunpack.c.l.b16 %v3262
  %v3300 = vunpack.c.l.b16 %v3263
  %v3301 = vunpack.c.l.b16 %v3264
  %v3302 = vunpack.c.l.b16 %v3265
  %v3303 = vunpack.c.l.b16 %v3266
  %v3304 = vunpack.c.l.b16 %v3267
  %v3305 = vunpack.c.l.b16 %v3268
  %v3306 = vpack.c.b16 %v3297, %v3296
  %v3307 = vpack.c.b16 %v3299, %v3298
  %v3308 = vpack.c.b16 %v3301, %v3300
  %v3309 = vpack.c.b16 %v3303, %v3302
  %v3310 = vpack.c.b16 %v3305, %v3304
  %v3332 = vunpack.c.l.b16 %v3270
  %v3333 = vunpack.c.l.b16 %v3271
  %v3334 = vunpack.c.l.b16 %v3272
  %v3335 = vunpack.c.l.b16 %v3273
  %v3336 = vunpack.c.l.b16 %v3274
  %v3337 = vunpack.c.l.b16 %v3275
  %v3338 = vunpack.c.l.b16 %v3276
  %v3339 = vunpack.c.l.b16 %v3277
  %v3340 = vunpack.c.l.b16 %v3278
  %v3341 = vunpack.c.l.b16 %v3279
  %v3342 = vunpack.c.l.b16 %v3280
  %v3343 = vunpack.c.l.b16 %v3281
  %v3344 = vunpack.c.l.b16 %v3282
  %v3345 = vunpack.c.l.b16 %v3283
  %v3346 = vunpack.c.l.b16 %v3284
  %v3347 = vunpack.c.l.b16 %v3285
  %v3348 = vpack.c.b16 %v3333, %v3332
  %v3349 = vpack.c.b16 %v3335, %v3334
  %v3350 = vpack.c.b16 %v3337, %v3336
  %v3351 = vpack.c.b16 %v3339, %v3338
  %v3352 = vpack.c.b16 %v3341, %v3340
  %v3353 = vpack.c.b16 %v3343, %v3342
  %v3354 = vpack.c.b16 %v3345, %v3344
  %v3355 = vpack.c.b16 %v3347, %v3346
  %3364 = vmatprep.subr.bf16.mxu0 0
  %3365 = vmatpush1.bf16.msra.mxu0 %v3355
  %3366 = vmatprep.subr.bf16.mxu0 0
  %3367 = vmatpush1.bf16.msra.mxu0 %v3354
  %3368 = vmatprep.subr.bf16.mxu0 0
  %3369 = vmatpush1.bf16.msra.mxu0 %v3353
  %3370 = vmatprep.subr.bf16.mxu0 0
  %3371 = vmatpush1.bf16.msra.mxu0 %v3352
  %3372 = vmatprep.subr.bf16.mxu0 0
  %3373 = vmatpush1.bf16.msra.mxu0 %v3351
  %3374 = vmatprep.subr.bf16.mxu0 0
  %3375 = vmatpush1.bf16.msra.mxu0 %v3350
  %3376 = vmatprep.subr.bf16.mxu0 0
  %3377 = vmatpush1.bf16.msra.mxu0 %v3349
  %3378 = vmatprep.subr.bf16.mxu0 0
  %3379 = vmatpush1.bf16.msra.mxu0 %v3348
  %3380 = vmatprep.subr.bf16.mxu0 0
  %3381 = vmatpush2.bf16.msra.mxu0 0
  %3382 = vmatprep.subr.bf16.mxu0 0
  %3383 = vmatpush2.bf16.msra.mxu0 0
  %3384 = vmatprep.subr.bf16.mxu0 0
  %3385 = vmatpush2.bf16.msra.mxu0 0
  %3386 = vmatprep.subr.bf16.mxu0 0
  %3387 = vmatpush2.bf16.msra.mxu0 0
  %3388 = vmatprep.subr.bf16.mxu0 0
  %3389 = vmatpush2.bf16.msra.mxu0 0
  %3390 = vmatprep.subr.bf16.mxu0 0
  %3391 = vmatpush2.bf16.msra.mxu0 0
  %3392 = vmatprep.subr.bf16.mxu0 0
  %3393 = vmatpush2.bf16.msra.mxu0 0
  %3394 = vmatprep.subr.bf16.mxu0 0
  %3395 = vmatpush2.bf16.msra.mxu0 0
  %3396 = vmatprep.mubr.bf16.mxu0 0
  %3397 = vmatmul.mubr.bf16.gmra.mxu0 %v3306
  %v3398 = vpop.f32.mrf.mxu0
  %v3399 = vadd.f32 0.0, %v3398
  %v3400 = vpop.f32.mrf.mxu0
  %v3401 = vpop.f32.mrf.mxu0
  %v3402 = vadd.f32 0.0, %v3401
  %v3403 = vpop.f32.mrf.mxu0
  %3404 = vmatprep.mubr.bf16.mxu0 0
  %3405 = vmatmul.mubr.bf16.gmra.mxu0 %v3307
  %v3406 = vpop.f32.mrf.mxu0
  %v3407 = vadd.f32 0.0, %v3406
  %v3408 = vpop.f32.mrf.mxu0
  %v3409 = vpop.f32.mrf.mxu0
  %v3410 = vadd.f32 0.0, %v3409
  %v3411 = vpop.f32.mrf.mxu0
  %3412 = vmatprep.mubr.bf16.mxu0 0
  %3413 = vmatmul.mubr.bf16.gmra.mxu0 %v3308
  %v3414 = vpop.f32.mrf.mxu0
  %v3415 = vadd.f32 0.0, %v3414
  %v3416 = vpop.f32.mrf.mxu0
  %v3417 = vpop.f32.mrf.mxu0
  %v3418 = vadd.f32 0.0, %v3417
  %v3419 = vpop.f32.mrf.mxu0
  %3420 = vmatprep.mubr.bf16.mxu0 0
  %3421 = vmatmul.mubr.bf16.gmra.mxu0 %v3309
  %v3422 = vpop.f32.mrf.mxu0
  %v3423 = vadd.f32 0.0, %v3422
  %v3424 = vpop.f32.mrf.mxu0
  %v3425 = vpop.f32.mrf.mxu0
  %v3426 = vadd.f32 0.0, %v3425
  %v3427 = vpop.f32.mrf.mxu0
  %3428 = vmatprep.mubr.bf16.mxu0 0
  %3429 = vmatmul.mubr.bf16.gmra.mxu0 %v3310
  %v3430 = vpop.f32.mrf.mxu0
  %v3431 = vadd.f32 0.0, %v3430
  %v3432 = vpop.f32.mrf.mxu0
  %v3433 = vpop.f32.mrf.mxu0
  %v3434 = vadd.f32 0.0, %v3433
  %v3435 = vpop.f32.mrf.mxu0
  %3436 = vdwg.mxu0
  %v3437 = vadd.f32 %v3221, %v3399
  %v3438 = vadd.f32 %v3224, %v3402
  %v3439 = vadd.f32 %v3229, %v3407
  %v3440 = vadd.f32 %v3232, %v3410
  %v3441 = vadd.f32 %v3237, %v3415
  %v3442 = vadd.f32 %v3240, %v3418
  %v3443 = vadd.f32 %v3245, %v3423
  %v3444 = vadd.f32 %v3248, %v3426
  %v3445 = vadd.f32 %v3253, %v3431
  %v3446 = vadd.f32 %v3256, %v3434
  %v3447 = vld [vmem:[#allocation2 + $0x90] sm:$0xf]
  %v3448 = vld [vmem:[#allocation2 + $0x94] sm:$0xf]
  %v3449 = vld [vmem:[#allocation2 + $0x98] sm:$0xf]
  %v3450 = vld [vmem:[#allocation2 + $0x9c] sm:$0xf]
  %v3451 = vld [vmem:[#allocation2 + $0xa0] sm:$0xf]
  %v3452 = vld [vmem:[#allocation2 + $0xa4] sm:$0xf]
  %v3453 = vld [vmem:[#allocation2 + $0xa8] sm:$0xf]
  %v3454 = vld [vmem:[#allocation2 + $0xac] sm:$0xf]
  %v3455 = vld [vmem:[#allocation2 + $0xb0] sm:$0xf]
  %v3456 = vld [vmem:[#allocation2 + $0xb4] sm:$0xf]
  %s3457 = scalar_lea.vmem %s4, 192
  %v3458 = vld [vmem:[%s3457] sm:$0xf]
  %v3459 = vld [vmem:[%s3457 + $0x4] sm:$0xf]
  %v3460 = vld [vmem:[%s3457 + $0x8] sm:$0xf]
  %v3461 = vld [vmem:[%s3457 + $0xc] sm:$0xf]
  %v3462 = vld [vmem:[%s3457 + $0x10] sm:$0xf]
  %v3463 = vld [vmem:[%s3457 + $0x14] sm:$0xf]
  %v3464 = vld [vmem:[%s3457 + $0x18] sm:$0xf]
  %v3465 = vld [vmem:[%s3457 + $0x1c] sm:$0xf]
  %v3466 = vld [vmem:[%s3457 + $0x20] sm:$0xf]
  %v3467 = vld [vmem:[%s3457 + $0x24] sm:$0xf]
  %v3468 = vld [vmem:[%s3457 + $0x28] sm:$0xf]
  %v3469 = vld [vmem:[%s3457 + $0x2c] sm:$0xf]
  %v3470 = vld [vmem:[%s3457 + $0x30] sm:$0xf]
  %v3471 = vld [vmem:[%s3457 + $0x34] sm:$0xf]
  %v3472 = vld [vmem:[%s3457 + $0x38] sm:$0xf]
  %v3473 = vld [vmem:[%s3457 + $0x3c] sm:$0xf]
  %v3484 = vunpack.c.l.b16 %v3447
  %v3485 = vunpack.c.l.b16 %v3448
  %v3486 = vunpack.c.l.b16 %v3449
  %v3487 = vunpack.c.l.b16 %v3450
  %v3488 = vunpack.c.l.b16 %v3451
  %v3489 = vunpack.c.l.b16 %v3452
  %v3490 = vunpack.c.l.b16 %v3453
  %v3491 = vunpack.c.l.b16 %v3454
  %v3492 = vunpack.c.l.b16 %v3455
  %v3493 = vunpack.c.l.b16 %v3456
  %v3494 = vpack.c.b16 %v3485, %v3484
  %v3495 = vpack.c.b16 %v3487, %v3486
  %v3496 = vpack.c.b16 %v3489, %v3488
  %v3497 = vpack.c.b16 %v3491, %v3490
  %v3498 = vpack.c.b16 %v3493, %v3492
  %v3520 = vunpack.c.l.b16 %v3458
  %v3521 = vunpack.c.l.b16 %v3459
  %v3522 = vunpack.c.l.b16 %v3460
  %v3523 = vunpack.c.l.b16 %v3461
  %v3524 = vunpack.c.l.b16 %v3462
  %v3525 = vunpack.c.l.b16 %v3463
  %v3526 = vunpack.c.l.b16 %v3464
  %v3527 = vunpack.c.l.b16 %v3465
  %v3528 = vunpack.c.l.b16 %v3466
  %v3529 = vunpack.c.l.b16 %v3467
  %v3530 = vunpack.c.l.b16 %v3468
  %v3531 = vunpack.c.l.b16 %v3469
  %v3532 = vunpack.c.l.b16 %v3470
  %v3533 = vunpack.c.l.b16 %v3471
  %v3534 = vunpack.c.l.b16 %v3472
  %v3535 = vunpack.c.l.b16 %v3473
  %v3536 = vpack.c.b16 %v3521, %v3520
  %v3537 = vpack.c.b16 %v3523, %v3522
  %v3538 = vpack.c.b16 %v3525, %v3524
  %v3539 = vpack.c.b16 %v3527, %v3526
  %v3540 = vpack.c.b16 %v3529, %v3528
  %v3541 = vpack.c.b16 %v3531, %v3530
  %v3542 = vpack.c.b16 %v3533, %v3532
  %v3543 = vpack.c.b16 %v3535, %v3534
  %3552 = vmatprep.subr.bf16.mxu0 0
  %3553 = vmatpush1.bf16.msra.mxu0 %v3543
  %3554 = vmatprep.subr.bf16.mxu0 0
  %3555 = vmatpush1.bf16.msra.mxu0 %v3542
  %3556 = vmatprep.subr.bf16.mxu0 0
  %3557 = vmatpush1.bf16.msra.mxu0 %v3541
  %3558 = vmatprep.subr.bf16.mxu0 0
  %3559 = vmatpush1.bf16.msra.mxu0 %v3540
  %3560 = vmatprep.subr.bf16.mxu0 0
  %3561 = vmatpush1.bf16.msra.mxu0 %v3539
  %3562 = vmatprep.subr.bf16.mxu0 0
  %3563 = vmatpush1.bf16.msra.mxu0 %v3538
  %3564 = vmatprep.subr.bf16.mxu0 0
  %3565 = vmatpush1.bf16.msra.mxu0 %v3537
  %3566 = vmatprep.subr.bf16.mxu0 0
  %3567 = vmatpush1.bf16.msra.mxu0 %v3536
  %3568 = vmatprep.subr.bf16.mxu0 0
  %3569 = vmatpush2.bf16.msra.mxu0 0
  %3570 = vmatprep.subr.bf16.mxu0 0
  %3571 = vmatpush2.bf16.msra.mxu0 0
  %3572 = vmatprep.subr.bf16.mxu0 0
  %3573 = vmatpush2.bf16.msra.mxu0 0
  %3574 = vmatprep.subr.bf16.mxu0 0
  %3575 = vmatpush2.bf16.msra.mxu0 0
  %3576 = vmatprep.subr.bf16.mxu0 0
  %3577 = vmatpush2.bf16.msra.mxu0 0
  %3578 = vmatprep.subr.bf16.mxu0 0
  %3579 = vmatpush2.bf16.msra.mxu0 0
  %3580 = vmatprep.subr.bf16.mxu0 0
  %3581 = vmatpush2.bf16.msra.mxu0 0
  %3582 = vmatprep.subr.bf16.mxu0 0
  %3583 = vmatpush2.bf16.msra.mxu0 0
  %3584 = vmatprep.mubr.bf16.mxu0 0
  %3585 = vmatmul.mubr.bf16.gmra.mxu0 %v3494
  %v3586 = vpop.f32.mrf.mxu0
  %v3587 = vadd.f32 0.0, %v3586
  %v3588 = vpop.f32.mrf.mxu0
  %v3589 = vpop.f32.mrf.mxu0
  %v3590 = vadd.f32 0.0, %v3589
  %v3591 = vpop.f32.mrf.mxu0
  %3592 = vmatprep.mubr.bf16.mxu0 0
  %3593 = vmatmul.mubr.bf16.gmra.mxu0 %v3495
  %v3594 = vpop.f32.mrf.mxu0
  %v3595 = vadd.f32 0.0, %v3594
  %v3596 = vpop.f32.mrf.mxu0
  %v3597 = vpop.f32.mrf.mxu0
  %v3598 = vadd.f32 0.0, %v3597
  %v3599 = vpop.f32.mrf.mxu0
  %3600 = vmatprep.mubr.bf16.mxu0 0
  %3601 = vmatmul.mubr.bf16.gmra.mxu0 %v3496
  %v3602 = vpop.f32.mrf.mxu0
  %v3603 = vadd.f32 0.0, %v3602
  %v3604 = vpop.f32.mrf.mxu0
  %v3605 = vpop.f32.mrf.mxu0
  %v3606 = vadd.f32 0.0, %v3605
  %v3607 = vpop.f32.mrf.mxu0
  %3608 = vmatprep.mubr.bf16.mxu0 0
  %3609 = vmatmul.mubr.bf16.gmra.mxu0 %v3497
  %v3610 = vpop.f32.mrf.mxu0
  %v3611 = vadd.f32 0.0, %v3610
  %v3612 = vpop.f32.mrf.mxu0
  %v3613 = vpop.f32.mrf.mxu0
  %v3614 = vadd.f32 0.0, %v3613
  %v3615 = vpop.f32.mrf.mxu0
  %3616 = vmatprep.mubr.bf16.mxu0 0
  %3617 = vmatmul.mubr.bf16.gmra.mxu0 %v3498
  %v3618 = vpop.f32.mrf.mxu0
  %v3619 = vadd.f32 0.0, %v3618
  %v3620 = vpop.f32.mrf.mxu0
  %v3621 = vpop.f32.mrf.mxu0
  %v3622 = vadd.f32 0.0, %v3621
  %v3623 = vpop.f32.mrf.mxu0
  %3624 = vdwg.mxu0
  %v3625 = vadd.f32 %v3437, %v3587
  %v3626 = vadd.f32 %v3438, %v3590
  %v3627 = vadd.f32 %v3439, %v3595
  %v3628 = vadd.f32 %v3440, %v3598
  %v3629 = vadd.f32 %v3441, %v3603
  %v3630 = vadd.f32 %v3442, %v3606
  %v3631 = vadd.f32 %v3443, %v3611
  %v3632 = vadd.f32 %v3444, %v3614
  %v3633 = vadd.f32 %v3445, %v3619
  %v3634 = vadd.f32 %v3446, %v3622
  %v3635 = vld [vmem:[#allocation2 + $0x4] sm:$0xf]
  %v3636 = vld [vmem:[#allocation2 + $0x8] sm:$0xf]
  %v3637 = vld [vmem:[#allocation2 + $0xc] sm:$0xf]
  %v3638 = vld [vmem:[#allocation2 + $0x10] sm:$0xf]
  %v3639 = vld [vmem:[#allocation2 + $0x14] sm:$0xf]
  %v3640 = vld [vmem:[#allocation2 + $0x18] sm:$0xf]
  %v3641 = vld [vmem:[#allocation2 + $0x1c] sm:$0xf]
  %v3642 = vld [vmem:[#allocation2 + $0x20] sm:$0xf]
  %v3643 = vld [vmem:[#allocation2 + $0x24] sm:$0xf]
  %v3644 = vld [vmem:[#allocation2 + $0x28] sm:$0xf]
  %s3645 = scalar_lea.vmem %s4, 256
  %v3646 = vld [vmem:[%s3645] sm:$0xf]
  %v3647 = vld [vmem:[%s3645 + $0x4] sm:$0xf]
  %v3648 = vld [vmem:[%s3645 + $0x8] sm:$0xf]
  %v3649 = vld [vmem:[%s3645 + $0xc] sm:$0xf]
  %v3650 = vld [vmem:[%s3645 + $0x10] sm:$0xf]
  %v3651 = vld [vmem:[%s3645 + $0x14] sm:$0xf]
  %v3652 = vld [vmem:[%s3645 + $0x18] sm:$0xf]
  %v3653 = vld [vmem:[%s3645 + $0x1c] sm:$0xf]
  %v3654 = vld [vmem:[%s3645 + $0x20] sm:$0xf]
  %v3655 = vld [vmem:[%s3645 + $0x24] sm:$0xf]
  %v3656 = vld [vmem:[%s3645 + $0x28] sm:$0xf]
  %v3657 = vld [vmem:[%s3645 + $0x2c] sm:$0xf]
  %v3658 = vld [vmem:[%s3645 + $0x30] sm:$0xf]
  %v3659 = vld [vmem:[%s3645 + $0x34] sm:$0xf]
  %v3660 = vld [vmem:[%s3645 + $0x38] sm:$0xf]
  %v3661 = vld [vmem:[%s3645 + $0x3c] sm:$0xf]
  %v3672 = vunpack.c.l.b16 %v3635
  %v3673 = vunpack.c.l.b16 %v3636
  %v3674 = vunpack.c.l.b16 %v3637
  %v3675 = vunpack.c.l.b16 %v3638
  %v3676 = vunpack.c.l.b16 %v3639
  %v3677 = vunpack.c.l.b16 %v3640
  %v3678 = vunpack.c.l.b16 %v3641
  %v3679 = vunpack.c.l.b16 %v3642
  %v3680 = vunpack.c.l.b16 %v3643
  %v3681 = vunpack.c.l.b16 %v3644
  %v3682 = vpack.c.b16 %v3673, %v3672
  %v3683 = vpack.c.b16 %v3675, %v3674
  %v3684 = vpack.c.b16 %v3677, %v3676
  %v3685 = vpack.c.b16 %v3679, %v3678
  %v3686 = vpack.c.b16 %v3681, %v3680
  %v3708 = vunpack.c.l.b16 %v3646
  %v3709 = vunpack.c.l.b16 %v3647
  %v3710 = vunpack.c.l.b16 %v3648
  %v3711 = vunpack.c.l.b16 %v3649
  %v3712 = vunpack.c.l.b16 %v3650
  %v3713 = vunpack.c.l.b16 %v3651
  %v3714 = vunpack.c.l.b16 %v3652
  %v3715 = vunpack.c.l.b16 %v3653
  %v3716 = vunpack.c.l.b16 %v3654
  %v3717 = vunpack.c.l.b16 %v3655
  %v3718 = vunpack.c.l.b16 %v3656
  %v3719 = vunpack.c.l.b16 %v3657
  %v3720 = vunpack.c.l.b16 %v3658
  %v3721 = vunpack.c.l.b16 %v3659
  %v3722 = vunpack.c.l.b16 %v3660
  %v3723 = vunpack.c.l.b16 %v3661
  %v3724 = vpack.c.b16 %v3709, %v3708
  %v3725 = vpack.c.b16 %v3711, %v3710
  %v3726 = vpack.c.b16 %v3713, %v3712
  %v3727 = vpack.c.b16 %v3715, %v3714
  %v3728 = vpack.c.b16 %v3717, %v3716
  %v3729 = vpack.c.b16 %v3719, %v3718
  %v3730 = vpack.c.b16 %v3721, %v3720
  %v3731 = vpack.c.b16 %v3723, %v3722
  %3740 = vmatprep.subr.bf16.mxu0 0
  %3741 = vmatpush1.bf16.msra.mxu0 %v3731
  %3742 = vmatprep.subr.bf16.mxu0 0
  %3743 = vmatpush1.bf16.msra.mxu0 %v3730
  %3744 = vmatprep.subr.bf16.mxu0 0
  %3745 = vmatpush1.bf16.msra.mxu0 %v3729
  %3746 = vmatprep.subr.bf16.mxu0 0
  %3747 = vmatpush1.bf16.msra.mxu0 %v3728
  %3748 = vmatprep.subr.bf16.mxu0 0
  %3749 = vmatpush1.bf16.msra.mxu0 %v3727
  %3750 = vmatprep.subr.bf16.mxu0 0
  %3751 = vmatpush1.bf16.msra.mxu0 %v3726
  %3752 = vmatprep.subr.bf16.mxu0 0
  %3753 = vmatpush1.bf16.msra.mxu0 %v3725
  %3754 = vmatprep.subr.bf16.mxu0 0
  %3755 = vmatpush1.bf16.msra.mxu0 %v3724
  %3756 = vmatprep.subr.bf16.mxu0 0
  %3757 = vmatpush2.bf16.msra.mxu0 0
  %3758 = vmatprep.subr.bf16.mxu0 0
  %3759 = vmatpush2.bf16.msra.mxu0 0
  %3760 = vmatprep.subr.bf16.mxu0 0
  %3761 = vmatpush2.bf16.msra.mxu0 0
  %3762 = vmatprep.subr.bf16.mxu0 0
  %3763 = vmatpush2.bf16.msra.mxu0 0
  %3764 = vmatprep.subr.bf16.mxu0 0
  %3765 = vmatpush2.bf16.msra.mxu0 0
  %3766 = vmatprep.subr.bf16.mxu0 0
  %3767 = vmatpush2.bf16.msra.mxu0 0
  %3768 = vmatprep.subr.bf16.mxu0 0
  %3769 = vmatpush2.bf16.msra.mxu0 0
  %3770 = vmatprep.subr.bf16.mxu0 0
  %3771 = vmatpush2.bf16.msra.mxu0 0
  %3772 = vmatprep.mubr.bf16.mxu0 0
  %3773 = vmatmul.mubr.bf16.gmra.mxu0 %v3682
  %v3774 = vpop.f32.mrf.mxu0
  %v3775 = vadd.f32 0.0, %v3774
  %v3776 = vpop.f32.mrf.mxu0
  %v3777 = vpop.f32.mrf.mxu0
  %v3778 = vadd.f32 0.0, %v3777
  %v3779 = vpop.f32.mrf.mxu0
  %3780 = vmatprep.mubr.bf16.mxu0 0
  %3781 = vmatmul.mubr.bf16.gmra.mxu0 %v3683
  %v3782 = vpop.f32.mrf.mxu0
  %v3783 = vadd.f32 0.0, %v3782
  %v3784 = vpop.f32.mrf.mxu0
  %v3785 = vpop.f32.mrf.mxu0
  %v3786 = vadd.f32 0.0, %v3785
  %v3787 = vpop.f32.mrf.mxu0
  %3788 = vmatprep.mubr.bf16.mxu0 0
  %3789 = vmatmul.mubr.bf16.gmra.mxu0 %v3684
  %v3790 = vpop.f32.mrf.mxu0
  %v3791 = vadd.f32 0.0, %v3790
  %v3792 = vpop.f32.mrf.mxu0
  %v3793 = vpop.f32.mrf.mxu0
  %v3794 = vadd.f32 0.0, %v3793
  %v3795 = vpop.f32.mrf.mxu0
  %3796 = vmatprep.mubr.bf16.mxu0 0
  %3797 = vmatmul.mubr.bf16.gmra.mxu0 %v3685
  %v3798 = vpop.f32.mrf.mxu0
  %v3799 = vadd.f32 0.0, %v3798
  %v3800 = vpop.f32.mrf.mxu0
  %v3801 = vpop.f32.mrf.mxu0
  %v3802 = vadd.f32 0.0, %v3801
  %v3803 = vpop.f32.mrf.mxu0
  %3804 = vmatprep.mubr.bf16.mxu0 0
  %3805 = vmatmul.mubr.bf16.gmra.mxu0 %v3686
  %v3806 = vpop.f32.mrf.mxu0
  %v3807 = vadd.f32 0.0, %v3806
  %v3808 = vpop.f32.mrf.mxu0
  %v3809 = vpop.f32.mrf.mxu0
  %v3810 = vadd.f32 0.0, %v3809
  %v3811 = vpop.f32.mrf.mxu0
  %3812 = vdwg.mxu0
  %v3813 = vadd.f32 %v3625, %v3775
  %v3814 = vadd.f32 %v3626, %v3778
  %v3815 = vadd.f32 %v3627, %v3783
  %v3816 = vadd.f32 %v3628, %v3786
  %v3817 = vadd.f32 %v3629, %v3791
  %v3818 = vadd.f32 %v3630, %v3794
  %v3819 = vadd.f32 %v3631, %v3799
  %v3820 = vadd.f32 %v3632, %v3802
  %v3821 = vadd.f32 %v3633, %v3807
  %v3822 = vadd.f32 %v3634, %v3810
  %v3823 = vld [vmem:[#allocation2 + $0x34] sm:$0xf]
  %v3824 = vld [vmem:[#allocation2 + $0x38] sm:$0xf]
  %v3825 = vld [vmem:[#allocation2 + $0x3c] sm:$0xf]
  %v3826 = vld [vmem:[#allocation2 + $0x40] sm:$0xf]
  %v3827 = vld [vmem:[#allocation2 + $0x44] sm:$0xf]
  %v3828 = vld [vmem:[#allocation2 + $0x48] sm:$0xf]
  %v3829 = vld [vmem:[#allocation2 + $0x4c] sm:$0xf]
  %v3830 = vld [vmem:[#allocation2 + $0x50] sm:$0xf]
  %v3831 = vld [vmem:[#allocation2 + $0x54] sm:$0xf]
  %v3832 = vld [vmem:[#allocation2 + $0x58] sm:$0xf]
  %s3833 = scalar_lea.vmem %s4, 320
  %v3834 = vld [vmem:[%s3833] sm:$0xf]
  %v3835 = vld [vmem:[%s3833 + $0x4] sm:$0xf]
  %v3836 = vld [vmem:[%s3833 + $0x8] sm:$0xf]
  %v3837 = vld [vmem:[%s3833 + $0xc] sm:$0xf]
  %v3838 = vld [vmem:[%s3833 + $0x10] sm:$0xf]
  %v3839 = vld [vmem:[%s3833 + $0x14] sm:$0xf]
  %v3840 = vld [vmem:[%s3833 + $0x18] sm:$0xf]
  %v3841 = vld [vmem:[%s3833 + $0x1c] sm:$0xf]
  %v3842 = vld [vmem:[%s3833 + $0x20] sm:$0xf]
  %v3843 = vld [vmem:[%s3833 + $0x24] sm:$0xf]
  %v3844 = vld [vmem:[%s3833 + $0x28] sm:$0xf]
  %v3845 = vld [vmem:[%s3833 + $0x2c] sm:$0xf]
  %v3846 = vld [vmem:[%s3833 + $0x30] sm:$0xf]
  %v3847 = vld [vmem:[%s3833 + $0x34] sm:$0xf]
  %v3848 = vld [vmem:[%s3833 + $0x38] sm:$0xf]
  %v3849 = vld [vmem:[%s3833 + $0x3c] sm:$0xf]
  %v3860 = vunpack.c.l.b16 %v3823
  %v3861 = vunpack.c.l.b16 %v3824
  %v3862 = vunpack.c.l.b16 %v3825
  %v3863 = vunpack.c.l.b16 %v3826
  %v3864 = vunpack.c.l.b16 %v3827
  %v3865 = vunpack.c.l.b16 %v3828
  %v3866 = vunpack.c.l.b16 %v3829
  %v3867 = vunpack.c.l.b16 %v3830
  %v3868 = vunpack.c.l.b16 %v3831
  %v3869 = vunpack.c.l.b16 %v3832
  %v3870 = vpack.c.b16 %v3861, %v3860
  %v3871 = vpack.c.b16 %v3863, %v3862
  %v3872 = vpack.c.b16 %v3865, %v3864
  %v3873 = vpack.c.b16 %v3867, %v3866
  %v3874 = vpack.c.b16 %v3869, %v3868
  %v3896 = vunpack.c.l.b16 %v3834
  %v3897 = vunpack.c.l.b16 %v3835
  %v3898 = vunpack.c.l.b16 %v3836
  %v3899 = vunpack.c.l.b16 %v3837
  %v3900 = vunpack.c.l.b16 %v3838
  %v3901 = vunpack.c.l.b16 %v3839
  %v3902 = vunpack.c.l.b16 %v3840
  %v3903 = vunpack.c.l.b16 %v3841
  %v3904 = vunpack.c.l.b16 %v3842
  %v3905 = vunpack.c.l.b16 %v3843
  %v3906 = vunpack.c.l.b16 %v3844
  %v3907 = vunpack.c.l.b16 %v3845
  %v3908 = vunpack.c.l.b16 %v3846
  %v3909 = vunpack.c.l.b16 %v3847
  %v3910 = vunpack.c.l.b16 %v3848
  %v3911 = vunpack.c.l.b16 %v3849
  %v3912 = vpack.c.b16 %v3897, %v3896
  %v3913 = vpack.c.b16 %v3899, %v3898
  %v3914 = vpack.c.b16 %v3901, %v3900
  %v3915 = vpack.c.b16 %v3903, %v3902
  %v3916 = vpack.c.b16 %v3905, %v3904
  %v3917 = vpack.c.b16 %v3907, %v3906
  %v3918 = vpack.c.b16 %v3909, %v3908
  %v3919 = vpack.c.b16 %v3911, %v3910
  %3928 = vmatprep.subr.bf16.mxu0 0
  %3929 = vmatpush1.bf16.msra.mxu0 %v3919
  %3930 = vmatprep.subr.bf16.mxu0 0
  %3931 = vmatpush1.bf16.msra.mxu0 %v3918
  %3932 = vmatprep.subr.bf16.mxu0 0
  %3933 = vmatpush1.bf16.msra.mxu0 %v3917
  %3934 = vmatprep.subr.bf16.mxu0 0
  %3935 = vmatpush1.bf16.msra.mxu0 %v3916
  %3936 = vmatprep.subr.bf16.mxu0 0
  %3937 = vmatpush1.bf16.msra.mxu0 %v3915
  %3938 = vmatprep.subr.bf16.mxu0 0
  %3939 = vmatpush1.bf16.msra.mxu0 %v3914
  %3940 = vmatprep.subr.bf16.mxu0 0
  %3941 = vmatpush1.bf16.msra.mxu0 %v3913
  %3942 = vmatprep.subr.bf16.mxu0 0
  %3943 = vmatpush1.bf16.msra.mxu0 %v3912
  %3944 = vmatprep.subr.bf16.mxu0 0
  %3945 = vmatpush2.bf16.msra.mxu0 0
  %3946 = vmatprep.subr.bf16.mxu0 0
  %3947 = vmatpush2.bf16.msra.mxu0 0
  %3948 = vmatprep.subr.bf16.mxu0 0
  %3949 = vmatpush2.bf16.msra.mxu0 0
  %3950 = vmatprep.subr.bf16.mxu0 0
  %3951 = vmatpush2.bf16.msra.mxu0 0
  %3952 = vmatprep.subr.bf16.mxu0 0
  %3953 = vmatpush2.bf16.msra.mxu0 0
  %3954 = vmatprep.subr.bf16.mxu0 0
  %3955 = vmatpush2.bf16.msra.mxu0 0
  %3956 = vmatprep.subr.bf16.mxu0 0
  %3957 = vmatpush2.bf16.msra.mxu0 0
  %3958 = vmatprep.subr.bf16.mxu0 0
  %3959 = vmatpush2.bf16.msra.mxu0 0
  %3960 = vmatprep.mubr.bf16.mxu0 0
  %3961 = vmatmul.mubr.bf16.gmra.mxu0 %v3870
  %v3962 = vpop.f32.mrf.mxu0
  %v3963 = vadd.f32 0.0, %v3962
  %v3964 = vpop.f32.mrf.mxu0
  %v3965 = vpop.f32.mrf.mxu0
  %v3966 = vadd.f32 0.0, %v3965
  %v3967 = vpop.f32.mrf.mxu0
  %3968 = vmatprep.mubr.bf16.mxu0 0
  %3969 = vmatmul.mubr.bf16.gmra.mxu0 %v3871
  %v3970 = vpop.f32.mrf.mxu0
  %v3971 = vadd.f32 0.0, %v3970
  %v3972 = vpop.f32.mrf.mxu0
  %v3973 = vpop.f32.mrf.mxu0
  %v3974 = vadd.f32 0.0, %v3973
  %v3975 = vpop.f32.mrf.mxu0
  %3976 = vmatprep.mubr.bf16.mxu0 0
  %3977 = vmatmul.mubr.bf16.gmra.mxu0 %v3872
  %v3978 = vpop.f32.mrf.mxu0
  %v3979 = vadd.f32 0.0, %v3978
  %v3980 = vpop.f32.mrf.mxu0
  %v3981 = vpop.f32.mrf.mxu0
  %v3982 = vadd.f32 0.0, %v3981
  %v3983 = vpop.f32.mrf.mxu0
  %3984 = vmatprep.mubr.bf16.mxu0 0
  %3985 = vmatmul.mubr.bf16.gmra.mxu0 %v3873
  %v3986 = vpop.f32.mrf.mxu0
  %v3987 = vadd.f32 0.0, %v3986
  %v3988 = vpop.f32.mrf.mxu0
  %v3989 = vpop.f32.mrf.mxu0
  %v3990 = vadd.f32 0.0, %v3989
  %v3991 = vpop.f32.mrf.mxu0
  %3992 = vmatprep.mubr.bf16.mxu0 0
  %3993 = vmatmul.mubr.bf16.gmra.mxu0 %v3874
  %v3994 = vpop.f32.mrf.mxu0
  %v3995 = vadd.f32 0.0, %v3994
  %v3996 = vpop.f32.mrf.mxu0
  %v3997 = vpop.f32.mrf.mxu0
  %v3998 = vadd.f32 0.0, %v3997
  %v3999 = vpop.f32.mrf.mxu0
  %4000 = vdwg.mxu0
  %v4001 = vadd.f32 %v3813, %v3963
  %v4002 = vadd.f32 %v3814, %v3966
  %v4003 = vadd.f32 %v3815, %v3971
  %v4004 = vadd.f32 %v3816, %v3974
  %v4005 = vadd.f32 %v3817, %v3979
  %v4006 = vadd.f32 %v3818, %v3982
  %v4007 = vadd.f32 %v3819, %v3987
  %v4008 = vadd.f32 %v3820, %v3990
  %v4009 = vadd.f32 %v3821, %v3995
  %v4010 = vadd.f32 %v3822, %v3998
  %v4011 = vld [vmem:[#allocation2 + $0x64] sm:$0xf]
  %v4012 = vld [vmem:[#allocation2 + $0x68] sm:$0xf]
  %v4013 = vld [vmem:[#allocation2 + $0x6c] sm:$0xf]
  %v4014 = vld [vmem:[#allocation2 + $0x70] sm:$0xf]
  %v4015 = vld [vmem:[#allocation2 + $0x74] sm:$0xf]
  %v4016 = vld [vmem:[#allocation2 + $0x78] sm:$0xf]
  %v4017 = vld [vmem:[#allocation2 + $0x7c] sm:$0xf]
  %v4018 = vld [vmem:[#allocation2 + $0x80] sm:$0xf]
  %v4019 = vld [vmem:[#allocation2 + $0x84] sm:$0xf]
  %v4020 = vld [vmem:[#allocation2 + $0x88] sm:$0xf]
  %s4021 = scalar_lea.vmem %s4, 384
  %v4022 = vld [vmem:[%s4021] sm:$0xf]
  %v4023 = vld [vmem:[%s4021 + $0x4] sm:$0xf]
  %v4024 = vld [vmem:[%s4021 + $0x8] sm:$0xf]
  %v4025 = vld [vmem:[%s4021 + $0xc] sm:$0xf]
  %v4026 = vld [vmem:[%s4021 + $0x10] sm:$0xf]
  %v4027 = vld [vmem:[%s4021 + $0x14] sm:$0xf]
  %v4028 = vld [vmem:[%s4021 + $0x18] sm:$0xf]
  %v4029 = vld [vmem:[%s4021 + $0x1c] sm:$0xf]
  %v4030 = vld [vmem:[%s4021 + $0x20] sm:$0xf]
  %v4031 = vld [vmem:[%s4021 + $0x24] sm:$0xf]
  %v4032 = vld [vmem:[%s4021 + $0x28] sm:$0xf]
  %v4033 = vld [vmem:[%s4021 + $0x2c] sm:$0xf]
  %v4034 = vld [vmem:[%s4021 + $0x30] sm:$0xf]
  %v4035 = vld [vmem:[%s4021 + $0x34] sm:$0xf]
  %v4036 = vld [vmem:[%s4021 + $0x38] sm:$0xf]
  %v4037 = vld [vmem:[%s4021 + $0x3c] sm:$0xf]
  %v4048 = vunpack.c.l.b16 %v4011
  %v4049 = vunpack.c.l.b16 %v4012
  %v4050 = vunpack.c.l.b16 %v4013
  %v4051 = vunpack.c.l.b16 %v4014
  %v4052 = vunpack.c.l.b16 %v4015
  %v4053 = vunpack.c.l.b16 %v4016
  %v4054 = vunpack.c.l.b16 %v4017
  %v4055 = vunpack.c.l.b16 %v4018
  %v4056 = vunpack.c.l.b16 %v4019
  %v4057 = vunpack.c.l.b16 %v4020
  %v4058 = vpack.c.b16 %v4049, %v4048
  %v4059 = vpack.c.b16 %v4051, %v4050
  %v4060 = vpack.c.b16 %v4053, %v4052
  %v4061 = vpack.c.b16 %v4055, %v4054
  %v4062 = vpack.c.b16 %v4057, %v4056
  %v4084 = vunpack.c.l.b16 %v4022
  %v4085 = vunpack.c.l.b16 %v4023
  %v4086 = vunpack.c.l.b16 %v4024
  %v4087 = vunpack.c.l.b16 %v4025
  %v4088 = vunpack.c.l.b16 %v4026
  %v4089 = vunpack.c.l.b16 %v4027
  %v4090 = vunpack.c.l.b16 %v4028
  %v4091 = vunpack.c.l.b16 %v4029
  %v4092 = vunpack.c.l.b16 %v4030
  %v4093 = vunpack.c.l.b16 %v4031
  %v4094 = vunpack.c.l.b16 %v4032
  %v4095 = vunpack.c.l.b16 %v4033
  %v4096 = vunpack.c.l.b16 %v4034
  %v4097 = vunpack.c.l.b16 %v4035
  %v4098 = vunpack.c.l.b16 %v4036
  %v4099 = vunpack.c.l.b16 %v4037
  %v4100 = vpack.c.b16 %v4085, %v4084
  %v4101 = vpack.c.b16 %v4087, %v4086
  %v4102 = vpack.c.b16 %v4089, %v4088
  %v4103 = vpack.c.b16 %v4091, %v4090
  %v4104 = vpack.c.b16 %v4093, %v4092
  %v4105 = vpack.c.b16 %v4095, %v4094
  %v4106 = vpack.c.b16 %v4097, %v4096
  %v4107 = vpack.c.b16 %v4099, %v4098
  %4116 = vmatprep.subr.bf16.mxu0 0
  %4117 = vmatpush1.bf16.msra.mxu0 %v4107
  %4118 = vmatprep.subr.bf16.mxu0 0
  %4119 = vmatpush1.bf16.msra.mxu0 %v4106
  %4120 = vmatprep.subr.bf16.mxu0 0
  %4121 = vmatpush1.bf16.msra.mxu0 %v4105
  %4122 = vmatprep.subr.bf16.mxu0 0
  %4123 = vmatpush1.bf16.msra.mxu0 %v4104
  %4124 = vmatprep.subr.bf16.mxu0 0
  %4125 = vmatpush1.bf16.msra.mxu0 %v4103
  %4126 = vmatprep.subr.bf16.mxu0 0
  %4127 = vmatpush1.bf16.msra.mxu0 %v4102
  %4128 = vmatprep.subr.bf16.mxu0 0
  %4129 = vmatpush1.bf16.msra.mxu0 %v4101
  %4130 = vmatprep.subr.bf16.mxu0 0
  %4131 = vmatpush1.bf16.msra.mxu0 %v4100
  %4132 = vmatprep.subr.bf16.mxu0 0
  %4133 = vmatpush2.bf16.msra.mxu0 0
  %4134 = vmatprep.subr.bf16.mxu0 0
  %4135 = vmatpush2.bf16.msra.mxu0 0
  %4136 = vmatprep.subr.bf16.mxu0 0
  %4137 = vmatpush2.bf16.msra.mxu0 0
  %4138 = vmatprep.subr.bf16.mxu0 0
  %4139 = vmatpush2.bf16.msra.mxu0 0
  %4140 = vmatprep.subr.bf16.mxu0 0
  %4141 = vmatpush2.bf16.msra.mxu0 0
  %4142 = vmatprep.subr.bf16.mxu0 0
  %4143 = vmatpush2.bf16.msra.mxu0 0
  %4144 = vmatprep.subr.bf16.mxu0 0
  %4145 = vmatpush2.bf16.msra.mxu0 0
  %4146 = vmatprep.subr.bf16.mxu0 0
  %4147 = vmatpush2.bf16.msra.mxu0 0
  %4148 = vmatprep.mubr.bf16.mxu0 0
  %4149 = vmatmul.mubr.bf16.gmra.mxu0 %v4058
  %v4150 = vpop.f32.mrf.mxu0
  %v4151 = vadd.f32 0.0, %v4150
  %v4152 = vpop.f32.mrf.mxu0
  %v4153 = vpop.f32.mrf.mxu0
  %v4154 = vadd.f32 0.0, %v4153
  %v4155 = vpop.f32.mrf.mxu0
  %4156 = vmatprep.mubr.bf16.mxu0 0
  %4157 = vmatmul.mubr.bf16.gmra.mxu0 %v4059
  %v4158 = vpop.f32.mrf.mxu0
  %v4159 = vadd.f32 0.0, %v4158
  %v4160 = vpop.f32.mrf.mxu0
  %v4161 = vpop.f32.mrf.mxu0
  %v4162 = vadd.f32 0.0, %v4161
  %v4163 = vpop.f32.mrf.mxu0
  %4164 = vmatprep.mubr.bf16.mxu0 0
  %4165 = vmatmul.mubr.bf16.gmra.mxu0 %v4060
  %v4166 = vpop.f32.mrf.mxu0
  %v4167 = vadd.f32 0.0, %v4166
  %v4168 = vpop.f32.mrf.mxu0
  %v4169 = vpop.f32.mrf.mxu0
  %v4170 = vadd.f32 0.0, %v4169
  %v4171 = vpop.f32.mrf.mxu0
  %4172 = vmatprep.mubr.bf16.mxu0 0
  %4173 = vmatmul.mubr.bf16.gmra.mxu0 %v4061
  %v4174 = vpop.f32.mrf.mxu0
  %v4175 = vadd.f32 0.0, %v4174
  %v4176 = vpop.f32.mrf.mxu0
  %v4177 = vpop.f32.mrf.mxu0
  %v4178 = vadd.f32 0.0, %v4177
  %v4179 = vpop.f32.mrf.mxu0
  %4180 = vmatprep.mubr.bf16.mxu0 0
  %4181 = vmatmul.mubr.bf16.gmra.mxu0 %v4062
  %v4182 = vpop.f32.mrf.mxu0
  %v4183 = vadd.f32 0.0, %v4182
  %v4184 = vpop.f32.mrf.mxu0
  %v4185 = vpop.f32.mrf.mxu0
  %v4186 = vadd.f32 0.0, %v4185
  %v4187 = vpop.f32.mrf.mxu0
  %4188 = vdwg.mxu0
  %v4189 = vadd.f32 %v4001, %v4151
  %v4190 = vadd.f32 %v4002, %v4154
  %v4191 = vadd.f32 %v4003, %v4159
  %v4192 = vadd.f32 %v4004, %v4162
  %v4193 = vadd.f32 %v4005, %v4167
  %v4194 = vadd.f32 %v4006, %v4170
  %v4195 = vadd.f32 %v4007, %v4175
  %v4196 = vadd.f32 %v4008, %v4178
  %v4197 = vadd.f32 %v4009, %v4183
  %v4198 = vadd.f32 %v4010, %v4186
  %v4199 = vld [vmem:[#allocation2 + $0x94] sm:$0xf]
  %v4200 = vld [vmem:[#allocation2 + $0x98] sm:$0xf]
  %v4201 = vld [vmem:[#allocation2 + $0x9c] sm:$0xf]
  %v4202 = vld [vmem:[#allocation2 + $0xa0] sm:$0xf]
  %v4203 = vld [vmem:[#allocation2 + $0xa4] sm:$0xf]
  %v4204 = vld [vmem:[#allocation2 + $0xa8] sm:$0xf]
  %v4205 = vld [vmem:[#allocation2 + $0xac] sm:$0xf]
  %v4206 = vld [vmem:[#allocation2 + $0xb0] sm:$0xf]
  %v4207 = vld [vmem:[#allocation2 + $0xb4] sm:$0xf]
  %v4208 = vld [vmem:[#allocation2 + $0xb8] sm:$0xf]
  %s4209 = scalar_lea.vmem %s4, 448
  %v4210 = vld [vmem:[%s4209] sm:$0xf]
  %v4211 = vld [vmem:[%s4209 + $0x4] sm:$0xf]
  %v4212 = vld [vmem:[%s4209 + $0x8] sm:$0xf]
  %v4213 = vld [vmem:[%s4209 + $0xc] sm:$0xf]
  %v4214 = vld [vmem:[%s4209 + $0x10] sm:$0xf]
  %v4215 = vld [vmem:[%s4209 + $0x14] sm:$0xf]
  %v4216 = vld [vmem:[%s4209 + $0x18] sm:$0xf]
  %v4217 = vld [vmem:[%s4209 + $0x1c] sm:$0xf]
  %v4218 = vld [vmem:[%s4209 + $0x20] sm:$0xf]
  %v4219 = vld [vmem:[%s4209 + $0x24] sm:$0xf]
  %v4220 = vld [vmem:[%s4209 + $0x28] sm:$0xf]
  %v4221 = vld [vmem:[%s4209 + $0x2c] sm:$0xf]
  %v4222 = vld [vmem:[%s4209 + $0x30] sm:$0xf]
  %v4223 = vld [vmem:[%s4209 + $0x34] sm:$0xf]
  %v4224 = vld [vmem:[%s4209 + $0x38] sm:$0xf]
  %v4225 = vld [vmem:[%s4209 + $0x3c] sm:$0xf]
  %v4236 = vunpack.c.l.b16 %v4199
  %v4237 = vunpack.c.l.b16 %v4200
  %v4238 = vunpack.c.l.b16 %v4201
  %v4239 = vunpack.c.l.b16 %v4202
  %v4240 = vunpack.c.l.b16 %v4203
  %v4241 = vunpack.c.l.b16 %v4204
  %v4242 = vunpack.c.l.b16 %v4205
  %v4243 = vunpack.c.l.b16 %v4206
  %v4244 = vunpack.c.l.b16 %v4207
  %v4245 = vunpack.c.l.b16 %v4208
  %v4246 = vpack.c.b16 %v4237, %v4236
  %v4247 = vpack.c.b16 %v4239, %v4238
  %v4248 = vpack.c.b16 %v4241, %v4240
  %v4249 = vpack.c.b16 %v4243, %v4242
  %v4250 = vpack.c.b16 %v4245, %v4244
  %v4272 = vunpack.c.l.b16 %v4210
  %v4273 = vunpack.c.l.b16 %v4211
  %v4274 = vunpack.c.l.b16 %v4212
  %v4275 = vunpack.c.l.b16 %v4213
  %v4276 = vunpack.c.l.b16 %v4214
  %v4277 = vunpack.c.l.b16 %v4215
  %v4278 = vunpack.c.l.b16 %v4216
  %v4279 = vunpack.c.l.b16 %v4217
  %v4280 = vunpack.c.l.b16 %v4218
  %v4281 = vunpack.c.l.b16 %v4219
  %v4282 = vunpack.c.l.b16 %v4220
  %v4283 = vunpack.c.l.b16 %v4221
  %v4284 = vunpack.c.l.b16 %v4222
  %v4285 = vunpack.c.l.b16 %v4223
  %v4286 = vunpack.c.l.b16 %v4224
  %v4287 = vunpack.c.l.b16 %v4225
  %v4288 = vpack.c.b16 %v4273, %v4272
  %v4289 = vpack.c.b16 %v4275, %v4274
  %v4290 = vpack.c.b16 %v4277, %v4276
  %v4291 = vpack.c.b16 %v4279, %v4278
  %v4292 = vpack.c.b16 %v4281, %v4280
  %v4293 = vpack.c.b16 %v4283, %v4282
  %v4294 = vpack.c.b16 %v4285, %v4284
  %v4295 = vpack.c.b16 %v4287, %v4286
  %4304 = vmatprep.subr.bf16.mxu0 0
  %4305 = vmatpush1.bf16.msra.mxu0 %v4295
  %4306 = vmatprep.subr.bf16.mxu0 0
  %4307 = vmatpush1.bf16.msra.mxu0 %v4294
  %4308 = vmatprep.subr.bf16.mxu0 0
  %4309 = vmatpush1.bf16.msra.mxu0 %v4293
  %4310 = vmatprep.subr.bf16.mxu0 0
  %4311 = vmatpush1.bf16.msra.mxu0 %v4292
  %4312 = vmatprep.subr.bf16.mxu0 0
  %4313 = vmatpush1.bf16.msra.mxu0 %v4291
  %4314 = vmatprep.subr.bf16.mxu0 0
  %4315 = vmatpush1.bf16.msra.mxu0 %v4290
  %4316 = vmatprep.subr.bf16.mxu0 0
  %4317 = vmatpush1.bf16.msra.mxu0 %v4289
  %4318 = vmatprep.subr.bf16.mxu0 0
  %4319 = vmatpush1.bf16.msra.mxu0 %v4288
  %4320 = vmatprep.subr.bf16.mxu0 0
  %4321 = vmatpush2.bf16.msra.mxu0 0
  %4322 = vmatprep.subr.bf16.mxu0 0
  %4323 = vmatpush2.bf16.msra.mxu0 0
  %4324 = vmatprep.subr.bf16.mxu0 0
  %4325 = vmatpush2.bf16.msra.mxu0 0
  %4326 = vmatprep.subr.bf16.mxu0 0
  %4327 = vmatpush2.bf16.msra.mxu0 0
  %4328 = vmatprep.subr.bf16.mxu0 0
  %4329 = vmatpush2.bf16.msra.mxu0 0
  %4330 = vmatprep.subr.bf16.mxu0 0
  %4331 = vmatpush2.bf16.msra.mxu0 0
  %4332 = vmatprep.subr.bf16.mxu0 0
  %4333 = vmatpush2.bf16.msra.mxu0 0
  %4334 = vmatprep.subr.bf16.mxu0 0
  %4335 = vmatpush2.bf16.msra.mxu0 0
  %4336 = vmatprep.mubr.bf16.mxu0 0
  %4337 = vmatmul.mubr.bf16.gmra.mxu0 %v4246
  %v4338 = vpop.f32.mrf.mxu0
  %v4339 = vadd.f32 0.0, %v4338
  %v4340 = vpop.f32.mrf.mxu0
  %v4341 = vpop.f32.mrf.mxu0
  %v4342 = vadd.f32 0.0, %v4341
  %v4343 = vpop.f32.mrf.mxu0
  %4344 = vmatprep.mubr.bf16.mxu0 0
  %4345 = vmatmul.mubr.bf16.gmra.mxu0 %v4247
  %v4346 = vpop.f32.mrf.mxu0
  %v4347 = vadd.f32 0.0, %v4346
  %v4348 = vpop.f32.mrf.mxu0
  %v4349 = vpop.f32.mrf.mxu0
  %v4350 = vadd.f32 0.0, %v4349
  %v4351 = vpop.f32.mrf.mxu0
  %4352 = vmatprep.mubr.bf16.mxu0 0
  %4353 = vmatmul.mubr.bf16.gmra.mxu0 %v4248
  %v4354 = vpop.f32.mrf.mxu0
  %v4355 = vadd.f32 0.0, %v4354
  %v4356 = vpop.f32.mrf.mxu0
  %v4357 = vpop.f32.mrf.mxu0
  %v4358 = vadd.f32 0.0, %v4357
  %v4359 = vpop.f32.mrf.mxu0
  %4360 = vmatprep.mubr.bf16.mxu0 0
  %4361 = vmatmul.mubr.bf16.gmra.mxu0 %v4249
  %v4362 = vpop.f32.mrf.mxu0
  %v4363 = vadd.f32 0.0, %v4362
  %v4364 = vpop.f32.mrf.mxu0
  %v4365 = vpop.f32.mrf.mxu0
  %v4366 = vadd.f32 0.0, %v4365
  %v4367 = vpop.f32.mrf.mxu0
  %4368 = vmatprep.mubr.bf16.mxu0 0
  %4369 = vmatmul.mubr.bf16.gmra.mxu0 %v4250
  %v4370 = vpop.f32.mrf.mxu0
  %v4371 = vadd.f32 0.0, %v4370
  %v4372 = vpop.f32.mrf.mxu0
  %v4373 = vpop.f32.mrf.mxu0
  %v4374 = vadd.f32 0.0, %v4373
  %v4375 = vpop.f32.mrf.mxu0
  %4376 = vdwg.mxu0
  %v4377 = vadd.f32 %v4189, %v4339
  %v4378 = vadd.f32 %v4190, %v4342
  %v4379 = vadd.f32 %v4191, %v4347
  %v4380 = vadd.f32 %v4192, %v4350
  %v4381 = vadd.f32 %v4193, %v4355
  %v4382 = vadd.f32 %v4194, %v4358
  %v4383 = vadd.f32 %v4195, %v4363
  %v4384 = vadd.f32 %v4196, %v4366
  %v4385 = vadd.f32 %v4197, %v4371
  %v4386 = vadd.f32 %v4198, %v4374
  %v4387 = vld [vmem:[%s5] sm:$0x1]
  %v4389 = vlaneseq
  %v4390 = vshrl.u32 %v4389, 7
  %v4391 = vsub.s32 0, %v4390
  %v4392 = vrot.slane %v4387, %v4391
  %v4394 = vadd.f32 %v4377, %v4392
  %v4395 = vadd.f32 %v4378, %v4392
  %v4396 = vadd.f32 %v4379, %v4392
  %v4397 = vadd.f32 %v4380, %v4392
  %v4398 = vadd.f32 %v4381, %v4392
  %v4399 = vadd.f32 %v4382, %v4392
  %v4400 = vadd.f32 %v4383, %v4392
  %v4401 = vadd.f32 %v4384, %v4392
  %v4402 = vadd.f32 %v4385, %v4392
  %v4403 = vadd.f32 %v4386, %v4392
  %v4404 = vmax.f32 %v4394, 0.0
  %v4405 = vmax.f32 %v4395, 0.0
  %v4406 = vmax.f32 %v4396, 0.0
  %v4407 = vmax.f32 %v4397, 0.0
  %v4408 = vmax.f32 %v4398, 0.0
  %v4409 = vmax.f32 %v4399, 0.0
  %v4410 = vmax.f32 %v4400, 0.0
  %v4411 = vmax.f32 %v4401, 0.0
  %v4412 = vmax.f32 %v4402, 0.0
  %v4413 = vmax.f32 %v4403, 0.0
  %v4414 = vpack.c.bf16 %v4405, %v4404
  %v4415 = vpack.c.bf16 %v4407, %v4406
  %v4416 = vpack.c.bf16 %v4409, %v4408
  %v4417 = vpack.c.bf16 %v4411, %v4410
  %v4418 = vpack.c.bf16 %v4413, %v4412
  %v4424 = vunpack.c.l.b16 %v4414
  %v4425 = vunpack.c.h.b16 %v4414
  %v4426 = vunpack.c.l.b16 %v4415
  %v4427 = vunpack.c.h.b16 %v4415
  %v4428 = vunpack.c.l.b16 %v4416
  %v4429 = vunpack.c.h.b16 %v4416
  %v4430 = vunpack.c.l.b16 %v4417
  %v4431 = vunpack.c.h.b16 %v4417
  %v4432 = vunpack.c.l.b16 %v4418
  %v4433 = vunpack.c.h.b16 %v4418
  %v4434 = vpack.c.b16 %v4424, %v4424
  %v4435 = vpack.c.b16 %v4425, %v4425
  %v4436 = vpack.c.b16 %v4426, %v4426
  %v4437 = vpack.c.b16 %v4427, %v4427
  %v4438 = vpack.c.b16 %v4428, %v4428
  %v4439 = vpack.c.b16 %v4429, %v4429
  %v4440 = vpack.c.b16 %v4430, %v4430
  %v4441 = vpack.c.b16 %v4431, %v4431
  %v4442 = vpack.c.b16 %v4432, %v4432
  %v4443 = vpack.c.b16 %v4433, %v4433
  %vm4454 = vcmask 912384
  %4455 = vst.msk [vmem:[#allocation3] sm:$0xf] %vm4454, %v4434
  %4456 = vst.msk [vmem:[#allocation3 + $0x4] sm:$0xf] %vm4454, %v4435
  %4457 = vst.msk [vmem:[#allocation3 + $0x8] sm:$0xf] %vm4454, %v4436
  %4458 = vst.msk [vmem:[#allocation3 + $0xc] sm:$0xf] %vm4454, %v4437
  %4459 = vst.msk [vmem:[#allocation3 + $0x10] sm:$0xf] %vm4454, %v4438
  %4460 = vst.msk [vmem:[#allocation3 + $0x14] sm:$0xf] %vm4454, %v4439
  %4461 = vst.msk [vmem:[#allocation3 + $0x18] sm:$0xf] %vm4454, %v4440
  %4462 = vst.msk [vmem:[#allocation3 + $0x1c] sm:$0xf] %vm4454, %v4441
  %4463 = vst.msk [vmem:[#allocation3 + $0x20] sm:$0xf] %vm4454, %v4442
  %4464 = vst.msk [vmem:[#allocation3 + $0x24] sm:$0xf] %vm4454, %v4443
  %v4465 = vld [vmem:[#allocation3] sm:$0xf]
  %v4466 = vld [vmem:[#allocation3 + $0x4] sm:$0xf]
  %v4467 = vld [vmem:[#allocation3 + $0x8] sm:$0xf]
  %v4468 = vld [vmem:[#allocation3 + $0xc] sm:$0xf]
  %v4469 = vld [vmem:[#allocation3 + $0x10] sm:$0xf]
  %v4470 = vld [vmem:[#allocation3 + $0x14] sm:$0xf]
  %v4471 = vld [vmem:[#allocation3 + $0x18] sm:$0xf]
  %v4472 = vld [vmem:[#allocation3 + $0x1c] sm:$0xf]
  %v4473 = vld [vmem:[%s6] sm:$0xf]
  %v4474 = vld [vmem:[%s6 + $0x4] sm:$0xf]
  %v4475 = vld [vmem:[%s6 + $0x8] sm:$0xf]
  %v4476 = vld [vmem:[%s6 + $0xc] sm:$0xf]
  %v4477 = vld [vmem:[%s6 + $0x10] sm:$0xf]
  %v4478 = vld [vmem:[%s6 + $0x14] sm:$0xf]
  %v4479 = vld [vmem:[%s6 + $0x18] sm:$0xf]
  %v4480 = vld [vmem:[%s6 + $0x1c] sm:$0xf]
  %v4481 = vld [vmem:[%s6 + $0x20] sm:$0xf]
  %v4482 = vld [vmem:[%s6 + $0x24] sm:$0xf]
  %v4483 = vld [vmem:[%s6 + $0x28] sm:$0xf]
  %v4484 = vld [vmem:[%s6 + $0x2c] sm:$0xf]
  %v4485 = vld [vmem:[%s6 + $0x30] sm:$0xf]
  %v4486 = vld [vmem:[%s6 + $0x34] sm:$0xf]
  %v4487 = vld [vmem:[#allocation3 + $0x20] sm:$0xf]
  %s4488 = scalar_lea.vmem %s6, 56
  %v4489 = vld [vmem:[%s4488] sm:$0xf]
  %v4490 = vld [vmem:[%s4488 + $0x4] sm:$0xf]
  %v4491 = vld [vmem:[%s4488 + $0x8] sm:$0xf]
  %v4492 = vld [vmem:[%s4488 + $0xc] sm:$0xf]
  %v4493 = vld [vmem:[%s4488 + $0x10] sm:$0xf]
  %v4494 = vld [vmem:[%s4488 + $0x14] sm:$0xf]
  %v4495 = vld [vmem:[%s4488 + $0x18] sm:$0xf]
  %v4496 = vld [vmem:[%s4488 + $0x1c] sm:$0xf]
  %v4497 = vld [vmem:[%s4488 + $0x20] sm:$0xf]
  %v4498 = vld [vmem:[%s4488 + $0x24] sm:$0xf]
  %v4499 = vld [vmem:[%s4488 + $0x28] sm:$0xf]
  %v4500 = vld [vmem:[%s4488 + $0x2c] sm:$0xf]
  %v4501 = vld [vmem:[%s4488 + $0x30] sm:$0xf]
  %v4502 = vld [vmem:[%s4488 + $0x34] sm:$0xf]
  %v4511 = vunpack.c.l.b16 %v4466
  %v4512 = vunpack.c.l.b16 %v4467
  %v4513 = vunpack.c.l.b16 %v4468
  %v4514 = vunpack.c.l.b16 %v4469
  %v4515 = vunpack.c.l.b16 %v4470
  %v4516 = vunpack.c.l.b16 %v4471
  %v4517 = vunpack.c.l.b16 %v4472
  %v4518 = vunpack.c.l.b16 %v4487
  %v4519 = vpack.c.b16 %v4512, %v4511
  %v4520 = vpack.c.b16 %v4514, %v4513
  %v4521 = vpack.c.b16 %v4516, %v4515
  %v4522 = vpack.c.b16 %v4518, %v4517
  %v4537 = vunpack.c.l.b16 %v4489
  %v4538 = vunpack.c.l.b16 %v4490
  %v4539 = vunpack.c.l.b16 %v4491
  %v4540 = vunpack.c.l.b16 %v4492
  %v4541 = vunpack.c.l.b16 %v4493
  %v4542 = vunpack.c.l.b16 %v4494
  %v4543 = vunpack.c.l.b16 %v4495
  %v4544 = vunpack.c.l.b16 %v4496
  %v4545 = vunpack.c.l.b16 %v4497
  %v4546 = vunpack.c.l.b16 %v4498
  %v4547 = vunpack.c.l.b16 %v4499
  %v4548 = vunpack.c.l.b16 %v4500
  %v4549 = vunpack.c.l.b16 %v4501
  %v4550 = vunpack.c.l.b16 %v4502
  %v4551 = vpack.c.b16 %v4538, %v4537
  %v4552 = vpack.c.b16 %v4540, %v4539
  %v4553 = vpack.c.b16 %v4542, %v4541
  %v4554 = vpack.c.b16 %v4544, %v4543
  %v4555 = vpack.c.b16 %v4546, %v4545
  %v4556 = vpack.c.b16 %v4548, %v4547
  %v4557 = vpack.c.b16 %v4550, %v4549
  %vm4565 = vcmask 916480
  %v4567 = vsel %vm4565, %v4519, 0
  %v4570 = vsel %vm4565, %v4520, 0
  %v4573 = vsel %vm4565, %v4521, 0
  %v4576 = vsel %vm4565, %v4522, 0
  %4578 = vmatprep.subr.bf16.mxu0 0
  %4579 = vmatpush1.bf16.msra.mxu0 0
  %4580 = vmatprep.subr.bf16.mxu0 0
  %4581 = vmatpush1.bf16.msra.mxu0 %v4557
  %4582 = vmatprep.subr.bf16.mxu0 0
  %4583 = vmatpush1.bf16.msra.mxu0 %v4556
  %4584 = vmatprep.subr.bf16.mxu0 0
  %4585 = vmatpush1.bf16.msra.mxu0 %v4555
  %4586 = vmatprep.subr.bf16.mxu0 0
  %4587 = vmatpush1.bf16.msra.mxu0 %v4554
  %4588 = vmatprep.subr.bf16.mxu0 0
  %4589 = vmatpush1.bf16.msra.mxu0 %v4553
  %4590 = vmatprep.subr.bf16.mxu0 0
  %4591 = vmatpush1.bf16.msra.mxu0 %v4552
  %4592 = vmatprep.subr.bf16.mxu0 0
  %4593 = vmatpush1.bf16.msra.mxu0 %v4551
  %4594 = vmatprep.subr.bf16.mxu0 0
  %4595 = vmatpush2.bf16.msra.mxu0 0
  %4596 = vmatprep.subr.bf16.mxu0 0
  %4597 = vmatpush2.bf16.msra.mxu0 0
  %4598 = vmatprep.subr.bf16.mxu0 0
  %4599 = vmatpush2.bf16.msra.mxu0 0
  %4600 = vmatprep.subr.bf16.mxu0 0
  %4601 = vmatpush2.bf16.msra.mxu0 0
  %4602 = vmatprep.subr.bf16.mxu0 0
  %4603 = vmatpush2.bf16.msra.mxu0 0
  %4604 = vmatprep.subr.bf16.mxu0 0
  %4605 = vmatpush2.bf16.msra.mxu0 0
  %4606 = vmatprep.subr.bf16.mxu0 0
  %4607 = vmatpush2.bf16.msra.mxu0 0
  %4608 = vmatprep.subr.bf16.mxu0 0
  %4609 = vmatpush2.bf16.msra.mxu0 0
  %4610 = vmatprep.mubr.bf16.mxu0 0
  %4611 = vmatmul.mubr.bf16.gmra.mxu0 %v4567
  %v4612 = vpop.f32.mrf.mxu0
  %v4613 = vadd.f32 0.0, %v4612
  %v4614 = vpop.f32.mrf.mxu0
  %v4615 = vpop.f32.mrf.mxu0
  %v4616 = vadd.f32 0.0, %v4615
  %v4617 = vpop.f32.mrf.mxu0
  %4618 = vmatprep.mubr.bf16.mxu0 0
  %4619 = vmatmul.mubr.bf16.gmra.mxu0 %v4570
  %v4620 = vpop.f32.mrf.mxu0
  %v4621 = vadd.f32 0.0, %v4620
  %v4622 = vpop.f32.mrf.mxu0
  %v4623 = vpop.f32.mrf.mxu0
  %v4624 = vadd.f32 0.0, %v4623
  %v4625 = vpop.f32.mrf.mxu0
  %4626 = vmatprep.mubr.bf16.mxu0 0
  %4627 = vmatmul.mubr.bf16.gmra.mxu0 %v4573
  %v4628 = vpop.f32.mrf.mxu0
  %v4629 = vadd.f32 0.0, %v4628
  %v4630 = vpop.f32.mrf.mxu0
  %v4631 = vpop.f32.mrf.mxu0
  %v4632 = vadd.f32 0.0, %v4631
  %v4633 = vpop.f32.mrf.mxu0
  %4634 = vmatprep.mubr.bf16.mxu0 0
  %4635 = vmatmul.mubr.bf16.gmra.mxu0 %v4576
  %v4636 = vpop.f32.mrf.mxu0
  %v4637 = vadd.f32 0.0, %v4636
  %v4638 = vpop.f32.mrf.mxu0
  %v4639 = vpop.f32.mrf.mxu0
  %v4640 = vadd.f32 0.0, %v4639
  %v4641 = vpop.f32.mrf.mxu0
  %4642 = vdwg.mxu0
  %v4644 = vunpack.c.l.b16 %v4465
  %v4645 = vpack.c.b16 %v4511, %v4644
  %v4646 = vpack.c.b16 %v4513, %v4512
  %v4647 = vpack.c.b16 %v4515, %v4514
  %v4648 = vpack.c.b16 %v4517, %v4516
  %v4663 = vunpack.c.l.b16 %v4473
  %v4664 = vunpack.c.l.b16 %v4474
  %v4665 = vunpack.c.l.b16 %v4475
  %v4666 = vunpack.c.l.b16 %v4476
  %v4667 = vunpack.c.l.b16 %v4477
  %v4668 = vunpack.c.l.b16 %v4478
  %v4669 = vunpack.c.l.b16 %v4479
  %v4670 = vunpack.c.l.b16 %v4480
  %v4671 = vunpack.c.l.b16 %v4481
  %v4672 = vunpack.c.l.b16 %v4482
  %v4673 = vunpack.c.l.b16 %v4483
  %v4674 = vunpack.c.l.b16 %v4484
  %v4675 = vunpack.c.l.b16 %v4485
  %v4676 = vunpack.c.l.b16 %v4486
  %v4677 = vpack.c.b16 %v4664, %v4663
  %v4678 = vpack.c.b16 %v4666, %v4665
  %v4679 = vpack.c.b16 %v4668, %v4667
  %v4680 = vpack.c.b16 %v4670, %v4669
  %v4681 = vpack.c.b16 %v4672, %v4671
  %v4682 = vpack.c.b16 %v4674, %v4673
  %v4683 = vpack.c.b16 %v4676, %v4675
  %v4692 = vsel %vm4565, %v4645, 0
  %v4695 = vsel %vm4565, %v4646, 0
  %v4698 = vsel %vm4565, %v4647, 0
  %v4701 = vsel %vm4565, %v4648, 0
  %4703 = vmatprep.subr.bf16.mxu0 0
  %4704 = vmatpush1.bf16.msra.mxu0 0
  %4705 = vmatprep.subr.bf16.mxu0 0
  %4706 = vmatpush1.bf16.msra.mxu0 %v4683
  %4707 = vmatprep.subr.bf16.mxu0 0
  %4708 = vmatpush1.bf16.msra.mxu0 %v4682
  %4709 = vmatprep.subr.bf16.mxu0 0
  %4710 = vmatpush1.bf16.msra.mxu0 %v4681
  %4711 = vmatprep.subr.bf16.mxu0 0
  %4712 = vmatpush1.bf16.msra.mxu0 %v4680
  %4713 = vmatprep.subr.bf16.mxu0 0
  %4714 = vmatpush1.bf16.msra.mxu0 %v4679
  %4715 = vmatprep.subr.bf16.mxu0 0
  %4716 = vmatpush1.bf16.msra.mxu0 %v4678
  %4717 = vmatprep.subr.bf16.mxu0 0
  %4718 = vmatpush1.bf16.msra.mxu0 %v4677
  %4719 = vmatprep.subr.bf16.mxu0 0
  %4720 = vmatpush2.bf16.msra.mxu0 0
  %4721 = vmatprep.subr.bf16.mxu0 0
  %4722 = vmatpush2.bf16.msra.mxu0 0
  %4723 = vmatprep.subr.bf16.mxu0 0
  %4724 = vmatpush2.bf16.msra.mxu0 0
  %4725 = vmatprep.subr.bf16.mxu0 0
  %4726 = vmatpush2.bf16.msra.mxu0 0
  %4727 = vmatprep.subr.bf16.mxu0 0
  %4728 = vmatpush2.bf16.msra.mxu0 0
  %4729 = vmatprep.subr.bf16.mxu0 0
  %4730 = vmatpush2.bf16.msra.mxu0 0
  %4731 = vmatprep.subr.bf16.mxu0 0
  %4732 = vmatpush2.bf16.msra.mxu0 0
  %4733 = vmatprep.subr.bf16.mxu0 0
  %4734 = vmatpush2.bf16.msra.mxu0 0
  %4735 = vmatprep.mubr.bf16.mxu0 0
  %4736 = vmatmul.mubr.bf16.gmra.mxu0 %v4692
  %v4737 = vpop.f32.mrf.mxu0
  %v4738 = vadd.f32 %v4613, %v4737
  %v4739 = vpop.f32.mrf.mxu0
  %v4740 = vpop.f32.mrf.mxu0
  %v4741 = vadd.f32 %v4616, %v4740
  %v4742 = vpop.f32.mrf.mxu0
  %4743 = vmatprep.mubr.bf16.mxu0 0
  %4744 = vmatmul.mubr.bf16.gmra.mxu0 %v4695
  %v4745 = vpop.f32.mrf.mxu0
  %v4746 = vadd.f32 %v4621, %v4745
  %v4747 = vpop.f32.mrf.mxu0
  %v4748 = vpop.f32.mrf.mxu0
  %v4749 = vadd.f32 %v4624, %v4748
  %v4750 = vpop.f32.mrf.mxu0
  %4751 = vmatprep.mubr.bf16.mxu0 0
  %4752 = vmatmul.mubr.bf16.gmra.mxu0 %v4698
  %v4753 = vpop.f32.mrf.mxu0
  %v4754 = vadd.f32 %v4629, %v4753
  %v4755 = vpop.f32.mrf.mxu0
  %v4756 = vpop.f32.mrf.mxu0
  %v4757 = vadd.f32 %v4632, %v4756
  %v4758 = vpop.f32.mrf.mxu0
  %4759 = vmatprep.mubr.bf16.mxu0 0
  %4760 = vmatmul.mubr.bf16.gmra.mxu0 %v4701
  %v4761 = vpop.f32.mrf.mxu0
  %v4762 = vadd.f32 %v4637, %v4761
  %v4763 = vpop.f32.mrf.mxu0
  %v4764 = vpop.f32.mrf.mxu0
  %v4765 = vadd.f32 %v4640, %v4764
  %v4766 = vpop.f32.mrf.mxu0
  %4767 = vdwg.mxu0
  %v4768 = vld [vmem:[#allocation3 + $0x8] sm:$0xf]
  %v4769 = vld [vmem:[#allocation3 + $0xc] sm:$0xf]
  %v4770 = vld [vmem:[#allocation3 + $0x10] sm:$0xf]
  %v4771 = vld [vmem:[#allocation3 + $0x14] sm:$0xf]
  %v4772 = vld [vmem:[#allocation3 + $0x18] sm:$0xf]
  %v4773 = vld [vmem:[#allocation3 + $0x1c] sm:$0xf]
  %v4774 = vld [vmem:[#allocation3 + $0x20] sm:$0xf]
  %v4775 = vld [vmem:[#allocation3 + $0x24] sm:$0xf]
  %s4776 = scalar_lea.vmem %s6, 112
  %v4777 = vld [vmem:[%s4776] sm:$0xf]
  %v4778 = vld [vmem:[%s4776 + $0x4] sm:$0xf]
  %v4779 = vld [vmem:[%s4776 + $0x8] sm:$0xf]
  %v4780 = vld [vmem:[%s4776 + $0xc] sm:$0xf]
  %v4781 = vld [vmem:[%s4776 + $0x10] sm:$0xf]
  %v4782 = vld [vmem:[%s4776 + $0x14] sm:$0xf]
  %v4783 = vld [vmem:[%s4776 + $0x18] sm:$0xf]
  %v4784 = vld [vmem:[%s4776 + $0x1c] sm:$0xf]
  %v4785 = vld [vmem:[%s4776 + $0x20] sm:$0xf]
  %v4786 = vld [vmem:[%s4776 + $0x24] sm:$0xf]
  %v4787 = vld [vmem:[%s4776 + $0x28] sm:$0xf]
  %v4788 = vld [vmem:[%s4776 + $0x2c] sm:$0xf]
  %v4789 = vld [vmem:[%s4776 + $0x30] sm:$0xf]
  %v4790 = vld [vmem:[%s4776 + $0x34] sm:$0xf]
  %v4799 = vunpack.c.l.b16 %v4768
  %v4800 = vunpack.c.l.b16 %v4769
  %v4801 = vunpack.c.l.b16 %v4770
  %v4802 = vunpack.c.l.b16 %v4771
  %v4803 = vunpack.c.l.b16 %v4772
  %v4804 = vunpack.c.l.b16 %v4773
  %v4805 = vunpack.c.l.b16 %v4774
  %v4806 = vunpack.c.l.b16 %v4775
  %v4807 = vpack.c.b16 %v4800, %v4799
  %v4808 = vpack.c.b16 %v4802, %v4801
  %v4809 = vpack.c.b16 %v4804, %v4803
  %v4810 = vpack.c.b16 %v4806, %v4805
  %v4825 = vunpack.c.l.b16 %v4777
  %v4826 = vunpack.c.l.b16 %v4778
  %v4827 = vunpack.c.l.b16 %v4779
  %v4828 = vunpack.c.l.b16 %v4780
  %v4829 = vunpack.c.l.b16 %v4781
  %v4830 = vunpack.c.l.b16 %v4782
  %v4831 = vunpack.c.l.b16 %v4783
  %v4832 = vunpack.c.l.b16 %v4784
  %v4833 = vunpack.c.l.b16 %v4785
  %v4834 = vunpack.c.l.b16 %v4786
  %v4835 = vunpack.c.l.b16 %v4787
  %v4836 = vunpack.c.l.b16 %v4788
  %v4837 = vunpack.c.l.b16 %v4789
  %v4838 = vunpack.c.l.b16 %v4790
  %v4839 = vpack.c.b16 %v4826, %v4825
  %v4840 = vpack.c.b16 %v4828, %v4827
  %v4841 = vpack.c.b16 %v4830, %v4829
  %v4842 = vpack.c.b16 %v4832, %v4831
  %v4843 = vpack.c.b16 %v4834, %v4833
  %v4844 = vpack.c.b16 %v4836, %v4835
  %v4845 = vpack.c.b16 %v4838, %v4837
  %v4854 = vsel %vm4565, %v4807, 0
  %v4857 = vsel %vm4565, %v4808, 0
  %v4860 = vsel %vm4565, %v4809, 0
  %v4863 = vsel %vm4565, %v4810, 0
  %4865 = vmatprep.subr.bf16.mxu0 0
  %4866 = vmatpush1.bf16.msra.mxu0 0
  %4867 = vmatprep.subr.bf16.mxu0 0
  %4868 = vmatpush1.bf16.msra.mxu0 %v4845
  %4869 = vmatprep.subr.bf16.mxu0 0
  %4870 = vmatpush1.bf16.msra.mxu0 %v4844
  %4871 = vmatprep.subr.bf16.mxu0 0
  %4872 = vmatpush1.bf16.msra.mxu0 %v4843
  %4873 = vmatprep.subr.bf16.mxu0 0
  %4874 = vmatpush1.bf16.msra.mxu0 %v4842
  %4875 = vmatprep.subr.bf16.mxu0 0
  %4876 = vmatpush1.bf16.msra.mxu0 %v4841
  %4877 = vmatprep.subr.bf16.mxu0 0
  %4878 = vmatpush1.bf16.msra.mxu0 %v4840
  %4879 = vmatprep.subr.bf16.mxu0 0
  %4880 = vmatpush1.bf16.msra.mxu0 %v4839
  %4881 = vmatprep.subr.bf16.mxu0 0
  %4882 = vmatpush2.bf16.msra.mxu0 0
  %4883 = vmatprep.subr.bf16.mxu0 0
  %4884 = vmatpush2.bf16.msra.mxu0 0
  %4885 = vmatprep.subr.bf16.mxu0 0
  %4886 = vmatpush2.bf16.msra.mxu0 0
  %4887 = vmatprep.subr.bf16.mxu0 0
  %4888 = vmatpush2.bf16.msra.mxu0 0
  %4889 = vmatprep.subr.bf16.mxu0 0
  %4890 = vmatpush2.bf16.msra.mxu0 0
  %4891 = vmatprep.subr.bf16.mxu0 0
  %4892 = vmatpush2.bf16.msra.mxu0 0
  %4893 = vmatprep.subr.bf16.mxu0 0
  %4894 = vmatpush2.bf16.msra.mxu0 0
  %4895 = vmatprep.subr.bf16.mxu0 0
  %4896 = vmatpush2.bf16.msra.mxu0 0
  %4897 = vmatprep.mubr.bf16.mxu0 0
  %4898 = vmatmul.mubr.bf16.gmra.mxu0 %v4854
  %v4899 = vpop.f32.mrf.mxu0
  %v4900 = vadd.f32 0.0, %v4899
  %v4901 = vpop.f32.mrf.mxu0
  %v4902 = vpop.f32.mrf.mxu0
  %v4903 = vadd.f32 0.0, %v4902
  %v4904 = vpop.f32.mrf.mxu0
  %4905 = vmatprep.mubr.bf16.mxu0 0
  %4906 = vmatmul.mubr.bf16.gmra.mxu0 %v4857
  %v4907 = vpop.f32.mrf.mxu0
  %v4908 = vadd.f32 0.0, %v4907
  %v4909 = vpop.f32.mrf.mxu0
  %v4910 = vpop.f32.mrf.mxu0
  %v4911 = vadd.f32 0.0, %v4910
  %v4912 = vpop.f32.mrf.mxu0
  %4913 = vmatprep.mubr.bf16.mxu0 0
  %4914 = vmatmul.mubr.bf16.gmra.mxu0 %v4860
  %v4915 = vpop.f32.mrf.mxu0
  %v4916 = vadd.f32 0.0, %v4915
  %v4917 = vpop.f32.mrf.mxu0
  %v4918 = vpop.f32.mrf.mxu0
  %v4919 = vadd.f32 0.0, %v4918
  %v4920 = vpop.f32.mrf.mxu0
  %4921 = vmatprep.mubr.bf16.mxu0 0
  %4922 = vmatmul.mubr.bf16.gmra.mxu0 %v4863
  %v4923 = vpop.f32.mrf.mxu0
  %v4924 = vadd.f32 0.0, %v4923
  %v4925 = vpop.f32.mrf.mxu0
  %v4926 = vpop.f32.mrf.mxu0
  %v4927 = vadd.f32 0.0, %v4926
  %v4928 = vpop.f32.mrf.mxu0
  %4929 = vdwg.mxu0
  %v4930 = vadd.f32 %v4738, %v4900
  %v4931 = vadd.f32 %v4741, %v4903
  %v4932 = vadd.f32 %v4746, %v4908
  %v4933 = vadd.f32 %v4749, %v4911
  %v4934 = vadd.f32 %v4754, %v4916
  %v4935 = vadd.f32 %v4757, %v4919
  %v4936 = vadd.f32 %v4762, %v4924
  %v4937 = vadd.f32 %v4765, %v4927
  %v4938 = vld [vmem:[%s7] sm:$0x1]
  %v4940 = vlaneseq
  %v4941 = vshrl.u32 %v4940, 7
  %v4942 = vsub.s32 0, %v4941
  %v4943 = vrot.slane %v4938, %v4942
  %v4945 = vadd.f32 %v4930, %v4943
  %v4946 = vadd.f32 %v4931, %v4943
  %v4947 = vadd.f32 %v4932, %v4943
  %v4948 = vadd.f32 %v4933, %v4943
  %v4949 = vadd.f32 %v4934, %v4943
  %v4950 = vadd.f32 %v4935, %v4943
  %v4951 = vadd.f32 %v4936, %v4943
  %v4952 = vadd.f32 %v4937, %v4943
  %v4953 = vmax.f32 %v4945, 0.0
  %v4954 = vmax.f32 %v4946, 0.0
  %v4955 = vmax.f32 %v4947, 0.0
  %v4956 = vmax.f32 %v4948, 0.0
  %v4957 = vmax.f32 %v4949, 0.0
  %v4958 = vmax.f32 %v4950, 0.0
  %v4959 = vmax.f32 %v4951, 0.0
  %v4960 = vmax.f32 %v4952, 0.0
  %v4961 = vpack.c.bf16 %v4954, %v4953
  %v4962 = vpack.c.bf16 %v4956, %v4955
  %v4963 = vpack.c.bf16 %v4958, %v4957
  %v4964 = vpack.c.bf16 %v4960, %v4959
  %v4969 = vunpack.c.l.b16 %v4961
  %v4970 = vunpack.c.h.b16 %v4961
  %v4971 = vunpack.c.l.b16 %v4962
  %v4972 = vunpack.c.h.b16 %v4962
  %v4973 = vunpack.c.l.b16 %v4963
  %v4974 = vunpack.c.h.b16 %v4963
  %v4975 = vunpack.c.l.b16 %v4964
  %v4976 = vunpack.c.h.b16 %v4964
  %v4977 = vpack.c.b16 %v4969, %v4969
  %v4978 = vpack.c.b16 %v4970, %v4970
  %v4979 = vpack.c.b16 %v4971, %v4971
  %v4980 = vpack.c.b16 %v4972, %v4972
  %v4981 = vpack.c.b16 %v4973, %v4973
  %v4982 = vpack.c.b16 %v4974, %v4974
  %v4983 = vpack.c.b16 %v4975, %v4975
  %v4984 = vpack.c.b16 %v4976, %v4976
  %vm4993 = vcmask 781312
  %4994 = vst.msk [vmem:[#allocation4] sm:$0xf] %vm4993, %v4977
  %4995 = vst.msk [vmem:[#allocation4 + $0x4] sm:$0xf] %vm4993, %v4978
  %4996 = vst.msk [vmem:[#allocation4 + $0x8] sm:$0xf] %vm4993, %v4979
  %4997 = vst.msk [vmem:[#allocation4 + $0xc] sm:$0xf] %vm4993, %v4980
  %4998 = vst.msk [vmem:[#allocation4 + $0x10] sm:$0xf] %vm4993, %v4981
  %4999 = vst.msk [vmem:[#allocation4 + $0x14] sm:$0xf] %vm4993, %v4982
  %5000 = vst.msk [vmem:[#allocation4 + $0x18] sm:$0xf] %vm4993, %v4983
  %5001 = vst.msk [vmem:[#allocation4 + $0x1c] sm:$0xf] %vm4993, %v4984
  %v5002 = vld [vmem:[%s1] sm:$0xf]
  %v5003 = vld [vmem:[%s9] sm:$0xf]
  %v5004 = vld [vmem:[%s9 + $0x4] sm:$0xf]
  %v5005 = vld [vmem:[%s9 + $0x8] sm:$0xf]
  %v5006 = vld [vmem:[%s9 + $0xc] sm:$0xf]
  %v5007 = vld [vmem:[%s9 + $0x10] sm:$0xf]
  %v5008 = vld [vmem:[%s9 + $0x14] sm:$0xf]
  %v5009 = vld [vmem:[%s9 + $0x18] sm:$0xf]
  %v5010 = vld [vmem:[%s9 + $0x1c] sm:$0xf]
  %v5011 = vld [vmem:[%s9 + $0x20] sm:$0xf]
  %v5012 = vld [vmem:[%s9 + $0x24] sm:$0xf]
  %v5013 = vld [vmem:[%s9 + $0x28] sm:$0xf]
  %v5014 = vld [vmem:[%s9 + $0x2c] sm:$0xf]
  %v5015 = vld [vmem:[%s9 + $0x30] sm:$0xf]
  %v5016 = vld [vmem:[%s9 + $0x34] sm:$0xf]
  %v5017 = vld [vmem:[%s9 + $0x38] sm:$0xf]
  %v5018 = vld [vmem:[%s9 + $0x3c] sm:$0xf]
  %v5019 = vld [vmem:[#allocation4] sm:$0xf]
  %v5020 = vld [vmem:[%s8] sm:$0xf]
  %v5021 = vld [vmem:[%s8 + $0x4] sm:$0xf]
  %v5022 = vld [vmem:[%s8 + $0x8] sm:$0xf]
  %v5023 = vld [vmem:[%s8 + $0xc] sm:$0xf]
  %v5024 = vld [vmem:[%s8 + $0x10] sm:$0xf]
  %v5025 = vld [vmem:[%s8 + $0x14] sm:$0xf]
  %v5026 = vld [vmem:[%s8 + $0x18] sm:$0xf]
  %v5027 = vld [vmem:[%s8 + $0x1c] sm:$0xf]
  %v5028 = vld [vmem:[%s8 + $0x20] sm:$0xf]
  %v5029 = vld [vmem:[%s8 + $0x24] sm:$0xf]
  %v5030 = vld [vmem:[%s8 + $0x28] sm:$0xf]
  %v5031 = vld [vmem:[%s8 + $0x2c] sm:$0xf]
  %v5044 = vunpack.c.l.b16 %v5020
  %v5045 = vunpack.c.l.b16 %v5021
  %v5046 = vunpack.c.l.b16 %v5022
  %v5047 = vunpack.c.l.b16 %v5023
  %v5048 = vunpack.c.l.b16 %v5024
  %v5049 = vunpack.c.l.b16 %v5025
  %v5050 = vunpack.c.l.b16 %v5026
  %v5051 = vunpack.c.l.b16 %v5027
  %v5052 = vunpack.c.l.b16 %v5028
  %v5053 = vunpack.c.l.b16 %v5029
  %v5054 = vunpack.c.l.b16 %v5030
  %v5055 = vunpack.c.l.b16 %v5031
  %v5056 = vpack.c.b16 %v5045, %v5044
  %v5057 = vpack.c.b16 %v5047, %v5046
  %v5058 = vpack.c.b16 %v5049, %v5048
  %v5059 = vpack.c.b16 %v5051, %v5050
  %v5060 = vpack.c.b16 %v5053, %v5052
  %v5061 = vpack.c.b16 %v5055, %v5054
  %vm5068 = vcmask 785408
  %v5070 = vsel %vm5068, %v5019, 0
  %5072 = vmatprep.subr.bf16.mxu0 0
  %5073 = vmatpush1.bf16.msra.mxu0 0
  %5074 = vmatprep.subr.bf16.mxu0 0
  %5075 = vmatpush1.bf16.msra.mxu0 0
  %5076 = vmatprep.subr.bf16.mxu0 0
  %5077 = vmatpush1.bf16.msra.mxu0 %v5061
  %5078 = vmatprep.subr.bf16.mxu0 0
  %5079 = vmatpush1.bf16.msra.mxu0 %v5060
  %5080 = vmatprep.subr.bf16.mxu0 0
  %5081 = vmatpush1.bf16.msra.mxu0 %v5059
  %5082 = vmatprep.subr.bf16.mxu0 0
  %5083 = vmatpush1.bf16.msra.mxu0 %v5058
  %5084 = vmatprep.subr.bf16.mxu0 0
  %5085 = vmatpush1.bf16.msra.mxu0 %v5057
  %5086 = vmatprep.subr.bf16.mxu0 0
  %5087 = vmatpush1.bf16.msra.mxu0 %v5056
  %5088 = vmatprep.subr.bf16.mxu0 0
  %5089 = vmatpush2.bf16.msra.mxu0 0
  %5090 = vmatprep.subr.bf16.mxu0 0
  %5091 = vmatpush2.bf16.msra.mxu0 0
  %5092 = vmatprep.subr.bf16.mxu0 0
  %5093 = vmatpush2.bf16.msra.mxu0 0
  %5094 = vmatprep.subr.bf16.mxu0 0
  %5095 = vmatpush2.bf16.msra.mxu0 0
  %5096 = vmatprep.subr.bf16.mxu0 0
  %5097 = vmatpush2.bf16.msra.mxu0 0
  %5098 = vmatprep.subr.bf16.mxu0 0
  %5099 = vmatpush2.bf16.msra.mxu0 0
  %5100 = vmatprep.subr.bf16.mxu0 0
  %5101 = vmatpush2.bf16.msra.mxu0 0
  %5102 = vmatprep.subr.bf16.mxu0 0
  %5103 = vmatpush2.bf16.msra.mxu0 0
  %5104 = vmatprep.mubr.bf16.mxu0 0
  %5105 = vmatmul.mubr.bf16.gmra.mxu0 %v5070
  %v5106 = vpop.f32.mrf.mxu0
  %v5107 = vadd.f32 0.0, %v5106
  %v5108 = vpop.f32.mrf.mxu0
  %v5109 = vpop.f32.mrf.mxu0
  %v5110 = vpop.f32.mrf.mxu0
  %5111 = vdwg.mxu0
  %v5128 = vunpack.c.l.b16 %v5003
  %v5129 = vunpack.c.l.b16 %v5004
  %v5130 = vunpack.c.l.b16 %v5005
  %v5131 = vunpack.c.l.b16 %v5006
  %v5132 = vunpack.c.l.b16 %v5007
  %v5133 = vunpack.c.l.b16 %v5008
  %v5134 = vunpack.c.l.b16 %v5009
  %v5135 = vunpack.c.l.b16 %v5010
  %v5136 = vunpack.c.l.b16 %v5011
  %v5137 = vunpack.c.l.b16 %v5012
  %v5138 = vunpack.c.l.b16 %v5013
  %v5139 = vunpack.c.l.b16 %v5014
  %v5140 = vunpack.c.l.b16 %v5015
  %v5141 = vunpack.c.l.b16 %v5016
  %v5142 = vunpack.c.l.b16 %v5017
  %v5143 = vunpack.c.l.b16 %v5018
  %v5144 = vpack.c.b16 %v5129, %v5128
  %v5145 = vpack.c.b16 %v5131, %v5130
  %v5146 = vpack.c.b16 %v5133, %v5132
  %v5147 = vpack.c.b16 %v5135, %v5134
  %v5148 = vpack.c.b16 %v5137, %v5136
  %v5149 = vpack.c.b16 %v5139, %v5138
  %v5150 = vpack.c.b16 %v5141, %v5140
  %v5151 = vpack.c.b16 %v5143, %v5142
  %5160 = vmatprep.subr.bf16.mxu0 0
  %5161 = vmatpush1.bf16.msra.mxu0 %v5151
  %5162 = vmatprep.subr.bf16.mxu0 0
  %5163 = vmatpush1.bf16.msra.mxu0 %v5150
  %5164 = vmatprep.subr.bf16.mxu0 0
  %5165 = vmatpush1.bf16.msra.mxu0 %v5149
  %5166 = vmatprep.subr.bf16.mxu0 0
  %5167 = vmatpush1.bf16.msra.mxu0 %v5148
  %5168 = vmatprep.subr.bf16.mxu0 0
  %5169 = vmatpush1.bf16.msra.mxu0 %v5147
  %5170 = vmatprep.subr.bf16.mxu0 0
  %5171 = vmatpush1.bf16.msra.mxu0 %v5146
  %5172 = vmatprep.subr.bf16.mxu0 0
  %5173 = vmatpush1.bf16.msra.mxu0 %v5145
  %5174 = vmatprep.subr.bf16.mxu0 0
  %5175 = vmatpush1.bf16.msra.mxu0 %v5144
  %5176 = vmatprep.subr.bf16.mxu0 0
  %5177 = vmatpush2.bf16.msra.mxu0 0
  %5178 = vmatprep.subr.bf16.mxu0 0
  %5179 = vmatpush2.bf16.msra.mxu0 0
  %5180 = vmatprep.subr.bf16.mxu0 0
  %5181 = vmatpush2.bf16.msra.mxu0 0
  %5182 = vmatprep.subr.bf16.mxu0 0
  %5183 = vmatpush2.bf16.msra.mxu0 0
  %5184 = vmatprep.subr.bf16.mxu0 0
  %5185 = vmatpush2.bf16.msra.mxu0 0
  %5186 = vmatprep.subr.bf16.mxu0 0
  %5187 = vmatpush2.bf16.msra.mxu0 0
  %5188 = vmatprep.subr.bf16.mxu0 0
  %5189 = vmatpush2.bf16.msra.mxu0 0
  %5190 = vmatprep.subr.bf16.mxu0 0
  %5191 = vmatpush2.bf16.msra.mxu0 0
  %5192 = vmatprep.mubr.bf16.mxu0 0
  %5193 = vmatmul.mubr.bf16.gmra.mxu0 %v5002
  %v5194 = vpop.f32.mrf.mxu0
  %v5195 = vadd.f32 %v5107, %v5194
  %v5196 = vpop.f32.mrf.mxu0
  %v5197 = vpop.f32.mrf.mxu0
  %v5198 = vpop.f32.mrf.mxu0
  %5199 = vdwg.mxu0
  %v5200 = vld [vmem:[#allocation4 + $0x4] sm:$0xf]
  %s5201 = scalar_lea.vmem %s8, 48
  %v5202 = vld [vmem:[%s5201] sm:$0xf]
  %v5203 = vld [vmem:[%s5201 + $0x4] sm:$0xf]
  %v5204 = vld [vmem:[%s5201 + $0x8] sm:$0xf]
  %v5205 = vld [vmem:[%s5201 + $0xc] sm:$0xf]
  %v5206 = vld [vmem:[%s5201 + $0x10] sm:$0xf]
  %v5207 = vld [vmem:[%s5201 + $0x14] sm:$0xf]
  %v5208 = vld [vmem:[%s5201 + $0x18] sm:$0xf]
  %v5209 = vld [vmem:[%s5201 + $0x1c] sm:$0xf]
  %v5210 = vld [vmem:[%s5201 + $0x20] sm:$0xf]
  %v5211 = vld [vmem:[%s5201 + $0x24] sm:$0xf]
  %v5212 = vld [vmem:[%s5201 + $0x28] sm:$0xf]
  %v5213 = vld [vmem:[%s5201 + $0x2c] sm:$0xf]
  %v5226 = vunpack.c.l.b16 %v5202
  %v5227 = vunpack.c.l.b16 %v5203
  %v5228 = vunpack.c.l.b16 %v5204
  %v5229 = vunpack.c.l.b16 %v5205
  %v5230 = vunpack.c.l.b16 %v5206
  %v5231 = vunpack.c.l.b16 %v5207
  %v5232 = vunpack.c.l.b16 %v5208
  %v5233 = vunpack.c.l.b16 %v5209
  %v5234 = vunpack.c.l.b16 %v5210
  %v5235 = vunpack.c.l.b16 %v5211
  %v5236 = vunpack.c.l.b16 %v5212
  %v5237 = vunpack.c.l.b16 %v5213
  %v5238 = vpack.c.b16 %v5227, %v5226
  %v5239 = vpack.c.b16 %v5229, %v5228
  %v5240 = vpack.c.b16 %v5231, %v5230
  %v5241 = vpack.c.b16 %v5233, %v5232
  %v5242 = vpack.c.b16 %v5235, %v5234
  %v5243 = vpack.c.b16 %v5237, %v5236
  %v5251 = vsel %vm5068, %v5200, 0
  %5253 = vmatprep.subr.bf16.mxu0 0
  %5254 = vmatpush1.bf16.msra.mxu0 0
  %5255 = vmatprep.subr.bf16.mxu0 0
  %5256 = vmatpush1.bf16.msra.mxu0 0
  %5257 = vmatprep.subr.bf16.mxu0 0
  %5258 = vmatpush1.bf16.msra.mxu0 %v5243
  %5259 = vmatprep.subr.bf16.mxu0 0
  %5260 = vmatpush1.bf16.msra.mxu0 %v5242
  %5261 = vmatprep.subr.bf16.mxu0 0
  %5262 = vmatpush1.bf16.msra.mxu0 %v5241
  %5263 = vmatprep.subr.bf16.mxu0 0
  %5264 = vmatpush1.bf16.msra.mxu0 %v5240
  %5265 = vmatprep.subr.bf16.mxu0 0
  %5266 = vmatpush1.bf16.msra.mxu0 %v5239
  %5267 = vmatprep.subr.bf16.mxu0 0
  %5268 = vmatpush1.bf16.msra.mxu0 %v5238
  %5269 = vmatprep.subr.bf16.mxu0 0
  %5270 = vmatpush2.bf16.msra.mxu0 0
  %5271 = vmatprep.subr.bf16.mxu0 0
  %5272 = vmatpush2.bf16.msra.mxu0 0
  %5273 = vmatprep.subr.bf16.mxu0 0
  %5274 = vmatpush2.bf16.msra.mxu0 0
  %5275 = vmatprep.subr.bf16.mxu0 0
  %5276 = vmatpush2.bf16.msra.mxu0 0
  %5277 = vmatprep.subr.bf16.mxu0 0
  %5278 = vmatpush2.bf16.msra.mxu0 0
  %5279 = vmatprep.subr.bf16.mxu0 0
  %5280 = vmatpush2.bf16.msra.mxu0 0
  %5281 = vmatprep.subr.bf16.mxu0 0
  %5282 = vmatpush2.bf16.msra.mxu0 0
  %5283 = vmatprep.subr.bf16.mxu0 0
  %5284 = vmatpush2.bf16.msra.mxu0 0
  %5285 = vmatprep.mubr.bf16.mxu0 0
  %5286 = vmatmul.mubr.bf16.gmra.mxu0 %v5251
  %v5287 = vpop.f32.mrf.mxu0
  %v5288 = vadd.f32 0.0, %v5287
  %v5289 = vpop.f32.mrf.mxu0
  %v5290 = vpop.f32.mrf.mxu0
  %v5291 = vpop.f32.mrf.mxu0
  %5292 = vdwg.mxu0
  %v5293 = vadd.f32 %v5195, %v5288
  %v5294 = vld [vmem:[#allocation4 + $0x8] sm:$0xf]
  %s5295 = scalar_lea.vmem %s8, 96
  %v5296 = vld [vmem:[%s5295] sm:$0xf]
  %v5297 = vld [vmem:[%s5295 + $0x4] sm:$0xf]
  %v5298 = vld [vmem:[%s5295 + $0x8] sm:$0xf]
  %v5299 = vld [vmem:[%s5295 + $0xc] sm:$0xf]
  %v5300 = vld [vmem:[%s5295 + $0x10] sm:$0xf]
  %v5301 = vld [vmem:[%s5295 + $0x14] sm:$0xf]
  %v5302 = vld [vmem:[%s5295 + $0x18] sm:$0xf]
  %v5303 = vld [vmem:[%s5295 + $0x1c] sm:$0xf]
  %v5304 = vld [vmem:[%s5295 + $0x20] sm:$0xf]
  %v5305 = vld [vmem:[%s5295 + $0x24] sm:$0xf]
  %v5306 = vld [vmem:[%s5295 + $0x28] sm:$0xf]
  %v5307 = vld [vmem:[%s5295 + $0x2c] sm:$0xf]
  %v5320 = vunpack.c.l.b16 %v5296
  %v5321 = vunpack.c.l.b16 %v5297
  %v5322 = vunpack.c.l.b16 %v5298
  %v5323 = vunpack.c.l.b16 %v5299
  %v5324 = vunpack.c.l.b16 %v5300
  %v5325 = vunpack.c.l.b16 %v5301
  %v5326 = vunpack.c.l.b16 %v5302
  %v5327 = vunpack.c.l.b16 %v5303
  %v5328 = vunpack.c.l.b16 %v5304
  %v5329 = vunpack.c.l.b16 %v5305
  %v5330 = vunpack.c.l.b16 %v5306
  %v5331 = vunpack.c.l.b16 %v5307
  %v5332 = vpack.c.b16 %v5321, %v5320
  %v5333 = vpack.c.b16 %v5323, %v5322
  %v5334 = vpack.c.b16 %v5325, %v5324
  %v5335 = vpack.c.b16 %v5327, %v5326
  %v5336 = vpack.c.b16 %v5329, %v5328
  %v5337 = vpack.c.b16 %v5331, %v5330
  %v5345 = vsel %vm5068, %v5294, 0
  %5347 = vmatprep.subr.bf16.mxu0 0
  %5348 = vmatpush1.bf16.msra.mxu0 0
  %5349 = vmatprep.subr.bf16.mxu0 0
  %5350 = vmatpush1.bf16.msra.mxu0 0
  %5351 = vmatprep.subr.bf16.mxu0 0
  %5352 = vmatpush1.bf16.msra.mxu0 %v5337
  %5353 = vmatprep.subr.bf16.mxu0 0
  %5354 = vmatpush1.bf16.msra.mxu0 %v5336
  %5355 = vmatprep.subr.bf16.mxu0 0
  %5356 = vmatpush1.bf16.msra.mxu0 %v5335
  %5357 = vmatprep.subr.bf16.mxu0 0
  %5358 = vmatpush1.bf16.msra.mxu0 %v5334
  %5359 = vmatprep.subr.bf16.mxu0 0
  %5360 = vmatpush1.bf16.msra.mxu0 %v5333
  %5361 = vmatprep.subr.bf16.mxu0 0
  %5362 = vmatpush1.bf16.msra.mxu0 %v5332
  %5363 = vmatprep.subr.bf16.mxu0 0
  %5364 = vmatpush2.bf16.msra.mxu0 0
  %5365 = vmatprep.subr.bf16.mxu0 0
  %5366 = vmatpush2.bf16.msra.mxu0 0
  %5367 = vmatprep.subr.bf16.mxu0 0
  %5368 = vmatpush2.bf16.msra.mxu0 0
  %5369 = vmatprep.subr.bf16.mxu0 0
  %5370 = vmatpush2.bf16.msra.mxu0 0
  %5371 = vmatprep.subr.bf16.mxu0 0
  %5372 = vmatpush2.bf16.msra.mxu0 0
  %5373 = vmatprep.subr.bf16.mxu0 0
  %5374 = vmatpush2.bf16.msra.mxu0 0
  %5375 = vmatprep.subr.bf16.mxu0 0
  %5376 = vmatpush2.bf16.msra.mxu0 0
  %5377 = vmatprep.subr.bf16.mxu0 0
  %5378 = vmatpush2.bf16.msra.mxu0 0
  %5379 = vmatprep.mubr.bf16.mxu0 0
  %5380 = vmatmul.mubr.bf16.gmra.mxu0 %v5345
  %v5381 = vpop.f32.mrf.mxu0
  %v5382 = vadd.f32 0.0, %v5381
  %v5383 = vpop.f32.mrf.mxu0
  %v5384 = vpop.f32.mrf.mxu0
  %v5385 = vpop.f32.mrf.mxu0
  %5386 = vdwg.mxu0
  %v5387 = vadd.f32 %v5293, %v5382
  %v5388 = vld [vmem:[#allocation4 + $0xc] sm:$0xf]
  %s5389 = scalar_lea.vmem %s8, 144
  %v5390 = vld [vmem:[%s5389] sm:$0xf]
  %v5391 = vld [vmem:[%s5389 + $0x4] sm:$0xf]
  %v5392 = vld [vmem:[%s5389 + $0x8] sm:$0xf]
  %v5393 = vld [vmem:[%s5389 + $0xc] sm:$0xf]
  %v5394 = vld [vmem:[%s5389 + $0x10] sm:$0xf]
  %v5395 = vld [vmem:[%s5389 + $0x14] sm:$0xf]
  %v5396 = vld [vmem:[%s5389 + $0x18] sm:$0xf]
  %v5397 = vld [vmem:[%s5389 + $0x1c] sm:$0xf]
  %v5398 = vld [vmem:[%s5389 + $0x20] sm:$0xf]
  %v5399 = vld [vmem:[%s5389 + $0x24] sm:$0xf]
  %v5400 = vld [vmem:[%s5389 + $0x28] sm:$0xf]
  %v5401 = vld [vmem:[%s5389 + $0x2c] sm:$0xf]
  %v5414 = vunpack.c.l.b16 %v5390
  %v5415 = vunpack.c.l.b16 %v5391
  %v5416 = vunpack.c.l.b16 %v5392
  %v5417 = vunpack.c.l.b16 %v5393
  %v5418 = vunpack.c.l.b16 %v5394
  %v5419 = vunpack.c.l.b16 %v5395
  %v5420 = vunpack.c.l.b16 %v5396
  %v5421 = vunpack.c.l.b16 %v5397
  %v5422 = vunpack.c.l.b16 %v5398
  %v5423 = vunpack.c.l.b16 %v5399
  %v5424 = vunpack.c.l.b16 %v5400
  %v5425 = vunpack.c.l.b16 %v5401
  %v5426 = vpack.c.b16 %v5415, %v5414
  %v5427 = vpack.c.b16 %v5417, %v5416
  %v5428 = vpack.c.b16 %v5419, %v5418
  %v5429 = vpack.c.b16 %v5421, %v5420
  %v5430 = vpack.c.b16 %v5423, %v5422
  %v5431 = vpack.c.b16 %v5425, %v5424
  %v5439 = vsel %vm5068, %v5388, 0
  %5441 = vmatprep.subr.bf16.mxu0 0
  %5442 = vmatpush1.bf16.msra.mxu0 0
  %5443 = vmatprep.subr.bf16.mxu0 0
  %5444 = vmatpush1.bf16.msra.mxu0 0
  %5445 = vmatprep.subr.bf16.mxu0 0
  %5446 = vmatpush1.bf16.msra.mxu0 %v5431
  %5447 = vmatprep.subr.bf16.mxu0 0
  %5448 = vmatpush1.bf16.msra.mxu0 %v5430
  %5449 = vmatprep.subr.bf16.mxu0 0
  %5450 = vmatpush1.bf16.msra.mxu0 %v5429
  %5451 = vmatprep.subr.bf16.mxu0 0
  %5452 = vmatpush1.bf16.msra.mxu0 %v5428
  %5453 = vmatprep.subr.bf16.mxu0 0
  %5454 = vmatpush1.bf16.msra.mxu0 %v5427
  %5455 = vmatprep.subr.bf16.mxu0 0
  %5456 = vmatpush1.bf16.msra.mxu0 %v5426
  %5457 = vmatprep.subr.bf16.mxu0 0
  %5458 = vmatpush2.bf16.msra.mxu0 0
  %5459 = vmatprep.subr.bf16.mxu0 0
  %5460 = vmatpush2.bf16.msra.mxu0 0
  %5461 = vmatprep.subr.bf16.mxu0 0
  %5462 = vmatpush2.bf16.msra.mxu0 0
  %5463 = vmatprep.subr.bf16.mxu0 0
  %5464 = vmatpush2.bf16.msra.mxu0 0
  %5465 = vmatprep.subr.bf16.mxu0 0
  %5466 = vmatpush2.bf16.msra.mxu0 0
  %5467 = vmatprep.subr.bf16.mxu0 0
  %5468 = vmatpush2.bf16.msra.mxu0 0
  %5469 = vmatprep.subr.bf16.mxu0 0
  %5470 = vmatpush2.bf16.msra.mxu0 0
  %5471 = vmatprep.subr.bf16.mxu0 0
  %5472 = vmatpush2.bf16.msra.mxu0 0
  %5473 = vmatprep.mubr.bf16.mxu0 0
  %5474 = vmatmul.mubr.bf16.gmra.mxu0 %v5439
  %v5475 = vpop.f32.mrf.mxu0
  %v5476 = vadd.f32 0.0, %v5475
  %v5477 = vpop.f32.mrf.mxu0
  %v5478 = vpop.f32.mrf.mxu0
  %v5479 = vpop.f32.mrf.mxu0
  %5480 = vdwg.mxu0
  %v5481 = vadd.f32 %v5387, %v5476
  %v5482 = vld [vmem:[#allocation4 + $0x10] sm:$0xf]
  %s5483 = scalar_lea.vmem %s8, 192
  %v5484 = vld [vmem:[%s5483] sm:$0xf]
  %v5485 = vld [vmem:[%s5483 + $0x4] sm:$0xf]
  %v5486 = vld [vmem:[%s5483 + $0x8] sm:$0xf]
  %v5487 = vld [vmem:[%s5483 + $0xc] sm:$0xf]
  %v5488 = vld [vmem:[%s5483 + $0x10] sm:$0xf]
  %v5489 = vld [vmem:[%s5483 + $0x14] sm:$0xf]
  %v5490 = vld [vmem:[%s5483 + $0x18] sm:$0xf]
  %v5491 = vld [vmem:[%s5483 + $0x1c] sm:$0xf]
  %v5492 = vld [vmem:[%s5483 + $0x20] sm:$0xf]
  %v5493 = vld [vmem:[%s5483 + $0x24] sm:$0xf]
  %v5494 = vld [vmem:[%s5483 + $0x28] sm:$0xf]
  %v5495 = vld [vmem:[%s5483 + $0x2c] sm:$0xf]
  %v5508 = vunpack.c.l.b16 %v5484
  %v5509 = vunpack.c.l.b16 %v5485
  %v5510 = vunpack.c.l.b16 %v5486
  %v5511 = vunpack.c.l.b16 %v5487
  %v5512 = vunpack.c.l.b16 %v5488
  %v5513 = vunpack.c.l.b16 %v5489
  %v5514 = vunpack.c.l.b16 %v5490
  %v5515 = vunpack.c.l.b16 %v5491
  %v5516 = vunpack.c.l.b16 %v5492
  %v5517 = vunpack.c.l.b16 %v5493
  %v5518 = vunpack.c.l.b16 %v5494
  %v5519 = vunpack.c.l.b16 %v5495
  %v5520 = vpack.c.b16 %v5509, %v5508
  %v5521 = vpack.c.b16 %v5511, %v5510
  %v5522 = vpack.c.b16 %v5513, %v5512
  %v5523 = vpack.c.b16 %v5515, %v5514
  %v5524 = vpack.c.b16 %v5517, %v5516
  %v5525 = vpack.c.b16 %v5519, %v5518
  %v5533 = vsel %vm5068, %v5482, 0
  %5535 = vmatprep.subr.bf16.mxu0 0
  %5536 = vmatpush1.bf16.msra.mxu0 0
  %5537 = vmatprep.subr.bf16.mxu0 0
  %5538 = vmatpush1.bf16.msra.mxu0 0
  %5539 = vmatprep.subr.bf16.mxu0 0
  %5540 = vmatpush1.bf16.msra.mxu0 %v5525
  %5541 = vmatprep.subr.bf16.mxu0 0
  %5542 = vmatpush1.bf16.msra.mxu0 %v5524
  %5543 = vmatprep.subr.bf16.mxu0 0
  %5544 = vmatpush1.bf16.msra.mxu0 %v5523
  %5545 = vmatprep.subr.bf16.mxu0 0
  %5546 = vmatpush1.bf16.msra.mxu0 %v5522
  %5547 = vmatprep.subr.bf16.mxu0 0
  %5548 = vmatpush1.bf16.msra.mxu0 %v5521
  %5549 = vmatprep.subr.bf16.mxu0 0
  %5550 = vmatpush1.bf16.msra.mxu0 %v5520
  %5551 = vmatprep.subr.bf16.mxu0 0
  %5552 = vmatpush2.bf16.msra.mxu0 0
  %5553 = vmatprep.subr.bf16.mxu0 0
  %5554 = vmatpush2.bf16.msra.mxu0 0
  %5555 = vmatprep.subr.bf16.mxu0 0
  %5556 = vmatpush2.bf16.msra.mxu0 0
  %5557 = vmatprep.subr.bf16.mxu0 0
  %5558 = vmatpush2.bf16.msra.mxu0 0
  %5559 = vmatprep.subr.bf16.mxu0 0
  %5560 = vmatpush2.bf16.msra.mxu0 0
  %5561 = vmatprep.subr.bf16.mxu0 0
  %5562 = vmatpush2.bf16.msra.mxu0 0
  %5563 = vmatprep.subr.bf16.mxu0 0
  %5564 = vmatpush2.bf16.msra.mxu0 0
  %5565 = vmatprep.subr.bf16.mxu0 0
  %5566 = vmatpush2.bf16.msra.mxu0 0
  %5567 = vmatprep.mubr.bf16.mxu0 0
  %5568 = vmatmul.mubr.bf16.gmra.mxu0 %v5533
  %v5569 = vpop.f32.mrf.mxu0
  %v5570 = vadd.f32 0.0, %v5569
  %v5571 = vpop.f32.mrf.mxu0
  %v5572 = vpop.f32.mrf.mxu0
  %v5573 = vpop.f32.mrf.mxu0
  %5574 = vdwg.mxu0
  %v5575 = vadd.f32 %v5481, %v5570
  %v5576 = vld [vmem:[#allocation4 + $0x14] sm:$0xf]
  %s5577 = scalar_lea.vmem %s8, 240
  %v5578 = vld [vmem:[%s5577] sm:$0xf]
  %v5579 = vld [vmem:[%s5577 + $0x4] sm:$0xf]
  %v5580 = vld [vmem:[%s5577 + $0x8] sm:$0xf]
  %v5581 = vld [vmem:[%s5577 + $0xc] sm:$0xf]
  %v5582 = vld [vmem:[%s5577 + $0x10] sm:$0xf]
  %v5583 = vld [vmem:[%s5577 + $0x14] sm:$0xf]
  %v5584 = vld [vmem:[%s5577 + $0x18] sm:$0xf]
  %v5585 = vld [vmem:[%s5577 + $0x1c] sm:$0xf]
  %v5586 = vld [vmem:[%s5577 + $0x20] sm:$0xf]
  %v5587 = vld [vmem:[%s5577 + $0x24] sm:$0xf]
  %v5588 = vld [vmem:[%s5577 + $0x28] sm:$0xf]
  %v5589 = vld [vmem:[%s5577 + $0x2c] sm:$0xf]
  %v5602 = vunpack.c.l.b16 %v5578
  %v5603 = vunpack.c.l.b16 %v5579
  %v5604 = vunpack.c.l.b16 %v5580
  %v5605 = vunpack.c.l.b16 %v5581
  %v5606 = vunpack.c.l.b16 %v5582
  %v5607 = vunpack.c.l.b16 %v5583
  %v5608 = vunpack.c.l.b16 %v5584
  %v5609 = vunpack.c.l.b16 %v5585
  %v5610 = vunpack.c.l.b16 %v5586
  %v5611 = vunpack.c.l.b16 %v5587
  %v5612 = vunpack.c.l.b16 %v5588
  %v5613 = vunpack.c.l.b16 %v5589
  %v5614 = vpack.c.b16 %v5603, %v5602
  %v5615 = vpack.c.b16 %v5605, %v5604
  %v5616 = vpack.c.b16 %v5607, %v5606
  %v5617 = vpack.c.b16 %v5609, %v5608
  %v5618 = vpack.c.b16 %v5611, %v5610
  %v5619 = vpack.c.b16 %v5613, %v5612
  %v5627 = vsel %vm5068, %v5576, 0
  %5629 = vmatprep.subr.bf16.mxu0 0
  %5630 = vmatpush1.bf16.msra.mxu0 0
  %5631 = vmatprep.subr.bf16.mxu0 0
  %5632 = vmatpush1.bf16.msra.mxu0 0
  %5633 = vmatprep.subr.bf16.mxu0 0
  %5634 = vmatpush1.bf16.msra.mxu0 %v5619
  %5635 = vmatprep.subr.bf16.mxu0 0
  %5636 = vmatpush1.bf16.msra.mxu0 %v5618
  %5637 = vmatprep.subr.bf16.mxu0 0
  %5638 = vmatpush1.bf16.msra.mxu0 %v5617
  %5639 = vmatprep.subr.bf16.mxu0 0
  %5640 = vmatpush1.bf16.msra.mxu0 %v5616
  %5641 = vmatprep.subr.bf16.mxu0 0
  %5642 = vmatpush1.bf16.msra.mxu0 %v5615
  %5643 = vmatprep.subr.bf16.mxu0 0
  %5644 = vmatpush1.bf16.msra.mxu0 %v5614
  %5645 = vmatprep.subr.bf16.mxu0 0
  %5646 = vmatpush2.bf16.msra.mxu0 0
  %5647 = vmatprep.subr.bf16.mxu0 0
  %5648 = vmatpush2.bf16.msra.mxu0 0
  %5649 = vmatprep.subr.bf16.mxu0 0
  %5650 = vmatpush2.bf16.msra.mxu0 0
  %5651 = vmatprep.subr.bf16.mxu0 0
  %5652 = vmatpush2.bf16.msra.mxu0 0
  %5653 = vmatprep.subr.bf16.mxu0 0
  %5654 = vmatpush2.bf16.msra.mxu0 0
  %5655 = vmatprep.subr.bf16.mxu0 0
  %5656 = vmatpush2.bf16.msra.mxu0 0
  %5657 = vmatprep.subr.bf16.mxu0 0
  %5658 = vmatpush2.bf16.msra.mxu0 0
  %5659 = vmatprep.subr.bf16.mxu0 0
  %5660 = vmatpush2.bf16.msra.mxu0 0
  %5661 = vmatprep.mubr.bf16.mxu0 0
  %5662 = vmatmul.mubr.bf16.gmra.mxu0 %v5627
  %v5663 = vpop.f32.mrf.mxu0
  %v5664 = vadd.f32 0.0, %v5663
  %v5665 = vpop.f32.mrf.mxu0
  %v5666 = vpop.f32.mrf.mxu0
  %v5667 = vpop.f32.mrf.mxu0
  %5668 = vdwg.mxu0
  %v5669 = vadd.f32 %v5575, %v5664
  %v5670 = vld [vmem:[#allocation4 + $0x18] sm:$0xf]
  %s5671 = scalar_lea.vmem %s8, 288
  %v5672 = vld [vmem:[%s5671] sm:$0xf]
  %v5673 = vld [vmem:[%s5671 + $0x4] sm:$0xf]
  %v5674 = vld [vmem:[%s5671 + $0x8] sm:$0xf]
  %v5675 = vld [vmem:[%s5671 + $0xc] sm:$0xf]
  %v5676 = vld [vmem:[%s5671 + $0x10] sm:$0xf]
  %v5677 = vld [vmem:[%s5671 + $0x14] sm:$0xf]
  %v5678 = vld [vmem:[%s5671 + $0x18] sm:$0xf]
  %v5679 = vld [vmem:[%s5671 + $0x1c] sm:$0xf]
  %v5680 = vld [vmem:[%s5671 + $0x20] sm:$0xf]
  %v5681 = vld [vmem:[%s5671 + $0x24] sm:$0xf]
  %v5682 = vld [vmem:[%s5671 + $0x28] sm:$0xf]
  %v5683 = vld [vmem:[%s5671 + $0x2c] sm:$0xf]
  %v5696 = vunpack.c.l.b16 %v5672
  %v5697 = vunpack.c.l.b16 %v5673
  %v5698 = vunpack.c.l.b16 %v5674
  %v5699 = vunpack.c.l.b16 %v5675
  %v5700 = vunpack.c.l.b16 %v5676
  %v5701 = vunpack.c.l.b16 %v5677
  %v5702 = vunpack.c.l.b16 %v5678
  %v5703 = vunpack.c.l.b16 %v5679
  %v5704 = vunpack.c.l.b16 %v5680
  %v5705 = vunpack.c.l.b16 %v5681
  %v5706 = vunpack.c.l.b16 %v5682
  %v5707 = vunpack.c.l.b16 %v5683
  %v5708 = vpack.c.b16 %v5697, %v5696
  %v5709 = vpack.c.b16 %v5699, %v5698
  %v5710 = vpack.c.b16 %v5701, %v5700
  %v5711 = vpack.c.b16 %v5703, %v5702
  %v5712 = vpack.c.b16 %v5705, %v5704
  %v5713 = vpack.c.b16 %v5707, %v5706
  %v5721 = vsel %vm5068, %v5670, 0
  %5723 = vmatprep.subr.bf16.mxu0 0
  %5724 = vmatpush1.bf16.msra.mxu0 0
  %5725 = vmatprep.subr.bf16.mxu0 0
  %5726 = vmatpush1.bf16.msra.mxu0 0
  %5727 = vmatprep.subr.bf16.mxu0 0
  %5728 = vmatpush1.bf16.msra.mxu0 %v5713
  %5729 = vmatprep.subr.bf16.mxu0 0
  %5730 = vmatpush1.bf16.msra.mxu0 %v5712
  %5731 = vmatprep.subr.bf16.mxu0 0
  %5732 = vmatpush1.bf16.msra.mxu0 %v5711
  %5733 = vmatprep.subr.bf16.mxu0 0
  %5734 = vmatpush1.bf16.msra.mxu0 %v5710
  %5735 = vmatprep.subr.bf16.mxu0 0
  %5736 = vmatpush1.bf16.msra.mxu0 %v5709
  %5737 = vmatprep.subr.bf16.mxu0 0
  %5738 = vmatpush1.bf16.msra.mxu0 %v5708
  %5739 = vmatprep.subr.bf16.mxu0 0
  %5740 = vmatpush2.bf16.msra.mxu0 0
  %5741 = vmatprep.subr.bf16.mxu0 0
  %5742 = vmatpush2.bf16.msra.mxu0 0
  %5743 = vmatprep.subr.bf16.mxu0 0
  %5744 = vmatpush2.bf16.msra.mxu0 0
  %5745 = vmatprep.subr.bf16.mxu0 0
  %5746 = vmatpush2.bf16.msra.mxu0 0
  %5747 = vmatprep.subr.bf16.mxu0 0
  %5748 = vmatpush2.bf16.msra.mxu0 0
  %5749 = vmatprep.subr.bf16.mxu0 0
  %5750 = vmatpush2.bf16.msra.mxu0 0
  %5751 = vmatprep.subr.bf16.mxu0 0
  %5752 = vmatpush2.bf16.msra.mxu0 0
  %5753 = vmatprep.subr.bf16.mxu0 0
  %5754 = vmatpush2.bf16.msra.mxu0 0
  %5755 = vmatprep.mubr.bf16.mxu0 0
  %5756 = vmatmul.mubr.bf16.gmra.mxu0 %v5721
  %v5757 = vpop.f32.mrf.mxu0
  %v5758 = vadd.f32 0.0, %v5757
  %v5759 = vpop.f32.mrf.mxu0
  %v5760 = vpop.f32.mrf.mxu0
  %v5761 = vpop.f32.mrf.mxu0
  %5762 = vdwg.mxu0
  %v5763 = vadd.f32 %v5669, %v5758
  %v5764 = vld [vmem:[#allocation4 + $0x1c] sm:$0xf]
  %s5765 = scalar_lea.vmem %s8, 336
  %v5766 = vld [vmem:[%s5765] sm:$0xf]
  %v5767 = vld [vmem:[%s5765 + $0x4] sm:$0xf]
  %v5768 = vld [vmem:[%s5765 + $0x8] sm:$0xf]
  %v5769 = vld [vmem:[%s5765 + $0xc] sm:$0xf]
  %v5770 = vld [vmem:[%s5765 + $0x10] sm:$0xf]
  %v5771 = vld [vmem:[%s5765 + $0x14] sm:$0xf]
  %v5772 = vld [vmem:[%s5765 + $0x18] sm:$0xf]
  %v5773 = vld [vmem:[%s5765 + $0x1c] sm:$0xf]
  %v5774 = vld [vmem:[%s5765 + $0x20] sm:$0xf]
  %v5775 = vld [vmem:[%s5765 + $0x24] sm:$0xf]
  %v5776 = vld [vmem:[%s5765 + $0x28] sm:$0xf]
  %v5777 = vld [vmem:[%s5765 + $0x2c] sm:$0xf]
  %v5790 = vunpack.c.l.b16 %v5766
  %v5791 = vunpack.c.l.b16 %v5767
  %v5792 = vunpack.c.l.b16 %v5768
  %v5793 = vunpack.c.l.b16 %v5769
  %v5794 = vunpack.c.l.b16 %v5770
  %v5795 = vunpack.c.l.b16 %v5771
  %v5796 = vunpack.c.l.b16 %v5772
  %v5797 = vunpack.c.l.b16 %v5773
  %v5798 = vunpack.c.l.b16 %v5774
  %v5799 = vunpack.c.l.b16 %v5775
  %v5800 = vunpack.c.l.b16 %v5776
  %v5801 = vunpack.c.l.b16 %v5777
  %v5802 = vpack.c.b16 %v5791, %v5790
  %v5803 = vpack.c.b16 %v5793, %v5792
  %v5804 = vpack.c.b16 %v5795, %v5794
  %v5805 = vpack.c.b16 %v5797, %v5796
  %v5806 = vpack.c.b16 %v5799, %v5798
  %v5807 = vpack.c.b16 %v5801, %v5800
  %v5815 = vsel %vm5068, %v5764, 0
  %5817 = vmatprep.subr.bf16.mxu0 0
  %5818 = vmatpush1.bf16.msra.mxu0 0
  %5819 = vmatprep.subr.bf16.mxu0 0
  %5820 = vmatpush1.bf16.msra.mxu0 0
  %5821 = vmatprep.subr.bf16.mxu0 0
  %5822 = vmatpush1.bf16.msra.mxu0 %v5807
  %5823 = vmatprep.subr.bf16.mxu0 0
  %5824 = vmatpush1.bf16.msra.mxu0 %v5806
  %5825 = vmatprep.subr.bf16.mxu0 0
  %5826 = vmatpush1.bf16.msra.mxu0 %v5805
  %5827 = vmatprep.subr.bf16.mxu0 0
  %5828 = vmatpush1.bf16.msra.mxu0 %v5804
  %5829 = vmatprep.subr.bf16.mxu0 0
  %5830 = vmatpush1.bf16.msra.mxu0 %v5803
  %5831 = vmatprep.subr.bf16.mxu0 0
  %5832 = vmatpush1.bf16.msra.mxu0 %v5802
  %5833 = vmatprep.subr.bf16.mxu0 0
  %5834 = vmatpush2.bf16.msra.mxu0 0
  %5835 = vmatprep.subr.bf16.mxu0 0
  %5836 = vmatpush2.bf16.msra.mxu0 0
  %5837 = vmatprep.subr.bf16.mxu0 0
  %5838 = vmatpush2.bf16.msra.mxu0 0
  %5839 = vmatprep.subr.bf16.mxu0 0
  %5840 = vmatpush2.bf16.msra.mxu0 0
  %5841 = vmatprep.subr.bf16.mxu0 0
  %5842 = vmatpush2.bf16.msra.mxu0 0
  %5843 = vmatprep.subr.bf16.mxu0 0
  %5844 = vmatpush2.bf16.msra.mxu0 0
  %5845 = vmatprep.subr.bf16.mxu0 0
  %5846 = vmatpush2.bf16.msra.mxu0 0
  %5847 = vmatprep.subr.bf16.mxu0 0
  %5848 = vmatpush2.bf16.msra.mxu0 0
  %5849 = vmatprep.mubr.bf16.mxu0 0
  %5850 = vmatmul.mubr.bf16.gmra.mxu0 %v5815
  %v5851 = vpop.f32.mrf.mxu0
  %v5852 = vadd.f32 0.0, %v5851
  %v5853 = vpop.f32.mrf.mxu0
  %v5854 = vpop.f32.mrf.mxu0
  %v5855 = vpop.f32.mrf.mxu0
  %5856 = vdwg.mxu0
  %v5857 = vadd.f32 %v5763, %v5852
  %v5858 = vld [vmem:[%s10] sm:$0x1]
  %v5860 = vlaneseq
  %v5861 = vshrl.u32 %v5860, 7
  %v5862 = vsub.s32 0, %v5861
  %v5863 = vrot.slane %v5858, %v5862
  %v5865 = vadd.f32 %v5857, %v5863
  %v5866 = vmax.f32 %v5865, 0.0
  %v5867 = vpack.c.bf16 %v5866, %v5866
  %v5868 = vld [vmem:[%s11] sm:$0xf]
  %v5869 = vld [vmem:[%s11 + $0x4] sm:$0xf]
  %v5870 = vld [vmem:[%s11 + $0x8] sm:$0xf]
  %v5871 = vld [vmem:[%s11 + $0xc] sm:$0xf]
  %v5872 = vld [vmem:[%s11 + $0x10] sm:$0xf]
  %v5873 = vld [vmem:[%s11 + $0x14] sm:$0xf]
  %v5874 = vld [vmem:[%s11 + $0x18] sm:$0xf]
  %v5875 = vld [vmem:[%s11 + $0x1c] sm:$0xf]
  %v5876 = vld [vmem:[%s11 + $0x20] sm:$0xf]
  %v5877 = vld [vmem:[%s11 + $0x24] sm:$0xf]
  %v5878 = vld [vmem:[%s11 + $0x28] sm:$0xf]
  %v5879 = vld [vmem:[%s11 + $0x2c] sm:$0xf]
  %v5880 = vld [vmem:[%s11 + $0x30] sm:$0xf]
  %v5881 = vld [vmem:[%s11 + $0x34] sm:$0xf]
  %v5882 = vld [vmem:[%s11 + $0x38] sm:$0xf]
  %v5883 = vld [vmem:[%s11 + $0x3c] sm:$0xf]
  %v5884 = vld [vmem:[%s12] sm:$0x1]
  %v5886 = vlaneseq
  %v5887 = vshrl.u32 %v5886, 7
  %v5888 = vsub.s32 0, %v5887
  %v5889 = vrot.slane %v5884, %v5888
  %v5907 = vunpack.c.l.b16 %v5868
  %v5908 = vunpack.c.l.b16 %v5869
  %v5909 = vunpack.c.l.b16 %v5870
  %v5910 = vunpack.c.l.b16 %v5871
  %v5911 = vunpack.c.l.b16 %v5872
  %v5912 = vunpack.c.l.b16 %v5873
  %v5913 = vunpack.c.l.b16 %v5874
  %v5914 = vunpack.c.l.b16 %v5875
  %v5915 = vunpack.c.l.b16 %v5876
  %v5916 = vunpack.c.l.b16 %v5877
  %v5917 = vunpack.c.l.b16 %v5878
  %v5918 = vunpack.c.l.b16 %v5879
  %v5919 = vunpack.c.l.b16 %v5880
  %v5920 = vunpack.c.l.b16 %v5881
  %v5921 = vunpack.c.l.b16 %v5882
  %v5922 = vunpack.c.l.b16 %v5883
  %v5923 = vpack.c.b16 %v5908, %v5907
  %v5924 = vpack.c.b16 %v5910, %v5909
  %v5925 = vpack.c.b16 %v5912, %v5911
  %v5926 = vpack.c.b16 %v5914, %v5913
  %v5927 = vpack.c.b16 %v5916, %v5915
  %v5928 = vpack.c.b16 %v5918, %v5917
  %v5929 = vpack.c.b16 %v5920, %v5919
  %v5930 = vpack.c.b16 %v5922, %v5921
  %5939 = vmatprep.subr.bf16.mxu0 0
  %5940 = vmatpush1.bf16.msra.mxu0 %v5930
  %5941 = vmatprep.subr.bf16.mxu0 0
  %5942 = vmatpush1.bf16.msra.mxu0 %v5929
  %5943 = vmatprep.subr.bf16.mxu0 0
  %5944 = vmatpush1.bf16.msra.mxu0 %v5928
  %5945 = vmatprep.subr.bf16.mxu0 0
  %5946 = vmatpush1.bf16.msra.mxu0 %v5927
  %5947 = vmatprep.subr.bf16.mxu0 0
  %5948 = vmatpush1.bf16.msra.mxu0 %v5926
  %5949 = vmatprep.subr.bf16.mxu0 0
  %5950 = vmatpush1.bf16.msra.mxu0 %v5925
  %5951 = vmatprep.subr.bf16.mxu0 0
  %5952 = vmatpush1.bf16.msra.mxu0 %v5924
  %5953 = vmatprep.subr.bf16.mxu0 0
  %5954 = vmatpush1.bf16.msra.mxu0 %v5923
  %5955 = vmatprep.subr.bf16.mxu0 0
  %5956 = vmatpush2.bf16.msra.mxu0 0
  %5957 = vmatprep.subr.bf16.mxu0 0
  %5958 = vmatpush2.bf16.msra.mxu0 0
  %5959 = vmatprep.subr.bf16.mxu0 0
  %5960 = vmatpush2.bf16.msra.mxu0 0
  %5961 = vmatprep.subr.bf16.mxu0 0
  %5962 = vmatpush2.bf16.msra.mxu0 0
  %5963 = vmatprep.subr.bf16.mxu0 0
  %5964 = vmatpush2.bf16.msra.mxu0 0
  %5965 = vmatprep.subr.bf16.mxu0 0
  %5966 = vmatpush2.bf16.msra.mxu0 0
  %5967 = vmatprep.subr.bf16.mxu0 0
  %5968 = vmatpush2.bf16.msra.mxu0 0
  %5969 = vmatprep.subr.bf16.mxu0 0
  %5970 = vmatpush2.bf16.msra.mxu0 0
  %5971 = vmatprep.mubr.bf16.mxu0 0
  %5972 = vmatmul.mubr.bf16.gmra.mxu0 %v5867
  %v5973 = vpop.f32.mrf.mxu0
  %v5974 = vadd.f32 %v5889, %v5973
  %v5975 = vpop.f32.mrf.mxu0
  %v5976 = vpop.f32.mrf.mxu0
  %v5977 = vpop.f32.mrf.mxu0
  %5978 = vdwg.mxu0
  %5979 = vst [vmem:[%s13] sm:$0xff] %v5974
  // Predicated region
  $region54: #{qnetwork_forward.1} parent=0 // pred_check
    _
  $region55: #{qnetwork_forward.1} parent=0 // pred_check_branch
    %5981 = sbr.rel (0) target = $region57
  $region56: #{qnetwork_forward.1} parent=0 // pred_region
    _
  $region57: #{qnetwork_forward.1} parent=0 // pred_fallthru
    _
  // Predicated region
  $region58: #{qnetwork_forward.1} parent=0 // pred_check
    _
  $region59: #{qnetwork_forward.1} parent=0 // pred_check_branch
    %5983 = sbr.rel (0) target = $region61
  $region60: #{qnetwork_forward.1} parent=0 // pred_region
    _
  $region61: #{qnetwork_forward.1} parent=0 // pred_fallthru
    _

</llo_original>
